<compile_context>
chip_gen: v5e
topology: v5e:2x2
jax: 0.10.0
libtpu: 0.0.40
codegen_flags: <defaults>
</compile_context>

<pallas_src>
import jax
import jax.numpy as jnp
from jax.experimental import pallas as pl
from jax.experimental.pallas import tpu as pltpu


OUT_DIM = 4
C3 = 1024       # resnet layer3 channels (fc_b5 in_features, hard-coded in the module)
C4 = 2048       # resnet layer4 channels (n_features for resnet200d)
HEAD_PAD = 128  # head output padded to a full lane width


def _round_up(x, m):
    return (x + m - 1) // m * m


# ----------------------------------------------------------------------------- #
# Pallas kernels
# ----------------------------------------------------------------------------- #
def matmul_bias_relu_kernel(a_ref, b_ref, bias_ref, o_ref, acc_ref):
    """Tiled matmul + bias + ReLU.  Grid = (M/tm, N/tn, K/tk), reduction axis last.

    a/b are bf16 MXU operands, acc is f32; bias-add + ReLU done in f32 then cast.
    """
    @pl.when(pl.program_id(2) == 0)
    def _():
        acc_ref[...] = jnp.zeros_like(acc_ref)

    acc_ref[...] += jnp.dot(a_ref[...], b_ref[...],
                            preferred_element_type=jnp.float32)

    @pl.when(pl.program_id(2) == pl.num_programs(2) - 1)
    def _():
        o_ref[...] = jnp.maximum(acc_ref[...] + bias_ref[...], 0.0).astype(o_ref.dtype)


# ----------------------------------------------------------------------------- #
# Pallas wrappers
# ----------------------------------------------------------------------------- #
def matmul_bias_relu(a, b, bias, *, out_dtype=jnp.bfloat16, tm=512, tn=256,
                     tk_max=1024):
    """a: (M, K) bf16, b: (K, N) bf16, bias: (N,) f32 -> (M, N) out_dtype = relu(a@b+bias)."""
    M, K = a.shape
    Kb, N = b.shape
    assert K == Kb

    tk = K if K <= tk_max else tk_max
    assert K % tk == 0, (K, tk)
    tn_eff = tn if N % tn == 0 else N
    tm_eff = tm if M >= tm else _round_up(M, 8)
    M_pad = _round_up(M, tm_eff)
    a_p = a if M_pad == M else jnp.pad(a, ((0, M_pad - M), (0, 0)))

    grid = (M_pad // tm_eff, N // tn_eff, K // tk)

    bytes_accessed = (a_p.size * a_p.dtype.itemsize
                      + b.size * b.dtype.itemsize
                      + M_pad * N * jnp.dtype(out_dtype).itemsize
                      + N * 4)
    cost = pl.CostEstimate(flops=2 * M_pad * N * K, transcendentals=0,
                           bytes_accessed=bytes_accessed)

    out = pl.pallas_call(
        matmul_bias_relu_kernel,
        out_shape=jax.ShapeDtypeStruct((M_pad, N), out_dtype),
        grid_spec=pltpu.PrefetchScalarGridSpec(
            num_scalar_prefetch=0,
            grid=grid,
            in_specs=[
                pl.BlockSpec((tm_eff, tk), lambda i, j, k: (i, k)),
                pl.BlockSpec((tk, tn_eff), lambda i, j, k: (k, j)),
                pl.BlockSpec((1, tn_eff), lambda i, j, k: (0, j)),
            ],
            out_specs=pl.BlockSpec((tm_eff, tn_eff), lambda i, j, k: (i, j)),
            scratch_shapes=[pltpu.VMEM((tm_eff, tn_eff), jnp.float32)],
        ),
        compiler_params=pltpu.CompilerParams(
            dimension_semantics=("parallel", "parallel", "arbitrary")),
        cost_estimate=cost,
    )(a_p, b, bias.reshape(1, N).astype(jnp.float32))

    return out if M_pad == M else out[:M]


def gap_linear(x_bsc, w, bias, *, ts_target=512):
    """Fused global-average-pool over spatial axis + Linear, tiled over spatial axis.

    x_bsc: (B, S, C) bf16   w: (C, O) f32   bias: (O,) f32   ->  (B, O) f32
    """
    B, S, C = x_bsc.shape
    O = w.shape[1]
    inv_s = 1.0 / float(S)                      # true spatial size (before padding)

    ts = S if S <= ts_target else ts_target
    S_pad = _round_up(S, ts)
    if S_pad != S:
        x_bsc = jnp.pad(x_bsc, ((0, 0), (0, S_pad - S), (0, 0)))  # zeros: no effect on sum
    n_steps = S_pad // ts

    def kernel(x_ref, w_ref, b_ref, o_ref, acc_ref):
        @pl.when(pl.program_id(0) == 0)
        def _():
            acc_ref[...] = jnp.zeros_like(acc_ref)

        acc_ref[...] += jnp.sum(x_ref[...].astype(jnp.float32), axis=1)

        @pl.when(pl.program_id(0) == n_steps - 1)
        def _():
            pooled = acc_ref[...] * inv_s                       # (B, C) f32
            o_ref[...] = (jnp.dot(pooled, w_ref[...],
                                  preferred_element_type=jnp.float32)
                          + b_ref[...]).astype(o_ref.dtype)

    return pl.pallas_call(
        kernel,
        out_shape=jax.ShapeDtypeStruct((B, O), jnp.float32),
        grid_spec=pltpu.PrefetchScalarGridSpec(
            num_scalar_prefetch=0,
            grid=(n_steps,),
            in_specs=[
                pl.BlockSpec((B, ts, C), lambda s: (0, s, 0)),
                pl.BlockSpec((C, O), lambda s: (0, 0)),
                pl.BlockSpec((1, O), lambda s: (0, 0)),
            ],
            out_specs=pl.BlockSpec((B, O), lambda s: (0, 0)),
            scratch_shapes=[pltpu.VMEM((B, C), jnp.float32)],
        ),
        compiler_params=pltpu.CompilerParams(dimension_semantics=("arbitrary",)),
    )(x_bsc, w, bias.reshape(1, O))


# ----------------------------------------------------------------------------- #
# Parameters
# ----------------------------------------------------------------------------- #
def init_params(key):
    ks = jax.random.split(key, 8)

    def lin(kw, kb, fan_in, fan_out, dtype):
        w = (jax.random.normal(kw, (fan_in, fan_out), jnp.float32)
             / jnp.sqrt(fan_in)).astype(dtype)
        b = jax.random.normal(kb, (fan_out,), jnp.float32) * 0.01
        return w, b

    params = {}
    # backbone stub: stride-16 patch conv 3 -> 1024, then stride-2 patch conv 1024 -> 2048
    params["w_s3"], params["b_s3"] = lin(ks[0], ks[1], 16 * 16 * 3, C3, jnp.bfloat16)
    params["w_s4"], params["b_s4"] = lin(ks[2], ks[3], 2 * 2 * C3, C4, jnp.bfloat16)

    # head: fc_b5 = Linear(1024, out_dim), fc = Linear(2048, out_dim)
    # padded to 128 output lanes (lane-dense stores); logits sliced outside the kernel.
    w_b5, b_b5 = lin(ks[4], ks[5], C3, OUT_DIM, jnp.float32)
    w_fc, b_fc = lin(ks[6], ks[7], C4, OUT_DIM, jnp.float32)
    params["w_fc_b5"] = jnp.pad(w_b5, ((0, 0), (0, HEAD_PAD - OUT_DIM)))
    params["b_fc_b5"] = jnp.pad(b_b5, (0, HEAD_PAD - OUT_DIM))
    params["w_fc"] = jnp.pad(w_fc, ((0, 0), (0, HEAD_PAD - OUT_DIM)))
    params["b_fc"] = jnp.pad(b_fc, (0, HEAD_PAD - OUT_DIM))
    return params


# ----------------------------------------------------------------------------- #
# SIIMModel forward
# ----------------------------------------------------------------------------- #
def siim_forward(params, ipt_nchw):
    """ipt_nchw: (B, 3, H, W) float32, H,W divisible by 32.  Returns (cls_logit, b5_logits)."""
    B, Cin, H, W = ipt_nchw.shape
    assert H % 32 == 0 and W % 32 == 0
    h4, w4 = H // 32, W // 32
    h3, w3 = 2 * h4, 2 * w4

    # --- backbone stub (_features) ---------------------------------------------------
    # Fused NCHW->NHWC + 16x16 patchify in a single reshape+transpose on the tiny
    # 3-channel input.  Patch rows are ordered (b, i4, j4, dy, dx) so the stage-2
    # stride-2 im2col below is a *free* row-major reshape (no transpose / HBM copy).
    x = ipt_nchw.reshape(B, Cin, h4, 2, 16, w4, 2, 16)
    x = jnp.transpose(x, (0, 2, 5, 3, 6, 4, 7, 1))       # (B, i4, j4, dy, dx, ph, pw, C)
    a3 = x.reshape(B * h3 * w3, 16 * 16 * Cin).astype(jnp.bfloat16)

    # x3 at stride 16 / 1024 ch (patch rows ordered (b, i4, j4, dy, dx))
    x3_flat = matmul_bias_relu(a3, params["w_s3"], params["b_s3"])        # (B*h3*w3, 1024) bf16

    # x4 at stride 32 / 2048 ch: 2x2 neighborhoods are 4 consecutive rows of x3_flat,
    # so the im2col is a free reshape, columns ordered (dy, dx, c) as in patchify.
    a4 = x3_flat.reshape(B * h4 * w4, 4 * C3)
    x4_flat = matmul_bias_relu(a4, params["w_s4"], params["b_s4"])        # (B*h4*w4, 2048) bf16

    # --- SIIM head (exact semantics of SIIMModel.forward) -----------------------------
    # b5_logits = fc_b5( flatten( global_pool( bottleneck_b5(x3) ) ) ), bottleneck_b5 = Identity
    # (GAP is invariant to the spatial permutation of rows within a batch item.)
    b5_logits = gap_linear(x3_flat.reshape(B, h3 * w3, C3),
                           params["w_fc_b5"], params["b_fc_b5"])[:, :OUT_DIM]

    # pooled_features = AdaptiveAvgPool2d(1)(x4).view(B, -1); cls_logit = fc(dropout(pooled))
    # (Dropout is identity at inference.)
    cls_logit = gap_linear(x4_flat.reshape(B, h4 * w4, C4),
                           params["w_fc"], params["b_fc"])[:, :OUT_DIM]

    return cls_logit, b5_logits


# ----------------------------------------------------------------------------- #
if __name__ == "__main__":
    key = jax.random.PRNGKey(0)
    k_param, k_in = jax.random.split(key)

    params = init_params(k_param)

    # small input consistent with the module: NCHW, 3 channels, spatial divisible by 32
    ipt = jax.random.normal(k_in, (2, 3, 64, 64), jnp.float32)

    cls_logit, b5_logits = jax.jit(siim_forward)(params, ipt)
    jax.block_until_ready((cls_logit, b5_logits))

    assert cls_logit.shape == (2, OUT_DIM) and cls_logit.dtype == jnp.float32
    assert b5_logits.shape == (2, OUT_DIM) and b5_logits.dtype == jnp.float32
    assert bool(jnp.all(jnp.isfinite(cls_logit))) and bool(jnp.all(jnp.isfinite(b5_logits)))

    print("KERNEL_OK")
</pallas_src>

<mosaic_0001>
module attributes {stable_mosaic.version = 11 : i64} {
  func.func @matmul_bias_relu_kernel(%arg0: i32, %arg1: i32, %arg2: i32, %arg3: memref<32x768xbf16, #tpu.memory_space<vmem>>, %arg4: memref<768x256xbf16, #tpu.memory_space<vmem>>, %arg5: memref<1x256xf32, #tpu.memory_space<vmem>>, %arg6: memref<32x256xbf16, #tpu.memory_space<vmem>>, %arg7: memref<32x256xf32, #tpu.memory_space<vmem>>) attributes {dimension_semantics = [#tpu.dimension_semantics<parallel>, #tpu.dimension_semantics<parallel>, #tpu.dimension_semantics<arbitrary>], iteration_bounds = array<i64: 1, 4, 1>, scalar_prefetch = 0 : i64, scratch_operands = 1 : i64, tpu.core_type = #tpu.core_type<tc>, window_params = [{transform_indices = @transform_0, window_bounds = array<i64: 32, 768>}, {transform_indices = @transform_1, window_bounds = array<i64: 768, 256>}, {transform_indices = @transform_2, window_bounds = array<i64: 1, 256>}, {transform_indices = @transform_3, window_bounds = array<i64: 32, 256>}]} {
    %c0_i32 = arith.constant 0 : i32
    %0 = arith.cmpi eq, %arg2, %c0_i32 : i32
    %1 = arith.extui %0 : i1 to i32
    %c0_i32_0 = arith.constant 0 : i32
    %2 = arith.cmpi ne, %1, %c0_i32_0 : i32
    scf.if %2 {
      %cst_10 = arith.constant 0.000000e+00 : f32
      %12 = vector.broadcast %cst_10 : f32 to vector<32x256xf32>
      %c0_11 = arith.constant 0 : index
      %c0_12 = arith.constant 0 : index
      %13 = vector.load %arg7[%c0_11, %c0_12] : memref<32x256xf32, #tpu.memory_space<vmem>>, vector<32x256xf32>
      tpu.vector_store %arg7[%c0_11, %c0_12], %12 {strides = array<i32>} : memref<32x256xf32, #tpu.memory_space<vmem>>, vector<32x256xf32>,
    } else {
    }
    %c0 = arith.constant 0 : index
    %c0_1 = arith.constant 0 : index
    %3 = vector.load %arg7[%c0, %c0_1] : memref<32x256xf32, #tpu.memory_space<vmem>>, vector<32x256xf32>
    %c0_2 = arith.constant 0 : index
    %c0_3 = arith.constant 0 : index
    %4 = vector.load %arg3[%c0_2, %c0_3] : memref<32x768xbf16, #tpu.memory_space<vmem>>, vector<32x768xbf16>
    %c0_4 = arith.constant 0 : index
    %c0_5 = arith.constant 0 : index
    %5 = vector.load %arg4[%c0_4, %c0_5] : memref<768x256xbf16, #tpu.memory_space<vmem>>, vector<768x256xbf16>
    %cst = arith.constant dense<0.000000e+00> : vector<32x256xf32>
    %6 = tpu.matmul %4, %5, %cst {dimension_numbers = #tpu.dot_dimension_numbers<[1], [0], [0], [1], [0, 0, 1, 1], [], []>} : vector<32x768xbf16>, vector<768x256xbf16>, vector<32x256xf32> -> vector<32x256xf32>
    %7 = arith.addf %3, %6 : vector<32x256xf32>
    %c0_6 = arith.constant 0 : index
    %c0_7 = arith.constant 0 : index
    %8 = vector.load %arg7[%c0_6, %c0_7] : memref<32x256xf32, #tpu.memory_space<vmem>>, vector<32x256xf32>
    tpu.vector_store %arg7[%c0_6, %c0_7], %7 {strides = array<i32>} : memref<32x256xf32, #tpu.memory_space<vmem>>, vector<32x256xf32>,
    %c0_i32_8 = arith.constant 0 : i32
    %9 = arith.cmpi eq, %arg2, %c0_i32_8 : i32
    %10 = arith.extui %9 : i1 to i32
    %c0_i32_9 = arith.constant 0 : i32
    %11 = arith.cmpi ne, %10, %c0_i32_9 : i32
    scf.if %11 {
      %c0_10 = arith.constant 0 : index
      %c0_11 = arith.constant 0 : index
      %12 = vector.load %arg7[%c0_10, %c0_11] : memref<32x256xf32, #tpu.memory_space<vmem>>, vector<32x256xf32>
      %c0_12 = arith.constant 0 : index
      %c0_13 = arith.constant 0 : index
      %13 = vector.load %arg5[%c0_12, %c0_13] : memref<1x256xf32, #tpu.memory_space<vmem>>, vector<1x256xf32>
      %14 = vector.broadcast %13 : vector<1x256xf32> to vector<32x256xf32>
      %15 = arith.addf %12, %14 : vector<32x256xf32>
      %cst_14 = arith.constant 0.000000e+00 : f32
      %16 = vector.broadcast %cst_14 : f32 to vector<32x256xf32>
      %17 = arith.maximumf %15, %16 : vector<32x256xf32>
      %18 = arith.truncf %17 : vector<32x256xf32> to vector<32x256xbf16>
      %c0_15 = arith.constant 0 : index
      %c0_16 = arith.constant 0 : index
      %19 = vector.load %arg6[%c0_15, %c0_16] : memref<32x256xbf16, #tpu.memory_space<vmem>>, vector<32x256xbf16>
      tpu.vector_store %arg6[%c0_15, %c0_16], %18 {strides = array<i32>} : memref<32x256xbf16, #tpu.memory_space<vmem>>, vector<32x256xbf16>,
    } else {
    }
    return
  }
  func.func @transform_0(%arg0: i32, %arg1: i32, %arg2: i32) -> (i32, i32) {
    %c0_i32 = arith.constant 0 : i32
    return %arg0, %arg2 : i32, i32
  }
  func.func @transform_1(%arg0: i32, %arg1: i32, %arg2: i32) -> (i32, i32) {
    %c0_i32 = arith.constant 0 : i32
    return %arg2, %arg1 : i32, i32
  }
  func.func @transform_2(%arg0: i32, %arg1: i32, %arg2: i32) -> (i32, i32) {
    %c0_i32 = arith.constant 0 : i32
    %c0_i32_0 = arith.constant 0 : i32
    return %c0_i32, %arg1 : i32, i32
  }
  func.func @transform_3(%arg0: i32, %arg1: i32, %arg2: i32) -> (i32, i32) {
    %c0_i32 = arith.constant 0 : i32
    return %arg0, %arg1 : i32, i32
  }
}

module attributes {stable_mosaic.version = 11 : i64} {
  func.func @kernel(%arg0: i32, %arg1: memref<2x16x1024xbf16, #tpu.memory_space<vmem>>, %arg2: memref<1024x128xf32, #tpu.memory_space<vmem>>, %arg3: memref<1x128xf32, #tpu.memory_space<vmem>>, %arg4: memref<2x128xf32, #tpu.memory_space<vmem>>, %arg5: memref<2x1024xf32, #tpu.memory_space<vmem>>) attributes {dimension_semantics = [#tpu.dimension_semantics<arbitrary>], iteration_bounds = array<i64: 1>, scalar_prefetch = 0 : i64, scratch_operands = 1 : i64, tpu.core_type = #tpu.core_type<tc>, window_params = [{transform_indices = @transform_0, window_bounds = array<i64: 2, 16, 1024>}, {pipeline_mode = #tpu.pipeline_mode<synchronous>, transform_indices = @transform_1, window_bounds = array<i64: 1024, 128>}, {pipeline_mode = #tpu.pipeline_mode<synchronous>, transform_indices = @transform_2, window_bounds = array<i64: 1, 128>}, {pipeline_mode = #tpu.pipeline_mode<synchronous>, transform_indices = @transform_3, window_bounds = array<i64: 2, 128>}]} {
    %c0_i32 = arith.constant 0 : i32
    %0 = arith.cmpi eq, %arg0, %c0_i32 : i32
    %1 = arith.extui %0 : i1 to i32
    %c0_i32_0 = arith.constant 0 : i32
    %2 = arith.cmpi ne, %1, %c0_i32_0 : i32
    scf.if %2 {
      %cst_9 = arith.constant 0.000000e+00 : f32
      %12 = vector.broadcast %cst_9 : f32 to vector<2x1024xf32>
      %c0_10 = arith.constant 0 : index
      %c0_11 = arith.constant 0 : index
      %13 = vector.load %arg5[%c0_10, %c0_11] : memref<2x1024xf32, #tpu.memory_space<vmem>>, vector<2x1024xf32>
      tpu.vector_store %arg5[%c0_10, %c0_11], %12 {strides = array<i32>} : memref<2x1024xf32, #tpu.memory_space<vmem>>, vector<2x1024xf32>,
    } else {
    }
    %c0 = arith.constant 0 : index
    %c0_1 = arith.constant 0 : index
    %3 = vector.load %arg5[%c0, %c0_1] : memref<2x1024xf32, #tpu.memory_space<vmem>>, vector<2x1024xf32>
    %c0_2 = arith.constant 0 : index
    %c0_3 = arith.constant 0 : index
    %c0_4 = arith.constant 0 : index
    %4 = vector.load %arg1[%c0_2, %c0_3, %c0_4] : memref<2x16x1024xbf16, #tpu.memory_space<vmem>>, vector<2x16x1024xbf16>
    %5 = arith.extf %4 : vector<2x16x1024xbf16> to vector<2x16x1024xf32>
    %cst = arith.constant dense<0.000000e+00> : vector<2x1024xf32>
    %6 = vector.multi_reduction <add>, %5, %cst [1] : vector<2x16x1024xf32> to vector<2x1024xf32>
    %7 = arith.addf %3, %6 : vector<2x1024xf32>
    %c0_5 = arith.constant 0 : index
    %c0_6 = arith.constant 0 : index
    %8 = vector.load %arg5[%c0_5, %c0_6] : memref<2x1024xf32, #tpu.memory_space<vmem>>, vector<2x1024xf32>
    tpu.vector_store %arg5[%c0_5, %c0_6], %7 {strides = array<i32>} : memref<2x1024xf32, #tpu.memory_space<vmem>>, vector<2x1024xf32>,
    %c0_i32_7 = arith.constant 0 : i32
    %9 = arith.cmpi eq, %arg0, %c0_i32_7 : i32
    %10 = arith.extui %9 : i1 to i32
    %c0_i32_8 = arith.constant 0 : i32
    %11 = arith.cmpi ne, %10, %c0_i32_8 : i32
    scf.if %11 {
      %c0_9 = arith.constant 0 : index
      %c0_10 = arith.constant 0 : index
      %12 = vector.load %arg5[%c0_9, %c0_10] : memref<2x1024xf32, #tpu.memory_space<vmem>>, vector<2x1024xf32>
      %cst_11 = arith.constant 6.250000e-02 : f32
      %13 = vector.broadcast %cst_11 : f32 to vector<2x1024xf32>
      %14 = arith.mulf %12, %13 : vector<2x1024xf32>
      %c0_12 = arith.constant 0 : index
      %c0_13 = arith.constant 0 : index
      %15 = vector.load %arg2[%c0_12, %c0_13] : memref<1024x128xf32, #tpu.memory_space<vmem>>, vector<1024x128xf32>
      %cst_14 = arith.constant dense<0.000000e+00> : vector<2x128xf32>
      %16 = tpu.matmul %14, %15, %cst_14 {dimension_numbers = #tpu.dot_dimension_numbers<[1], [0], [0], [1], [0, 0, 1, 1], [], []>} : vector<2x1024xf32>, vector<1024x128xf32>, vector<2x128xf32> -> vector<2x128xf32>
      %c0_15 = arith.constant 0 : index
      %c0_16 = arith.constant 0 : index
      %17 = vector.load %arg3[%c0_15, %c0_16] : memref<1x128xf32, #tpu.memory_space<vmem>>, vector<1x128xf32>
      %18 = vector.broadcast %17 : vector<1x128xf32> to vector<2x128xf32>
      %19 = arith.addf %16, %18 : vector<2x128xf32>
      %c0_17 = arith.constant 0 : index
      %c0_18 = arith.constant 0 : index
      %20 = vector.load %arg4[%c0_17, %c0_18] : memref<2x128xf32, #tpu.memory_space<vmem>>, vector<2x128xf32>
      tpu.vector_store %arg4[%c0_17, %c0_18], %19 {strides = array<i32>} : memref<2x128xf32, #tpu.memory_space<vmem>>, vector<2x128xf32>,
    } else {
    }
    return
  }
  func.func @transform_0(%arg0: i32) -> (i32, i32, i32) {
    %c0_i32 = arith.constant 0 : i32
    %c0_i32_0 = arith.constant 0 : i32
    %c0_i32_1 = arith.constant 0 : i32
    return %c0_i32, %arg0, %c0_i32_0 : i32, i32, i32
  }
  func.func @transform_1(%arg0: i32) -> (i32, i32) {
    %c0_i32 = arith.constant 0 : i32
    %c0_i32_0 = arith.constant 0 : i32
    %c0_i32_1 = arith.constant 0 : i32
    return %c0_i32, %c0_i32_0 : i32, i32
  }
  func.func @transform_2(%arg0: i32) -> (i32, i32) {
    %c0_i32 = arith.constant 0 : i32
    %c0_i32_0 = arith.constant 0 : i32
    %c0_i32_1 = arith.constant 0 : i32
    return %c0_i32, %c0_i32_0 : i32, i32
  }
  func.func @transform_3(%arg0: i32) -> (i32, i32) {
    %c0_i32 = arith.constant 0 : i32
    %c0_i32_0 = arith.constant 0 : i32
    %c0_i32_1 = arith.constant 0 : i32
    return %c0_i32, %c0_i32_0 : i32, i32
  }
}

module attributes {stable_mosaic.version = 11 : i64} {
  func.func @matmul_bias_relu_kernel(%arg0: i32, %arg1: i32, %arg2: i32, %arg3: memref<8x1024xbf16, #tpu.memory_space<vmem>>, %arg4: memref<1024x256xbf16, #tpu.memory_space<vmem>>, %arg5: memref<1x256xf32, #tpu.memory_space<vmem>>, %arg6: memref<8x256xbf16, #tpu.memory_space<vmem>>, %arg7: memref<8x256xf32, #tpu.memory_space<vmem>>) attributes {dimension_semantics = [#tpu.dimension_semantics<parallel>, #tpu.dimension_semantics<parallel>, #tpu.dimension_semantics<arbitrary>], iteration_bounds = array<i64: 1, 8, 4>, scalar_prefetch = 0 : i64, scratch_operands = 1 : i64, tpu.core_type = #tpu.core_type<tc>, window_params = [{transform_indices = @transform_0, window_bounds = array<i64: 8, 1024>}, {transform_indices = @transform_1, window_bounds = array<i64: 1024, 256>}, {transform_indices = @transform_2, window_bounds = array<i64: 1, 256>}, {transform_indices = @transform_3, window_bounds = array<i64: 8, 256>}]} {
    %c0_i32 = arith.constant 0 : i32
    %0 = arith.cmpi eq, %arg2, %c0_i32 : i32
    %1 = arith.extui %0 : i1 to i32
    %c0_i32_0 = arith.constant 0 : i32
    %2 = arith.cmpi ne, %1, %c0_i32_0 : i32
    scf.if %2 {
      %cst_9 = arith.constant 0.000000e+00 : f32
      %12 = vector.broadcast %cst_9 : f32 to vector<8x256xf32>
      %c0_10 = arith.constant 0 : index
      %c0_11 = arith.constant 0 : index
      %13 = vector.load %arg7[%c0_10, %c0_11] : memref<8x256xf32, #tpu.memory_space<vmem>>, vector<8x256xf32>
      tpu.vector_store %arg7[%c0_10, %c0_11], %12 {strides = array<i32>} : memref<8x256xf32, #tpu.memory_space<vmem>>, vector<8x256xf32>,
    } else {
    }
    %c0 = arith.constant 0 : index
    %c0_1 = arith.constant 0 : index
    %3 = vector.load %arg7[%c0, %c0_1] : memref<8x256xf32, #tpu.memory_space<vmem>>, vector<8x256xf32>
    %c0_2 = arith.constant 0 : index
    %c0_3 = arith.constant 0 : index
    %4 = vector.load %arg3[%c0_2, %c0_3] : memref<8x1024xbf16, #tpu.memory_space<vmem>>, vector<8x1024xbf16>
    %c0_4 = arith.constant 0 : index
    %c0_5 = arith.constant 0 : index
    %5 = vector.load %arg4[%c0_4, %c0_5] : memref<1024x256xbf16, #tpu.memory_space<vmem>>, vector<1024x256xbf16>
    %cst = arith.constant dense<0.000000e+00> : vector<8x256xf32>
    %6 = tpu.matmul %4, %5, %cst {dimension_numbers = #tpu.dot_dimension_numbers<[1], [0], [0], [1], [0, 0, 1, 1], [], []>} : vector<8x1024xbf16>, vector<1024x256xbf16>, vector<8x256xf32> -> vector<8x256xf32>
    %7 = arith.addf %3, %6 : vector<8x256xf32>
    %c0_6 = arith.constant 0 : index
    %c0_7 = arith.constant 0 : index
    %8 = vector.load %arg7[%c0_6, %c0_7] : memref<8x256xf32, #tpu.memory_space<vmem>>, vector<8x256xf32>
    tpu.vector_store %arg7[%c0_6, %c0_7], %7 {strides = array<i32>} : memref<8x256xf32, #tpu.memory_space<vmem>>, vector<8x256xf32>,
    %c3_i32 = arith.constant 3 : i32
    %9 = arith.cmpi eq, %arg2, %c3_i32 : i32
    %10 = arith.extui %9 : i1 to i32
    %c0_i32_8 = arith.constant 0 : i32
    %11 = arith.cmpi ne, %10, %c0_i32_8 : i32
    scf.if %11 {
      %c0_9 = arith.constant 0 : index
      %c0_10 = arith.constant 0 : index
      %12 = vector.load %arg7[%c0_9, %c0_10] : memref<8x256xf32, #tpu.memory_space<vmem>>, vector<8x256xf32>
      %c0_11 = arith.constant 0 : index
      %c0_12 = arith.constant 0 : index
      %13 = vector.load %arg5[%c0_11, %c0_12] : memref<1x256xf32, #tpu.memory_space<vmem>>, vector<1x256xf32>
      %14 = vector.broadcast %13 : vector<1x256xf32> to vector<8x256xf32>
      %15 = arith.addf %12, %14 : vector<8x256xf32>
      %cst_13 = arith.constant 0.000000e+00 : f32
      %16 = vector.broadcast %cst_13 : f32 to vector<8x256xf32>
      %17 = arith.maximumf %15, %16 : vector<8x256xf32>
      %18 = arith.truncf %17 : vector<8x256xf32> to vector<8x256xbf16>
      %c0_14 = arith.constant 0 : index
      %c0_15 = arith.constant 0 : index
      %19 = vector.load %arg6[%c0_14, %c0_15] : memref<8x256xbf16, #tpu.memory_space<vmem>>, vector<8x256xbf16>
      tpu.vector_store %arg6[%c0_14, %c0_15], %18 {strides = array<i32>} : memref<8x256xbf16, #tpu.memory_space<vmem>>, vector<8x256xbf16>,
    } else {
    }
    return
  }
  func.func @transform_0(%arg0: i32, %arg1: i32, %arg2: i32) -> (i32, i32) {
    %c0_i32 = arith.constant 0 : i32
    return %arg0, %arg2 : i32, i32
  }
  func.func @transform_1(%arg0: i32, %arg1: i32, %arg2: i32) -> (i32, i32) {
    %c0_i32 = arith.constant 0 : i32
    return %arg2, %arg1 : i32, i32
  }
  func.func @transform_2(%arg0: i32, %arg1: i32, %arg2: i32) -> (i32, i32) {
    %c0_i32 = arith.constant 0 : i32
    %c0_i32_0 = arith.constant 0 : i32
    return %c0_i32, %arg1 : i32, i32
  }
  func.func @transform_3(%arg0: i32, %arg1: i32, %arg2: i32) -> (i32, i32) {
    %c0_i32 = arith.constant 0 : i32
    return %arg0, %arg1 : i32, i32
  }
}

module attributes {stable_mosaic.version = 11 : i64} {
  func.func @kernel(%arg0: i32, %arg1: memref<2x4x2048xbf16, #tpu.memory_space<vmem>>, %arg2: memref<2048x128xf32, #tpu.memory_space<vmem>>, %arg3: memref<1x128xf32, #tpu.memory_space<vmem>>, %arg4: memref<2x128xf32, #tpu.memory_space<vmem>>, %arg5: memref<2x2048xf32, #tpu.memory_space<vmem>>) attributes {dimension_semantics = [#tpu.dimension_semantics<arbitrary>], iteration_bounds = array<i64: 1>, scalar_prefetch = 0 : i64, scratch_operands = 1 : i64, tpu.core_type = #tpu.core_type<tc>, window_params = [{transform_indices = @transform_0, window_bounds = array<i64: 2, 4, 2048>}, {pipeline_mode = #tpu.pipeline_mode<synchronous>, transform_indices = @transform_1, window_bounds = array<i64: 2048, 128>}, {pipeline_mode = #tpu.pipeline_mode<synchronous>, transform_indices = @transform_2, window_bounds = array<i64: 1, 128>}, {pipeline_mode = #tpu.pipeline_mode<synchronous>, transform_indices = @transform_3, window_bounds = array<i64: 2, 128>}]} {
    %c0_i32 = arith.constant 0 : i32
    %0 = arith.cmpi eq, %arg0, %c0_i32 : i32
    %1 = arith.extui %0 : i1 to i32
    %c0_i32_0 = arith.constant 0 : i32
    %2 = arith.cmpi ne, %1, %c0_i32_0 : i32
    scf.if %2 {
      %cst_9 = arith.constant 0.000000e+00 : f32
      %12 = vector.broadcast %cst_9 : f32 to vector<2x2048xf32>
      %c0_10 = arith.constant 0 : index
      %c0_11 = arith.constant 0 : index
      %13 = vector.load %arg5[%c0_10, %c0_11] : memref<2x2048xf32, #tpu.memory_space<vmem>>, vector<2x2048xf32>
      tpu.vector_store %arg5[%c0_10, %c0_11], %12 {strides = array<i32>} : memref<2x2048xf32, #tpu.memory_space<vmem>>, vector<2x2048xf32>,
    } else {
    }
    %c0 = arith.constant 0 : index
    %c0_1 = arith.constant 0 : index
    %3 = vector.load %arg5[%c0, %c0_1] : memref<2x2048xf32, #tpu.memory_space<vmem>>, vector<2x2048xf32>
    %c0_2 = arith.constant 0 : index
    %c0_3 = arith.constant 0 : index
    %c0_4 = arith.constant 0 : index
    %4 = vector.load %arg1[%c0_2, %c0_3, %c0_4] : memref<2x4x2048xbf16, #tpu.memory_space<vmem>>, vector<2x4x2048xbf16>
    %5 = arith.extf %4 : vector<2x4x2048xbf16> to vector<2x4x2048xf32>
    %cst = arith.constant dense<0.000000e+00> : vector<2x2048xf32>
    %6 = vector.multi_reduction <add>, %5, %cst [1] : vector<2x4x2048xf32> to vector<2x2048xf32>
    %7 = arith.addf %3, %6 : vector<2x2048xf32>
    %c0_5 = arith.constant 0 : index
    %c0_6 = arith.constant 0 : index
    %8 = vector.load %arg5[%c0_5, %c0_6] : memref<2x2048xf32, #tpu.memory_space<vmem>>, vector<2x2048xf32>
    tpu.vector_store %arg5[%c0_5, %c0_6], %7 {strides = array<i32>} : memref<2x2048xf32, #tpu.memory_space<vmem>>, vector<2x2048xf32>,
    %c0_i32_7 = arith.constant 0 : i32
    %9 = arith.cmpi eq, %arg0, %c0_i32_7 : i32
    %10 = arith.extui %9 : i1 to i32
    %c0_i32_8 = arith.constant 0 : i32
    %11 = arith.cmpi ne, %10, %c0_i32_8 : i32
    scf.if %11 {
      %c0_9 = arith.constant 0 : index
      %c0_10 = arith.constant 0 : index
      %12 = vector.load %arg5[%c0_9, %c0_10] : memref<2x2048xf32, #tpu.memory_space<vmem>>, vector<2x2048xf32>
      %cst_11 = arith.constant 2.500000e-01 : f32
      %13 = vector.broadcast %cst_11 : f32 to vector<2x2048xf32>
      %14 = arith.mulf %12, %13 : vector<2x2048xf32>
      %c0_12 = arith.constant 0 : index
      %c0_13 = arith.constant 0 : index
      %15 = vector.load %arg2[%c0_12, %c0_13] : memref<2048x128xf32, #tpu.memory_space<vmem>>, vector<2048x128xf32>
      %cst_14 = arith.constant dense<0.000000e+00> : vector<2x128xf32>
      %16 = tpu.matmul %14, %15, %cst_14 {dimension_numbers = #tpu.dot_dimension_numbers<[1], [0], [0], [1], [0, 0, 1, 1], [], []>} : vector<2x2048xf32>, vector<2048x128xf32>, vector<2x128xf32> -> vector<2x128xf32>
      %c0_15 = arith.constant 0 : index
      %c0_16 = arith.constant 0 : index
      %17 = vector.load %arg3[%c0_15, %c0_16] : memref<1x128xf32, #tpu.memory_space<vmem>>, vector<1x128xf32>
      %18 = vector.broadcast %17 : vector<1x128xf32> to vector<2x128xf32>
      %19 = arith.addf %16, %18 : vector<2x128xf32>
      %c0_17 = arith.constant 0 : index
      %c0_18 = arith.constant 0 : index
      %20 = vector.load %arg4[%c0_17, %c0_18] : memref<2x128xf32, #tpu.memory_space<vmem>>, vector<2x128xf32>
      tpu.vector_store %arg4[%c0_17, %c0_18], %19 {strides = array<i32>} : memref<2x128xf32, #tpu.memory_space<vmem>>, vector<2x128xf32>,
    } else {
    }
    return
  }
  func.func @transform_0(%arg0: i32) -> (i32, i32, i32) {
    %c0_i32 = arith.constant 0 : i32
    %c0_i32_0 = arith.constant 0 : i32
    %c0_i32_1 = arith.constant 0 : i32
    return %c0_i32, %arg0, %c0_i32_0 : i32, i32, i32
  }
  func.func @transform_1(%arg0: i32) -> (i32, i32) {
    %c0_i32 = arith.constant 0 : i32
    %c0_i32_0 = arith.constant 0 : i32
    %c0_i32_1 = arith.constant 0 : i32
    return %c0_i32, %c0_i32_0 : i32, i32
  }
  func.func @transform_2(%arg0: i32) -> (i32, i32) {
    %c0_i32 = arith.constant 0 : i32
    %c0_i32_0 = arith.constant 0 : i32
    %c0_i32_1 = arith.constant 0 : i32
    return %c0_i32, %c0_i32_0 : i32, i32
  }
  func.func @transform_3(%arg0: i32) -> (i32, i32) {
    %c0_i32 = arith.constant 0 : i32
    %c0_i32_0 = arith.constant 0 : i32
    %c0_i32_1 = arith.constant 0 : i32
    return %c0_i32, %c0_i32_0 : i32, i32
  }
}

</mosaic_0001>

<llo_original>
// kernel: siim_forward.4
$region0: #{siim_forward.4}
  #allocation0 [shape = 'u32[]', space=smem, size = 0x4, offset = 0x4, fixed_abs, tag = 'smem constant byte address 0x4 - core index']
  #allocation1 [shape = 'u32[72,128]{1,0:T(1,128)}', space=vmem, size = 0x9000, scoped, tag = 'internal scratch']
  #allocation2 [shape = 'f32[32,256]{1,0:T(8,128)}', space=vmem, size = 0x8000, scoped, tag = 'scratch operand']
  %s0 = inlined_call_operand.vmem [shape: bf16[32,768], index: 0, kind: input, shape index: {}]
  %s1 = inlined_call_operand.vmem [shape: bf16[768,1024], index: 1, kind: input, shape index: {}]
  %s2 = inlined_call_operand.vmem [shape: f32[1,1024], index: 2, kind: input, shape index: {}]
  %s3 = inlined_call_operand.vmem [shape: bf16[32,1024], index: 3, kind: output, shape index: {}]
  %s4 = sld [smem:[#allocation0]]
  $region125: #{siim_forward.4} parent=0
    _
  %s6 = ssub.s32 1, %s4
  %s7 = scalar_select 0, %s6, %s4
  $region1: #{siim_forward.4} parent=0
    #allocation3 [shape = 'u8[786432]{0}', space=vmem, size = 0xc0000, scoped, tag = 'input window, operand 1']
    #allocation4 [shape = 'u8[32768]{0}', space=vmem, size = 0x8000, scoped, tag = 'output window, operand 0']
    loop: start=0, step=1, limit=6
    $region2: #{siim_forward.4} parent=1 // loop_pre_header
      _
    $region3: #{siim_forward.4} parent=1 // loop_header
      %s9 = sphi 0, %s13
      %p10 = scmp.ge.s32.totalorder %s9, 6
      %s16 = sphi 0, %s35
      %s17 = sphi 0, %s31
      %s18 = sphi 0, %s27
      %s19 = sphi 0, %s16
      %s20 = sphi 0, %s17
      %s21 = sphi 0, %s18
      %s22 = sphi 0, %s19
      %s23 = sphi 0, %s20
      %s24 = sphi 0, %s21
      %s40 = sphi 0, %s42
      %s43 = sphi 0, %s40
      %s44 = sphi 0, %s43
      %s60 = sphi 0, %s44
      %s68 = sphi 0, %s70
      %s71 = sphi 0, %s68
      %s72 = sphi 0, %s71
      %s88 = sphi 0, %s72
      %s94 = sphi 0, %s96
      %s97 = sphi 0, %s94
      %s98 = sphi 0, %s97
      %s114 = sphi 0, %s98
      %s122 = sphi 0, %s124
      %s125 = sphi 0, %s122
      %s126 = sphi 0, %s125
      %s142 = sphi 0, %s126
    $region4: #{siim_forward.4} parent=1 // loop_header_branch
      %12 = sbr.rel (%p10) target = $region8
    $region5: #{siim_forward.4} parent=1 // loop_body
      %s14 = ssub.s32 %s9, 1
      %s15 = ssub.s32 %s9, 2
      %s25 = sadd.s32 1, %s18
      %p26 = scmp.ge.s32.totalorder %s25, 1
      %s27 = scalar_select %p26, 0, %s25
      %s28 = sadd.s32 1, %s17
      %s29 = scalar_select %p26, %s28, %s17
      %p30 = scmp.ge.s32.totalorder %s29, 4
      %s31 = scalar_select %p30, 0, %s29
      %s32 = sadd.s32 1, %s16
      %s33 = scalar_select %p30, %s32, %s16
      %p34 = scmp.ge.s32.totalorder %s33, 1
      %s35 = scalar_select %p34, 0, %s33
      %s36 = ssub.s32 %s16, %s35
      %s37 = ssub.s32 %s18, %s27
      %s38 = sor.u32 %s36, %s37
      %p39 = scmp.eq.s32.totalorder %s38, 0
      %s41 = sadd.s32 %s40, 1
      %s42 = scalar_select %p39, %s40, %s41
      %p45 = pneg %p39
      %p46 = scmp.eq.s32.totalorder %s9, 3
      %p47 = por %p45, %p46
      %p48 = scmp.ne.s32.totalorder %s40, %s43
      %p49 = scmp.eq.s32.totalorder %s9, 0
      %p50 = por %p48, %p49
      %p51 = scmp.ne.s32.totalorder %s40, %s43
      %p52 = scmp.eq.s32.totalorder %s14, 3
      %p53 = por %p51, %p52
      %p54 = scmp.ne.s32.totalorder %s43, %s44
      %p55 = scmp.eq.s32.totalorder %s14, 0
      %p56 = por %p54, %p55
      %p57 = scmp.ne.s32.totalorder %s43, %s44
      %p58 = scmp.eq.s32.totalorder %s15, 3
      %p59 = por %p57, %p58
      %p61 = scmp.ne.s32.totalorder %s44, %s60
      %p62 = scmp.eq.s32.totalorder %s15, 0
      %p63 = por %p61, %p62
      %s64 = ssub.s32 %s18, %s27
      %s65 = ssub.s32 %s17, %s31
      %s66 = sor.u32 %s64, %s65
      %p67 = scmp.eq.s32.totalorder %s66, 0
      %s69 = sadd.s32 %s68, 1
      %s70 = scalar_select %p67, %s68, %s69
      %p73 = pneg %p67
      %p74 = scmp.eq.s32.totalorder %s9, 3
      %p75 = por %p73, %p74
      %p76 = scmp.ne.s32.totalorder %s68, %s71
      %p77 = scmp.eq.s32.totalorder %s9, 0
      %p78 = por %p76, %p77
      %p79 = scmp.ne.s32.totalorder %s68, %s71
      %p80 = scmp.eq.s32.totalorder %s14, 3
      %p81 = por %p79, %p80
      %p82 = scmp.ne.s32.totalorder %s71, %s72
      %p83 = scmp.eq.s32.totalorder %s14, 0
      %p84 = por %p82, %p83
      %p85 = scmp.ne.s32.totalorder %s71, %s72
      %p86 = scmp.eq.s32.totalorder %s15, 3
      %p87 = por %p85, %p86
      %p89 = scmp.ne.s32.totalorder %s72, %s88
      %p90 = scmp.eq.s32.totalorder %s15, 0
      %p91 = por %p89, %p90
      %s92 = ssub.s32 %s17, %s31
      %p93 = scmp.eq.s32.totalorder %s92, 0
      %s95 = sadd.s32 %s94, 1
      %s96 = scalar_select %p93, %s94, %s95
      %p99 = pneg %p93
      %p100 = scmp.eq.s32.totalorder %s9, 3
      %p101 = por %p99, %p100
      %p102 = scmp.ne.s32.totalorder %s94, %s97
      %p103 = scmp.eq.s32.totalorder %s9, 0
      %p104 = por %p102, %p103
      %p105 = scmp.ne.s32.totalorder %s94, %s97
      %p106 = scmp.eq.s32.totalorder %s14, 3
      %p107 = por %p105, %p106
      %p108 = scmp.ne.s32.totalorder %s97, %s98
      %p109 = scmp.eq.s32.totalorder %s14, 0
      %p110 = por %p108, %p109
      %p111 = scmp.ne.s32.totalorder %s97, %s98
      %p112 = scmp.eq.s32.totalorder %s15, 3
      %p113 = por %p111, %p112
      %p115 = scmp.ne.s32.totalorder %s98, %s114
      %p116 = scmp.eq.s32.totalorder %s15, 0
      %p117 = por %p115, %p116
      %s118 = ssub.s32 %s16, %s35
      %s119 = ssub.s32 %s17, %s31
      %s120 = sor.u32 %s118, %s119
      %p121 = scmp.eq.s32.totalorder %s120, 0
      %s123 = sadd.s32 %s122, 1
      %s124 = scalar_select %p121, %s122, %s123
      %p127 = pneg %p121
      %p128 = scmp.eq.s32.totalorder %s9, 3
      %p129 = por %p127, %p128
      %p130 = scmp.ne.s32.totalorder %s122, %s125
      %p131 = scmp.eq.s32.totalorder %s9, 0
      %p132 = por %p130, %p131
      %p133 = scmp.ne.s32.totalorder %s122, %s125
      %p134 = scmp.eq.s32.totalorder %s14, 3
      %p135 = por %p133, %p134
      %p136 = scmp.ne.s32.totalorder %s125, %s126
      %p137 = scmp.eq.s32.totalorder %s14, 0
      %p138 = por %p136, %p137
      %p139 = scmp.ne.s32.totalorder %s125, %s126
      %p140 = scmp.eq.s32.totalorder %s15, 3
      %p141 = por %p139, %p140
      %p143 = scmp.ne.s32.totalorder %s126, %s142
      %p144 = scmp.eq.s32.totalorder %s15, 0
      %p145 = por %p143, %p144
      %p146 = scmp.le.s32.totalorder 1, %s9
      %p147 = scmp.lt.s32.totalorder %s9, 5
      %p148 = pnand %p146, %p147
      %p149 = pneg %p148
      // Predicated region
      $region9: #{siim_forward.4} parent=5 // pred_check
        _
      $region10: #{siim_forward.4} parent=5 // pred_check_branch
        %151 = sbr.rel (%p148) target = $region12
      $region11: #{siim_forward.4} parent=5 // pred_region
        %s152 = ssub.s32 %s9, 1
        // Predicated region
        $region13: #{siim_forward.4} parent=11 // pred_check
          %p153 = pneg %p56
        $region14: #{siim_forward.4} parent=11 // pred_check_branch
          %155 = sbr.rel (%p153) target = $region16
        $region15: #{siim_forward.4} parent=11 // pred_region
          %s156 = smul.u32 4, %s19
          %s157 = smul.u32 6, %s21
          %p158 = scmp.lt.s32.totalorder %s156, 3
          %s159 = scalar_select %p158, %s156, 3
          %p160 = scmp.lt.s32.totalorder %s157, 5
          %s161 = scalar_select %p160, %s157, 5
          %s162 = smul.addr %s159, 6
          %s163 = sadd.s32 %s161, %s162
          %s164 = smul.addr %s163, 4
          %s165 = scalar_lea.vmem %s0, %s164
          %s166 = smul.u32 4, %s19
          %s167 = smul.u32 6, %s21
        $region16: #{siim_forward.4} parent=11 // pred_fallthru
          _
      $region12: #{siim_forward.4} parent=5 // pred_fallthru
        _
      %p168 = scmp.lt.s32.totalorder %s9, 4
      // Predicated region
      $region17: #{siim_forward.4} parent=5 // pred_check
        %p169 = pneg %p168
      $region18: #{siim_forward.4} parent=5 // pred_check_branch
        %171 = sbr.rel (%p169) target = $region20
      $region19: #{siim_forward.4} parent=5 // pred_region
        // Predicated region
        $region21: #{siim_forward.4} parent=19 // pred_check
          %p172 = pneg %p78
        $region22: #{siim_forward.4} parent=19 // pred_check_branch
          %174 = sbr.rel (%p172) target = $region24
        $region23: #{siim_forward.4} parent=19 // pred_region
          %s175 = sand.u32 %s68, 1
          %s176 = sand.u32 %s68, 1
          %s177 = smul.addr %s176, 768
          %s178 = scalar_lea.vmem [#allocation3], %s177
          %s179 = smul.u32 96, %s18
          %s180 = smul.u32 2, %s17
          %s181 = smul.addr %s179, 8
          %s182 = sadd.s32 %s180, %s181
          %s183 = smul.addr %s182, 4
          %s184 = scalar_lea.vmem %s1, %s183
          // Predicated region
          $region25: #{siim_forward.4} parent=23 // pred_check
            _
          $region26: #{siim_forward.4} parent=23 // pred_check_branch
            %186 = sbr.rel (0) target = $region28
          $region27: #{siim_forward.4} parent=23 // pred_region
            // Predicated region
            $region29: #{siim_forward.4} parent=27 // pred_check
              _
            $region30: #{siim_forward.4} parent=27 // pred_check_branch
              %188 = sbr.rel (0) target = $region32
            $region31: #{siim_forward.4} parent=27 // pred_region
              // Predicated region
              $region44: #{siim_forward.4} parent=31 // pred_check
                _
              $region45: #{siim_forward.4} parent=31 // pred_check_branch
                %394 = sbr.rel (0) target = $region47
              $region46: #{siim_forward.4} parent=31 // pred_region
                loop: start=0, step=1, limit=1
                $region48: #{siim_forward.4} parent=46 // loop_pre_header
                  _
                $region49: #{siim_forward.4} parent=46 // loop_header
                  %s396 = sphi 0, %s400
                  %p397 = scmp.ge.s32.totalorder %s396, 1
                  %s401 = sphi %s184, %s184
                  %s402 = sphi %s178, %s178
                $region50: #{siim_forward.4} parent=46 // loop_header_branch
                  %399 = sbr.rel (%p397) target = $region54
                $region51: #{siim_forward.4} parent=46 // loop_body
                  %v403 = vld [vmem:[%s401] sm:$0xff]
                  %404 = vst [vmem:[%s402] sm:$0xff] %v403
                  %v405 = vld [vmem:[%s401 + $0x20] sm:$0xff]
                  %406 = vst [vmem:[%s402 + $0x8] sm:$0xff] %v405
                  %v407 = vld [vmem:[%s401 + $0x40] sm:$0xff]
                  %408 = vst [vmem:[%s402 + $0x10] sm:$0xff] %v407
                  %v409 = vld [vmem:[%s401 + $0x60] sm:$0xff]
                  %410 = vst [vmem:[%s402 + $0x18] sm:$0xff] %v409
                  %v411 = vld [vmem:[%s401 + $0x80] sm:$0xff]
                  %412 = vst [vmem:[%s402 + $0x20] sm:$0xff] %v411
                  %v413 = vld [vmem:[%s401 + $0xa0] sm:$0xff]
                  %414 = vst [vmem:[%s402 + $0x28] sm:$0xff] %v413
                  %v415 = vld [vmem:[%s401 + $0xc0] sm:$0xff]
                  %416 = vst [vmem:[%s402 + $0x30] sm:$0xff] %v415
                  %v417 = vld [vmem:[%s401 + $0xe0] sm:$0xff]
                  %418 = vst [vmem:[%s402 + $0x38] sm:$0xff] %v417
                  %v419 = vld [vmem:[%s401 + $0x100] sm:$0xff]
                  %420 = vst [vmem:[%s402 + $0x40] sm:$0xff] %v419
                  %v421 = vld [vmem:[%s401 + $0x120] sm:$0xff]
                  %422 = vst [vmem:[%s402 + $0x48] sm:$0xff] %v421
                  %v423 = vld [vmem:[%s401 + $0x140] sm:$0xff]
                  %424 = vst [vmem:[%s402 + $0x50] sm:$0xff] %v423
                  %v425 = vld [vmem:[%s401 + $0x160] sm:$0xff]
                  %426 = vst [vmem:[%s402 + $0x58] sm:$0xff] %v425
                  %v427 = vld [vmem:[%s401 + $0x180] sm:$0xff]
                  %428 = vst [vmem:[%s402 + $0x60] sm:$0xff] %v427
                  %v429 = vld [vmem:[%s401 + $0x1a0] sm:$0xff]
                  %430 = vst [vmem:[%s402 + $0x68] sm:$0xff] %v429
                  %v431 = vld [vmem:[%s401 + $0x1c0] sm:$0xff]
                  %432 = vst [vmem:[%s402 + $0x70] sm:$0xff] %v431
                  %v433 = vld [vmem:[%s401 + $0x1e0] sm:$0xff]
                  %434 = vst [vmem:[%s402 + $0x78] sm:$0xff] %v433
                  %v435 = vld [vmem:[%s401 + $0x200] sm:$0xff]
                  %436 = vst [vmem:[%s402 + $0x80] sm:$0xff] %v435
                  %v437 = vld [vmem:[%s401 + $0x220] sm:$0xff]
                  %438 = vst [vmem:[%s402 + $0x88] sm:$0xff] %v437
                  %v439 = vld [vmem:[%s401 + $0x240] sm:$0xff]
                  %440 = vst [vmem:[%s402 + $0x90] sm:$0xff] %v439
                  %v441 = vld [vmem:[%s401 + $0x260] sm:$0xff]
                  %442 = vst [vmem:[%s402 + $0x98] sm:$0xff] %v441
                  %v443 = vld [vmem:[%s401 + $0x280] sm:$0xff]
                  %444 = vst [vmem:[%s402 + $0xa0] sm:$0xff] %v443
                  %v445 = vld [vmem:[%s401 + $0x2a0] sm:$0xff]
                  %446 = vst [vmem:[%s402 + $0xa8] sm:$0xff] %v445
                  %v447 = vld [vmem:[%s401 + $0x2c0] sm:$0xff]
                  %448 = vst [vmem:[%s402 + $0xb0] sm:$0xff] %v447
                  %v449 = vld [vmem:[%s401 + $0x2e0] sm:$0xff]
                  %450 = vst [vmem:[%s402 + $0xb8] sm:$0xff] %v449
                  %v451 = vld [vmem:[%s401 + $0x300] sm:$0xff]
                  %452 = vst [vmem:[%s402 + $0xc0] sm:$0xff] %v451
                  %v453 = vld [vmem:[%s401 + $0x320] sm:$0xff]
                  %454 = vst [vmem:[%s402 + $0xc8] sm:$0xff] %v453
                  %v455 = vld [vmem:[%s401 + $0x340] sm:$0xff]
                  %456 = vst [vmem:[%s402 + $0xd0] sm:$0xff] %v455
                  %v457 = vld [vmem:[%s401 + $0x360] sm:$0xff]
                  %458 = vst [vmem:[%s402 + $0xd8] sm:$0xff] %v457
                  %v459 = vld [vmem:[%s401 + $0x380] sm:$0xff]
                  %460 = vst [vmem:[%s402 + $0xe0] sm:$0xff] %v459
                  %v461 = vld [vmem:[%s401 + $0x3a0] sm:$0xff]
                  %462 = vst [vmem:[%s402 + $0xe8] sm:$0xff] %v461
                  %v463 = vld [vmem:[%s401 + $0x3c0] sm:$0xff]
                  %464 = vst [vmem:[%s402 + $0xf0] sm:$0xff] %v463
                  %v465 = vld [vmem:[%s401 + $0x3e0] sm:$0xff]
                  %466 = vst [vmem:[%s402 + $0xf8] sm:$0xff] %v465
                  %v467 = vld [vmem:[%s401 + $0x400] sm:$0xff]
                  %468 = vst [vmem:[%s402 + $0x100] sm:$0xff] %v467
                  %v469 = vld [vmem:[%s401 + $0x420] sm:$0xff]
                  %470 = vst [vmem:[%s402 + $0x108] sm:$0xff] %v469
                  %v471 = vld [vmem:[%s401 + $0x440] sm:$0xff]
                  %472 = vst [vmem:[%s402 + $0x110] sm:$0xff] %v471
                  %v473 = vld [vmem:[%s401 + $0x460] sm:$0xff]
                  %474 = vst [vmem:[%s402 + $0x118] sm:$0xff] %v473
                  %v475 = vld [vmem:[%s401 + $0x480] sm:$0xff]
                  %476 = vst [vmem:[%s402 + $0x120] sm:$0xff] %v475
                  %v477 = vld [vmem:[%s401 + $0x4a0] sm:$0xff]
                  %478 = vst [vmem:[%s402 + $0x128] sm:$0xff] %v477
                  %v479 = vld [vmem:[%s401 + $0x4c0] sm:$0xff]
                  %480 = vst [vmem:[%s402 + $0x130] sm:$0xff] %v479
                  %v481 = vld [vmem:[%s401 + $0x4e0] sm:$0xff]
                  %482 = vst [vmem:[%s402 + $0x138] sm:$0xff] %v481
                  %v483 = vld [vmem:[%s401 + $0x500] sm:$0xff]
                  %484 = vst [vmem:[%s402 + $0x140] sm:$0xff] %v483
                  %v485 = vld [vmem:[%s401 + $0x520] sm:$0xff]
                  %486 = vst [vmem:[%s402 + $0x148] sm:$0xff] %v485
                  %v487 = vld [vmem:[%s401 + $0x540] sm:$0xff]
                  %488 = vst [vmem:[%s402 + $0x150] sm:$0xff] %v487
                  %v489 = vld [vmem:[%s401 + $0x560] sm:$0xff]
                  %490 = vst [vmem:[%s402 + $0x158] sm:$0xff] %v489
                  %v491 = vld [vmem:[%s401 + $0x580] sm:$0xff]
                  %492 = vst [vmem:[%s402 + $0x160] sm:$0xff] %v491
                  %v493 = vld [vmem:[%s401 + $0x5a0] sm:$0xff]
                  %494 = vst [vmem:[%s402 + $0x168] sm:$0xff] %v493
                  %v495 = vld [vmem:[%s401 + $0x5c0] sm:$0xff]
                  %496 = vst [vmem:[%s402 + $0x170] sm:$0xff] %v495
                  %v497 = vld [vmem:[%s401 + $0x5e0] sm:$0xff]
                  %498 = vst [vmem:[%s402 + $0x178] sm:$0xff] %v497
                  %v499 = vld [vmem:[%s401 + $0x600] sm:$0xff]
                  %500 = vst [vmem:[%s402 + $0x180] sm:$0xff] %v499
                  %v501 = vld [vmem:[%s401 + $0x620] sm:$0xff]
                  %502 = vst [vmem:[%s402 + $0x188] sm:$0xff] %v501
                  %v503 = vld [vmem:[%s401 + $0x640] sm:$0xff]
                  %504 = vst [vmem:[%s402 + $0x190] sm:$0xff] %v503
                  %v505 = vld [vmem:[%s401 + $0x660] sm:$0xff]
                  %506 = vst [vmem:[%s402 + $0x198] sm:$0xff] %v505
                  %v507 = vld [vmem:[%s401 + $0x680] sm:$0xff]
                  %508 = vst [vmem:[%s402 + $0x1a0] sm:$0xff] %v507
                  %v509 = vld [vmem:[%s401 + $0x6a0] sm:$0xff]
                  %510 = vst [vmem:[%s402 + $0x1a8] sm:$0xff] %v509
                  %v511 = vld [vmem:[%s401 + $0x6c0] sm:$0xff]
                  %512 = vst [vmem:[%s402 + $0x1b0] sm:$0xff] %v511
                  %v513 = vld [vmem:[%s401 + $0x6e0] sm:$0xff]
                  %514 = vst [vmem:[%s402 + $0x1b8] sm:$0xff] %v513
                  %v515 = vld [vmem:[%s401 + $0x700] sm:$0xff]
                  %516 = vst [vmem:[%s402 + $0x1c0] sm:$0xff] %v515
                  %v517 = vld [vmem:[%s401 + $0x720] sm:$0xff]
                  %518 = vst [vmem:[%s402 + $0x1c8] sm:$0xff] %v517
                  %v519 = vld [vmem:[%s401 + $0x740] sm:$0xff]
                  %520 = vst [vmem:[%s402 + $0x1d0] sm:$0xff] %v519
                  %v521 = vld [vmem:[%s401 + $0x760] sm:$0xff]
                  %522 = vst [vmem:[%s402 + $0x1d8] sm:$0xff] %v521
                  %v523 = vld [vmem:[%s401 + $0x780] sm:$0xff]
                  %524 = vst [vmem:[%s402 + $0x1e0] sm:$0xff] %v523
                  %v525 = vld [vmem:[%s401 + $0x7a0] sm:$0xff]
                  %526 = vst [vmem:[%s402 + $0x1e8] sm:$0xff] %v525
                  %v527 = vld [vmem:[%s401 + $0x7c0] sm:$0xff]
                  %528 = vst [vmem:[%s402 + $0x1f0] sm:$0xff] %v527
                  %v529 = vld [vmem:[%s401 + $0x7e0] sm:$0xff]
                  %530 = vst [vmem:[%s402 + $0x1f8] sm:$0xff] %v529
                  %v531 = vld [vmem:[%s401 + $0x800] sm:$0xff]
                  %532 = vst [vmem:[%s402 + $0x200] sm:$0xff] %v531
                  %v533 = vld [vmem:[%s401 + $0x820] sm:$0xff]
                  %534 = vst [vmem:[%s402 + $0x208] sm:$0xff] %v533
                  %v535 = vld [vmem:[%s401 + $0x840] sm:$0xff]
                  %536 = vst [vmem:[%s402 + $0x210] sm:$0xff] %v535
                  %v537 = vld [vmem:[%s401 + $0x860] sm:$0xff]
                  %538 = vst [vmem:[%s402 + $0x218] sm:$0xff] %v537
                  %v539 = vld [vmem:[%s401 + $0x880] sm:$0xff]
                  %540 = vst [vmem:[%s402 + $0x220] sm:$0xff] %v539
                  %v541 = vld [vmem:[%s401 + $0x8a0] sm:$0xff]
                  %542 = vst [vmem:[%s402 + $0x228] sm:$0xff] %v541
                  %v543 = vld [vmem:[%s401 + $0x8c0] sm:$0xff]
                  %544 = vst [vmem:[%s402 + $0x230] sm:$0xff] %v543
                  %v545 = vld [vmem:[%s401 + $0x8e0] sm:$0xff]
                  %546 = vst [vmem:[%s402 + $0x238] sm:$0xff] %v545
                  %v547 = vld [vmem:[%s401 + $0x900] sm:$0xff]
                  %548 = vst [vmem:[%s402 + $0x240] sm:$0xff] %v547
                  %v549 = vld [vmem:[%s401 + $0x920] sm:$0xff]
                  %550 = vst [vmem:[%s402 + $0x248] sm:$0xff] %v549
                  %v551 = vld [vmem:[%s401 + $0x940] sm:$0xff]
                  %552 = vst [vmem:[%s402 + $0x250] sm:$0xff] %v551
                  %v553 = vld [vmem:[%s401 + $0x960] sm:$0xff]
                  %554 = vst [vmem:[%s402 + $0x258] sm:$0xff] %v553
                  %v555 = vld [vmem:[%s401 + $0x980] sm:$0xff]
                  %556 = vst [vmem:[%s402 + $0x260] sm:$0xff] %v555
                  %v557 = vld [vmem:[%s401 + $0x9a0] sm:$0xff]
                  %558 = vst [vmem:[%s402 + $0x268] sm:$0xff] %v557
                  %v559 = vld [vmem:[%s401 + $0x9c0] sm:$0xff]
                  %560 = vst [vmem:[%s402 + $0x270] sm:$0xff] %v559
                  %v561 = vld [vmem:[%s401 + $0x9e0] sm:$0xff]
                  %562 = vst [vmem:[%s402 + $0x278] sm:$0xff] %v561
                  %v563 = vld [vmem:[%s401 + $0xa00] sm:$0xff]
                  %564 = vst [vmem:[%s402 + $0x280] sm:$0xff] %v563
                  %v565 = vld [vmem:[%s401 + $0xa20] sm:$0xff]
                  %566 = vst [vmem:[%s402 + $0x288] sm:$0xff] %v565
                  %v567 = vld [vmem:[%s401 + $0xa40] sm:$0xff]
                  %568 = vst [vmem:[%s402 + $0x290] sm:$0xff] %v567
                  %v569 = vld [vmem:[%s401 + $0xa60] sm:$0xff]
                  %570 = vst [vmem:[%s402 + $0x298] sm:$0xff] %v569
                  %v571 = vld [vmem:[%s401 + $0xa80] sm:$0xff]
                  %572 = vst [vmem:[%s402 + $0x2a0] sm:$0xff] %v571
                  %v573 = vld [vmem:[%s401 + $0xaa0] sm:$0xff]
                  %574 = vst [vmem:[%s402 + $0x2a8] sm:$0xff] %v573
                  %v575 = vld [vmem:[%s401 + $0xac0] sm:$0xff]
                  %576 = vst [vmem:[%s402 + $0x2b0] sm:$0xff] %v575
                  %v577 = vld [vmem:[%s401 + $0xae0] sm:$0xff]
                  %578 = vst [vmem:[%s402 + $0x2b8] sm:$0xff] %v577
                  %v579 = vld [vmem:[%s401 + $0xb00] sm:$0xff]
                  %580 = vst [vmem:[%s402 + $0x2c0] sm:$0xff] %v579
                  %v581 = vld [vmem:[%s401 + $0xb20] sm:$0xff]
                  %582 = vst [vmem:[%s402 + $0x2c8] sm:$0xff] %v581
                  %v583 = vld [vmem:[%s401 + $0xb40] sm:$0xff]
                  %584 = vst [vmem:[%s402 + $0x2d0] sm:$0xff] %v583
                  %v585 = vld [vmem:[%s401 + $0xb60] sm:$0xff]
                  %586 = vst [vmem:[%s402 + $0x2d8] sm:$0xff] %v585
                  %v587 = vld [vmem:[%s401 + $0xb80] sm:$0xff]
                  %588 = vst [vmem:[%s402 + $0x2e0] sm:$0xff] %v587
                  %v589 = vld [vmem:[%s401 + $0xba0] sm:$0xff]
                  %590 = vst [vmem:[%s402 + $0x2e8] sm:$0xff] %v589
                  %v591 = vld [vmem:[%s401 + $0xbc0] sm:$0xff]
                  %592 = vst [vmem:[%s402 + $0x2f0] sm:$0xff] %v591
                  %v593 = vld [vmem:[%s401 + $0xbe0] sm:$0xff]
                  %594 = vst [vmem:[%s402 + $0x2f8] sm:$0xff] %v593
                $region52: #{siim_forward.4} parent=46 // loop_footer
                  %s400 = sadd.s32 1, %s396
                $region53: #{siim_forward.4} parent=46 // loop_footer_branch
                  %395 = sbr.rel target = $region49
                $region54: #{siim_forward.4} parent=46 // loop_exit
                  _
              $region47: #{siim_forward.4} parent=31 // pred_fallthru
                _
              // Predicated region
              $region55: #{siim_forward.4} parent=31 // pred_check
                _
              $region56: #{siim_forward.4} parent=31 // pred_check_branch
                %596 = sbr.rel target = $region58
              $region57: #{siim_forward.4} parent=31 // pred_region
                _
              $region58: #{siim_forward.4} parent=31 // pred_fallthru
                _
            $region32: #{siim_forward.4} parent=27 // pred_fallthru
              _
            // Predicated region
            $region33: #{siim_forward.4} parent=27 // pred_check
              _
            $region34: #{siim_forward.4} parent=27 // pred_check_branch
              %190 = sbr.rel target = $region36
            $region35: #{siim_forward.4} parent=27 // pred_region
              %s192 = ssub.s32 256, 1
              loop: start=0, step=1, limit=1
              $region37: #{siim_forward.4} parent=35 // loop_pre_header
                _
              $region38: #{siim_forward.4} parent=35 // loop_header
                %s194 = sphi 0, %s198
                %p195 = scmp.ge.s32.totalorder %s194, 1
                %s199 = sphi %s184, %s184
                %s200 = sphi %s178, %s178
              $region39: #{siim_forward.4} parent=35 // loop_header_branch
                %197 = sbr.rel (%p195) target = $region43
              $region40: #{siim_forward.4} parent=35 // loop_body
                %v201 = vld [vmem:[%s199] sm:%s192]
                %202 = vst [vmem:[%s200] sm:%s192] %v201
                %v203 = vld [vmem:[%s199 + $0x20] sm:%s192]
                %204 = vst [vmem:[%s200 + $0x8] sm:%s192] %v203
                %v205 = vld [vmem:[%s199 + $0x40] sm:%s192]
                %206 = vst [vmem:[%s200 + $0x10] sm:%s192] %v205
                %v207 = vld [vmem:[%s199 + $0x60] sm:%s192]
                %208 = vst [vmem:[%s200 + $0x18] sm:%s192] %v207
                %v209 = vld [vmem:[%s199 + $0x80] sm:%s192]
                %210 = vst [vmem:[%s200 + $0x20] sm:%s192] %v209
                %v211 = vld [vmem:[%s199 + $0xa0] sm:%s192]
                %212 = vst [vmem:[%s200 + $0x28] sm:%s192] %v211
                %v213 = vld [vmem:[%s199 + $0xc0] sm:%s192]
                %214 = vst [vmem:[%s200 + $0x30] sm:%s192] %v213
                %v215 = vld [vmem:[%s199 + $0xe0] sm:%s192]
                %216 = vst [vmem:[%s200 + $0x38] sm:%s192] %v215
                %v217 = vld [vmem:[%s199 + $0x100] sm:%s192]
                %218 = vst [vmem:[%s200 + $0x40] sm:%s192] %v217
                %v219 = vld [vmem:[%s199 + $0x120] sm:%s192]
                %220 = vst [vmem:[%s200 + $0x48] sm:%s192] %v219
                %v221 = vld [vmem:[%s199 + $0x140] sm:%s192]
                %222 = vst [vmem:[%s200 + $0x50] sm:%s192] %v221
                %v223 = vld [vmem:[%s199 + $0x160] sm:%s192]
                %224 = vst [vmem:[%s200 + $0x58] sm:%s192] %v223
                %v225 = vld [vmem:[%s199 + $0x180] sm:%s192]
                %226 = vst [vmem:[%s200 + $0x60] sm:%s192] %v225
                %v227 = vld [vmem:[%s199 + $0x1a0] sm:%s192]
                %228 = vst [vmem:[%s200 + $0x68] sm:%s192] %v227
                %v229 = vld [vmem:[%s199 + $0x1c0] sm:%s192]
                %230 = vst [vmem:[%s200 + $0x70] sm:%s192] %v229
                %v231 = vld [vmem:[%s199 + $0x1e0] sm:%s192]
                %232 = vst [vmem:[%s200 + $0x78] sm:%s192] %v231
                %v233 = vld [vmem:[%s199 + $0x200] sm:%s192]
                %234 = vst [vmem:[%s200 + $0x80] sm:%s192] %v233
                %v235 = vld [vmem:[%s199 + $0x220] sm:%s192]
                %236 = vst [vmem:[%s200 + $0x88] sm:%s192] %v235
                %v237 = vld [vmem:[%s199 + $0x240] sm:%s192]
                %238 = vst [vmem:[%s200 + $0x90] sm:%s192] %v237
                %v239 = vld [vmem:[%s199 + $0x260] sm:%s192]
                %240 = vst [vmem:[%s200 + $0x98] sm:%s192] %v239
                %v241 = vld [vmem:[%s199 + $0x280] sm:%s192]
                %242 = vst [vmem:[%s200 + $0xa0] sm:%s192] %v241
                %v243 = vld [vmem:[%s199 + $0x2a0] sm:%s192]
                %244 = vst [vmem:[%s200 + $0xa8] sm:%s192] %v243
                %v245 = vld [vmem:[%s199 + $0x2c0] sm:%s192]
                %246 = vst [vmem:[%s200 + $0xb0] sm:%s192] %v245
                %v247 = vld [vmem:[%s199 + $0x2e0] sm:%s192]
                %248 = vst [vmem:[%s200 + $0xb8] sm:%s192] %v247
                %v249 = vld [vmem:[%s199 + $0x300] sm:%s192]
                %250 = vst [vmem:[%s200 + $0xc0] sm:%s192] %v249
                %v251 = vld [vmem:[%s199 + $0x320] sm:%s192]
                %252 = vst [vmem:[%s200 + $0xc8] sm:%s192] %v251
                %v253 = vld [vmem:[%s199 + $0x340] sm:%s192]
                %254 = vst [vmem:[%s200 + $0xd0] sm:%s192] %v253
                %v255 = vld [vmem:[%s199 + $0x360] sm:%s192]
                %256 = vst [vmem:[%s200 + $0xd8] sm:%s192] %v255
                %v257 = vld [vmem:[%s199 + $0x380] sm:%s192]
                %258 = vst [vmem:[%s200 + $0xe0] sm:%s192] %v257
                %v259 = vld [vmem:[%s199 + $0x3a0] sm:%s192]
                %260 = vst [vmem:[%s200 + $0xe8] sm:%s192] %v259
                %v261 = vld [vmem:[%s199 + $0x3c0] sm:%s192]
                %262 = vst [vmem:[%s200 + $0xf0] sm:%s192] %v261
                %v263 = vld [vmem:[%s199 + $0x3e0] sm:%s192]
                %264 = vst [vmem:[%s200 + $0xf8] sm:%s192] %v263
                %v265 = vld [vmem:[%s199 + $0x400] sm:%s192]
                %266 = vst [vmem:[%s200 + $0x100] sm:%s192] %v265
                %v267 = vld [vmem:[%s199 + $0x420] sm:%s192]
                %268 = vst [vmem:[%s200 + $0x108] sm:%s192] %v267
                %v269 = vld [vmem:[%s199 + $0x440] sm:%s192]
                %270 = vst [vmem:[%s200 + $0x110] sm:%s192] %v269
                %v271 = vld [vmem:[%s199 + $0x460] sm:%s192]
                %272 = vst [vmem:[%s200 + $0x118] sm:%s192] %v271
                %v273 = vld [vmem:[%s199 + $0x480] sm:%s192]
                %274 = vst [vmem:[%s200 + $0x120] sm:%s192] %v273
                %v275 = vld [vmem:[%s199 + $0x4a0] sm:%s192]
                %276 = vst [vmem:[%s200 + $0x128] sm:%s192] %v275
                %v277 = vld [vmem:[%s199 + $0x4c0] sm:%s192]
                %278 = vst [vmem:[%s200 + $0x130] sm:%s192] %v277
                %v279 = vld [vmem:[%s199 + $0x4e0] sm:%s192]
                %280 = vst [vmem:[%s200 + $0x138] sm:%s192] %v279
                %v281 = vld [vmem:[%s199 + $0x500] sm:%s192]
                %282 = vst [vmem:[%s200 + $0x140] sm:%s192] %v281
                %v283 = vld [vmem:[%s199 + $0x520] sm:%s192]
                %284 = vst [vmem:[%s200 + $0x148] sm:%s192] %v283
                %v285 = vld [vmem:[%s199 + $0x540] sm:%s192]
                %286 = vst [vmem:[%s200 + $0x150] sm:%s192] %v285
                %v287 = vld [vmem:[%s199 + $0x560] sm:%s192]
                %288 = vst [vmem:[%s200 + $0x158] sm:%s192] %v287
                %v289 = vld [vmem:[%s199 + $0x580] sm:%s192]
                %290 = vst [vmem:[%s200 + $0x160] sm:%s192] %v289
                %v291 = vld [vmem:[%s199 + $0x5a0] sm:%s192]
                %292 = vst [vmem:[%s200 + $0x168] sm:%s192] %v291
                %v293 = vld [vmem:[%s199 + $0x5c0] sm:%s192]
                %294 = vst [vmem:[%s200 + $0x170] sm:%s192] %v293
                %v295 = vld [vmem:[%s199 + $0x5e0] sm:%s192]
                %296 = vst [vmem:[%s200 + $0x178] sm:%s192] %v295
                %v297 = vld [vmem:[%s199 + $0x600] sm:%s192]
                %298 = vst [vmem:[%s200 + $0x180] sm:%s192] %v297
                %v299 = vld [vmem:[%s199 + $0x620] sm:%s192]
                %300 = vst [vmem:[%s200 + $0x188] sm:%s192] %v299
                %v301 = vld [vmem:[%s199 + $0x640] sm:%s192]
                %302 = vst [vmem:[%s200 + $0x190] sm:%s192] %v301
                %v303 = vld [vmem:[%s199 + $0x660] sm:%s192]
                %304 = vst [vmem:[%s200 + $0x198] sm:%s192] %v303
                %v305 = vld [vmem:[%s199 + $0x680] sm:%s192]
                %306 = vst [vmem:[%s200 + $0x1a0] sm:%s192] %v305
                %v307 = vld [vmem:[%s199 + $0x6a0] sm:%s192]
                %308 = vst [vmem:[%s200 + $0x1a8] sm:%s192] %v307
                %v309 = vld [vmem:[%s199 + $0x6c0] sm:%s192]
                %310 = vst [vmem:[%s200 + $0x1b0] sm:%s192] %v309
                %v311 = vld [vmem:[%s199 + $0x6e0] sm:%s192]
                %312 = vst [vmem:[%s200 + $0x1b8] sm:%s192] %v311
                %v313 = vld [vmem:[%s199 + $0x700] sm:%s192]
                %314 = vst [vmem:[%s200 + $0x1c0] sm:%s192] %v313
                %v315 = vld [vmem:[%s199 + $0x720] sm:%s192]
                %316 = vst [vmem:[%s200 + $0x1c8] sm:%s192] %v315
                %v317 = vld [vmem:[%s199 + $0x740] sm:%s192]
                %318 = vst [vmem:[%s200 + $0x1d0] sm:%s192] %v317
                %v319 = vld [vmem:[%s199 + $0x760] sm:%s192]
                %320 = vst [vmem:[%s200 + $0x1d8] sm:%s192] %v319
                %v321 = vld [vmem:[%s199 + $0x780] sm:%s192]
                %322 = vst [vmem:[%s200 + $0x1e0] sm:%s192] %v321
                %v323 = vld [vmem:[%s199 + $0x7a0] sm:%s192]
                %324 = vst [vmem:[%s200 + $0x1e8] sm:%s192] %v323
                %v325 = vld [vmem:[%s199 + $0x7c0] sm:%s192]
                %326 = vst [vmem:[%s200 + $0x1f0] sm:%s192] %v325
                %v327 = vld [vmem:[%s199 + $0x7e0] sm:%s192]
                %328 = vst [vmem:[%s200 + $0x1f8] sm:%s192] %v327
                %v329 = vld [vmem:[%s199 + $0x800] sm:%s192]
                %330 = vst [vmem:[%s200 + $0x200] sm:%s192] %v329
                %v331 = vld [vmem:[%s199 + $0x820] sm:%s192]
                %332 = vst [vmem:[%s200 + $0x208] sm:%s192] %v331
                %v333 = vld [vmem:[%s199 + $0x840] sm:%s192]
                %334 = vst [vmem:[%s200 + $0x210] sm:%s192] %v333
                %v335 = vld [vmem:[%s199 + $0x860] sm:%s192]
                %336 = vst [vmem:[%s200 + $0x218] sm:%s192] %v335
                %v337 = vld [vmem:[%s199 + $0x880] sm:%s192]
                %338 = vst [vmem:[%s200 + $0x220] sm:%s192] %v337
                %v339 = vld [vmem:[%s199 + $0x8a0] sm:%s192]
                %340 = vst [vmem:[%s200 + $0x228] sm:%s192] %v339
                %v341 = vld [vmem:[%s199 + $0x8c0] sm:%s192]
                %342 = vst [vmem:[%s200 + $0x230] sm:%s192] %v341
                %v343 = vld [vmem:[%s199 + $0x8e0] sm:%s192]
                %344 = vst [vmem:[%s200 + $0x238] sm:%s192] %v343
                %v345 = vld [vmem:[%s199 + $0x900] sm:%s192]
                %346 = vst [vmem:[%s200 + $0x240] sm:%s192] %v345
                %v347 = vld [vmem:[%s199 + $0x920] sm:%s192]
                %348 = vst [vmem:[%s200 + $0x248] sm:%s192] %v347
                %v349 = vld [vmem:[%s199 + $0x940] sm:%s192]
                %350 = vst [vmem:[%s200 + $0x250] sm:%s192] %v349
                %v351 = vld [vmem:[%s199 + $0x960] sm:%s192]
                %352 = vst [vmem:[%s200 + $0x258] sm:%s192] %v351
                %v353 = vld [vmem:[%s199 + $0x980] sm:%s192]
                %354 = vst [vmem:[%s200 + $0x260] sm:%s192] %v353
                %v355 = vld [vmem:[%s199 + $0x9a0] sm:%s192]
                %356 = vst [vmem:[%s200 + $0x268] sm:%s192] %v355
                %v357 = vld [vmem:[%s199 + $0x9c0] sm:%s192]
                %358 = vst [vmem:[%s200 + $0x270] sm:%s192] %v357
                %v359 = vld [vmem:[%s199 + $0x9e0] sm:%s192]
                %360 = vst [vmem:[%s200 + $0x278] sm:%s192] %v359
                %v361 = vld [vmem:[%s199 + $0xa00] sm:%s192]
                %362 = vst [vmem:[%s200 + $0x280] sm:%s192] %v361
                %v363 = vld [vmem:[%s199 + $0xa20] sm:%s192]
                %364 = vst [vmem:[%s200 + $0x288] sm:%s192] %v363
                %v365 = vld [vmem:[%s199 + $0xa40] sm:%s192]
                %366 = vst [vmem:[%s200 + $0x290] sm:%s192] %v365
                %v367 = vld [vmem:[%s199 + $0xa60] sm:%s192]
                %368 = vst [vmem:[%s200 + $0x298] sm:%s192] %v367
                %v369 = vld [vmem:[%s199 + $0xa80] sm:%s192]
                %370 = vst [vmem:[%s200 + $0x2a0] sm:%s192] %v369
                %v371 = vld [vmem:[%s199 + $0xaa0] sm:%s192]
                %372 = vst [vmem:[%s200 + $0x2a8] sm:%s192] %v371
                %v373 = vld [vmem:[%s199 + $0xac0] sm:%s192]
                %374 = vst [vmem:[%s200 + $0x2b0] sm:%s192] %v373
                %v375 = vld [vmem:[%s199 + $0xae0] sm:%s192]
                %376 = vst [vmem:[%s200 + $0x2b8] sm:%s192] %v375
                %v377 = vld [vmem:[%s199 + $0xb00] sm:%s192]
                %378 = vst [vmem:[%s200 + $0x2c0] sm:%s192] %v377
                %v379 = vld [vmem:[%s199 + $0xb20] sm:%s192]
                %380 = vst [vmem:[%s200 + $0x2c8] sm:%s192] %v379
                %v381 = vld [vmem:[%s199 + $0xb40] sm:%s192]
                %382 = vst [vmem:[%s200 + $0x2d0] sm:%s192] %v381
                %v383 = vld [vmem:[%s199 + $0xb60] sm:%s192]
                %384 = vst [vmem:[%s200 + $0x2d8] sm:%s192] %v383
                %v385 = vld [vmem:[%s199 + $0xb80] sm:%s192]
                %386 = vst [vmem:[%s200 + $0x2e0] sm:%s192] %v385
                %v387 = vld [vmem:[%s199 + $0xba0] sm:%s192]
                %388 = vst [vmem:[%s200 + $0x2e8] sm:%s192] %v387
                %v389 = vld [vmem:[%s199 + $0xbc0] sm:%s192]
                %390 = vst [vmem:[%s200 + $0x2f0] sm:%s192] %v389
                %v391 = vld [vmem:[%s199 + $0xbe0] sm:%s192]
                %392 = vst [vmem:[%s200 + $0x2f8] sm:%s192] %v391
              $region41: #{siim_forward.4} parent=35 // loop_footer
                %s198 = sadd.s32 1, %s194
              $region42: #{siim_forward.4} parent=35 // loop_footer_branch
                %193 = sbr.rel target = $region38
              $region43: #{siim_forward.4} parent=35 // loop_exit
                _
            $region36: #{siim_forward.4} parent=27 // pred_fallthru
              _
          $region28: #{siim_forward.4} parent=23 // pred_fallthru
            _
          %597 = vnop
        $region24: #{siim_forward.4} parent=19 // pred_fallthru
          _
        // Predicated region
        $region59: #{siim_forward.4} parent=19 // pred_check
          %p598 = pneg %p104
        $region60: #{siim_forward.4} parent=19 // pred_check_branch
          %600 = sbr.rel (%p598) target = $region62
        $region61: #{siim_forward.4} parent=19 // pred_region
          %s601 = smul.u32 2, %s17
          %p602 = scmp.lt.s32.totalorder %s601, 7
          %s603 = scalar_select %p602, %s601, 7
          %s604 = scalar_lea.vmem %s2, %s603
          %s605 = smul.u32 2, %s17
        $region62: #{siim_forward.4} parent=19 // pred_fallthru
          _
      $region20: #{siim_forward.4} parent=5 // pred_fallthru
        _
      %p606 = scmp.le.s32.totalorder 1, %s9
      %p607 = scmp.lt.s32.totalorder %s9, 5
      %p608 = pnand %p606, %p607
      %p609 = pneg %p608
      // Predicated region
      $region63: #{siim_forward.4} parent=5 // pred_check
        _
      $region64: #{siim_forward.4} parent=5 // pred_check_branch
        %611 = sbr.rel (%p608) target = $region66
      $region65: #{siim_forward.4} parent=5 // pred_region
        %s612 = ssub.s32 %s9, 1
        %s613 = sand.u32 %s71, 1
        %s614 = sand.u32 %s71, 1
        %s615 = smul.addr %s614, 768
        %s616 = scalar_lea.vmem [#allocation3], %s615
        // Predicated region
        $region67: #{siim_forward.4} parent=65 // pred_check
          %p617 = pneg %p84
        $region68: #{siim_forward.4} parent=65 // pred_check_branch
          %619 = sbr.rel (%p617) target = $region70
        $region69: #{siim_forward.4} parent=65 // pred_region
          _
        $region70: #{siim_forward.4} parent=65 // pred_fallthru
          _
        %s620 = smul.u32 4, %s19
        %s621 = smul.u32 6, %s21
        %p622 = scmp.lt.s32.totalorder %s620, 3
        %s623 = scalar_select %p622, %s620, 3
        %p624 = scmp.lt.s32.totalorder %s621, 5
        %s625 = scalar_select %p624, %s621, 5
        %s626 = smul.addr %s623, 6
        %s627 = sadd.s32 %s625, %s626
        %s628 = smul.addr %s627, 4
        %s629 = scalar_lea.vmem %s0, %s628
        %p630 = pneg %p56
        %p631 = pneg %p53
        %s632 = sand.u32 %s71, 1
        %s633 = sand.u32 %s71, 1
        %s634 = smul.addr %s633, 768
        %s635 = scalar_lea.vmem [#allocation3], %s634
        %p636 = pneg %p84
        %p637 = pneg %p81
        %s638 = smul.u32 2, %s20
        %p639 = scmp.lt.s32.totalorder %s638, 7
        %s640 = scalar_select %p639, %s638, 7
        %s641 = scalar_lea.vmem %s2, %s640
        %p642 = pneg %p110
        %p643 = pneg %p107
        %p644 = pneg %p138
        %p645 = pneg %p135
        %s646 = sand.u32 %s125, 1
        %s647 = sand.u32 %s125, 1
        %s648 = smul.addr %s647, 32
        %s649 = scalar_lea.vmem [#allocation4], %s648
        %s650 = smul.u32 4, %s19
        %s651 = smul.u32 6, %s21
        %p652 = scmp.lt.s32.totalorder %s650, 3
        %s653 = scalar_select %p652, %s650, 3
        %p654 = scmp.lt.s32.totalorder %s651, 5
        %s655 = scalar_select %p654, %s651, 5
        %s656 = smul.addr %s653, 6
        %s657 = sadd.s32 %s655, %s656
        %s658 = smul.addr %s657, 4
        %s659 = scalar_lea.vmem %s0, %s658
        %s660 = smul.u32 4, %s19
        %s661 = smul.u32 6, %s21
        %s662 = smul.u32 96, %s21
        %s663 = smul.u32 2, %s20
        %s664 = smul.u32 2, %s20
        %p665 = scmp.lt.s32.totalorder %s664, 7
        %s666 = scalar_select %p665, %s664, 7
        %s667 = scalar_lea.vmem %s2, %s666
        %s668 = smul.u32 2, %s20
        %s669 = smul.u32 4, %s19
        %s670 = smul.u32 2, %s20
        %p671 = scmp.eq.s32.totalorder %s21, 0
        // Predicated region
        $region71: #{siim_forward.4} parent=65 // pred_check
          %p672 = pneg %p671
        $region72: #{siim_forward.4} parent=65 // pred_check_branch
          %674 = sbr.rel (%p672) target = $region74
        $region73: #{siim_forward.4} parent=65 // pred_region
          %675 = vst [vmem:[#allocation2] sm:$0xff] 0.0
          %676 = vst [vmem:[#allocation2 + $0x8] sm:$0xff] 0.0
          %677 = vst [vmem:[#allocation2 + $0x10] sm:$0xff] 0.0
          %678 = vst [vmem:[#allocation2 + $0x18] sm:$0xff] 0.0
          %679 = vst [vmem:[#allocation2 + $0x20] sm:$0xff] 0.0
          %680 = vst [vmem:[#allocation2 + $0x28] sm:$0xff] 0.0
          %681 = vst [vmem:[#allocation2 + $0x30] sm:$0xff] 0.0
          %682 = vst [vmem:[#allocation2 + $0x38] sm:$0xff] 0.0
        $region74: #{siim_forward.4} parent=65 // pred_fallthru
          _
        %v683 = vld [vmem:[#allocation2] sm:$0xff]
        %v684 = vld [vmem:[#allocation2 + $0x8] sm:$0xff]
        %v685 = vld [vmem:[#allocation2 + $0x10] sm:$0xff]
        %v686 = vld [vmem:[#allocation2 + $0x18] sm:$0xff]
        %v687 = vld [vmem:[#allocation2 + $0x20] sm:$0xff]
        %v688 = vld [vmem:[#allocation2 + $0x28] sm:$0xff]
        %v689 = vld [vmem:[#allocation2 + $0x30] sm:$0xff]
        %v690 = vld [vmem:[#allocation2 + $0x38] sm:$0xff]
        %v691 = vld [vmem:[%s659] sm:$0xff]
        %v692 = vld [vmem:[%s659 + $0x8] sm:$0xff]
        %v693 = vld [vmem:[%s659 + $0x10] sm:$0xff]
        %v694 = vld [vmem:[%s659 + $0x18] sm:$0xff]
        %v695 = vld [vmem:[%s659 + $0x20] sm:$0xff]
        %v696 = vld [vmem:[%s659 + $0x28] sm:$0xff]
        %v697 = vld [vmem:[%s659 + $0x30] sm:$0xff]
        %v698 = vld [vmem:[%s659 + $0x38] sm:$0xff]
        %v699 = vld [vmem:[%s659 + $0x40] sm:$0xff]
        %v700 = vld [vmem:[%s659 + $0x48] sm:$0xff]
        %v701 = vld [vmem:[%s659 + $0x50] sm:$0xff]
        %v702 = vld [vmem:[%s659 + $0x58] sm:$0xff]
        %v703 = vld [vmem:[%s616] sm:$0xff]
        %v704 = vld [vmem:[%s616 + $0x8] sm:$0xff]
        %v705 = vld [vmem:[%s616 + $0x10] sm:$0xff]
        %v706 = vld [vmem:[%s616 + $0x18] sm:$0xff]
        %v707 = vld [vmem:[%s616 + $0x20] sm:$0xff]
        %v708 = vld [vmem:[%s616 + $0x28] sm:$0xff]
        %v709 = vld [vmem:[%s616 + $0x30] sm:$0xff]
        %v710 = vld [vmem:[%s616 + $0x38] sm:$0xff]
        %v711 = vld [vmem:[%s616 + $0x40] sm:$0xff]
        %v712 = vld [vmem:[%s616 + $0x48] sm:$0xff]
        %v713 = vld [vmem:[%s616 + $0x50] sm:$0xff]
        %v714 = vld [vmem:[%s616 + $0x58] sm:$0xff]
        %v715 = vld [vmem:[%s616 + $0x60] sm:$0xff]
        %v716 = vld [vmem:[%s616 + $0x68] sm:$0xff]
        %v717 = vld [vmem:[%s616 + $0x70] sm:$0xff]
        %v718 = vld [vmem:[%s616 + $0x78] sm:$0xff]
        %v719 = vld [vmem:[%s616 + $0x80] sm:$0xff]
        %v720 = vld [vmem:[%s616 + $0x88] sm:$0xff]
        %v721 = vld [vmem:[%s616 + $0x90] sm:$0xff]
        %v722 = vld [vmem:[%s616 + $0x98] sm:$0xff]
        %v723 = vld [vmem:[%s616 + $0xa0] sm:$0xff]
        %v724 = vld [vmem:[%s616 + $0xa8] sm:$0xff]
        %v725 = vld [vmem:[%s616 + $0xb0] sm:$0xff]
        %v726 = vld [vmem:[%s616 + $0xb8] sm:$0xff]
        %v727 = vld [vmem:[%s616 + $0xc0] sm:$0xff]
        %v728 = vld [vmem:[%s616 + $0xc8] sm:$0xff]
        %v729 = vld [vmem:[%s616 + $0xd0] sm:$0xff]
        %v730 = vld [vmem:[%s616 + $0xd8] sm:$0xff]
        %v731 = vld [vmem:[%s616 + $0xe0] sm:$0xff]
        %v732 = vld [vmem:[%s616 + $0xe8] sm:$0xff]
        %v733 = vld [vmem:[%s616 + $0xf0] sm:$0xff]
        %v734 = vld [vmem:[%s616 + $0xf8] sm:$0xff]
        %v735 = vld [vmem:[%s616 + $0x100] sm:$0xff]
        %v736 = vld [vmem:[%s616 + $0x108] sm:$0xff]
        %v737 = vld [vmem:[%s616 + $0x110] sm:$0xff]
        %v738 = vld [vmem:[%s616 + $0x118] sm:$0xff]
        %v739 = vld [vmem:[%s616 + $0x120] sm:$0xff]
        %v740 = vld [vmem:[%s616 + $0x128] sm:$0xff]
        %v741 = vld [vmem:[%s616 + $0x130] sm:$0xff]
        %v742 = vld [vmem:[%s616 + $0x138] sm:$0xff]
        %v743 = vld [vmem:[%s616 + $0x140] sm:$0xff]
        %v744 = vld [vmem:[%s616 + $0x148] sm:$0xff]
        %v745 = vld [vmem:[%s616 + $0x150] sm:$0xff]
        %v746 = vld [vmem:[%s616 + $0x158] sm:$0xff]
        %v747 = vld [vmem:[%s616 + $0x160] sm:$0xff]
        %v748 = vld [vmem:[%s616 + $0x168] sm:$0xff]
        %v749 = vld [vmem:[%s616 + $0x170] sm:$0xff]
        %v750 = vld [vmem:[%s616 + $0x178] sm:$0xff]
        %v751 = vld [vmem:[%s616 + $0x180] sm:$0xff]
        %v752 = vld [vmem:[%s616 + $0x188] sm:$0xff]
        %v753 = vld [vmem:[%s616 + $0x190] sm:$0xff]
        %v754 = vld [vmem:[%s616 + $0x198] sm:$0xff]
        %v755 = vld [vmem:[%s616 + $0x1a0] sm:$0xff]
        %v756 = vld [vmem:[%s616 + $0x1a8] sm:$0xff]
        %v757 = vld [vmem:[%s616 + $0x1b0] sm:$0xff]
        %v758 = vld [vmem:[%s616 + $0x1b8] sm:$0xff]
        %v759 = vld [vmem:[%s616 + $0x1c0] sm:$0xff]
        %v760 = vld [vmem:[%s616 + $0x1c8] sm:$0xff]
        %v761 = vld [vmem:[%s616 + $0x1d0] sm:$0xff]
        %v762 = vld [vmem:[%s616 + $0x1d8] sm:$0xff]
        %v763 = vld [vmem:[%s616 + $0x1e0] sm:$0xff]
        %v764 = vld [vmem:[%s616 + $0x1e8] sm:$0xff]
        %v765 = vld [vmem:[%s616 + $0x1f0] sm:$0xff]
        %v766 = vld [vmem:[%s616 + $0x1f8] sm:$0xff]
        %v767 = vld [vmem:[%s616 + $0x200] sm:$0xff]
        %v768 = vld [vmem:[%s616 + $0x208] sm:$0xff]
        %v769 = vld [vmem:[%s616 + $0x210] sm:$0xff]
        %v770 = vld [vmem:[%s616 + $0x218] sm:$0xff]
        %v771 = vld [vmem:[%s616 + $0x220] sm:$0xff]
        %v772 = vld [vmem:[%s616 + $0x228] sm:$0xff]
        %v773 = vld [vmem:[%s616 + $0x230] sm:$0xff]
        %v774 = vld [vmem:[%s616 + $0x238] sm:$0xff]
        %v775 = vld [vmem:[%s616 + $0x240] sm:$0xff]
        %v776 = vld [vmem:[%s616 + $0x248] sm:$0xff]
        %v777 = vld [vmem:[%s616 + $0x250] sm:$0xff]
        %v778 = vld [vmem:[%s616 + $0x258] sm:$0xff]
        %v779 = vld [vmem:[%s616 + $0x260] sm:$0xff]
        %v780 = vld [vmem:[%s616 + $0x268] sm:$0xff]
        %v781 = vld [vmem:[%s616 + $0x270] sm:$0xff]
        %v782 = vld [vmem:[%s616 + $0x278] sm:$0xff]
        %v783 = vld [vmem:[%s616 + $0x280] sm:$0xff]
        %v784 = vld [vmem:[%s616 + $0x288] sm:$0xff]
        %v785 = vld [vmem:[%s616 + $0x290] sm:$0xff]
        %v786 = vld [vmem:[%s616 + $0x298] sm:$0xff]
        %v787 = vld [vmem:[%s616 + $0x2a0] sm:$0xff]
        %v788 = vld [vmem:[%s616 + $0x2a8] sm:$0xff]
        %v789 = vld [vmem:[%s616 + $0x2b0] sm:$0xff]
        %v790 = vld [vmem:[%s616 + $0x2b8] sm:$0xff]
        %v791 = vld [vmem:[%s616 + $0x2c0] sm:$0xff]
        %v792 = vld [vmem:[%s616 + $0x2c8] sm:$0xff]
        %v793 = vld [vmem:[%s616 + $0x2d0] sm:$0xff]
        %v794 = vld [vmem:[%s616 + $0x2d8] sm:$0xff]
        %v795 = vld [vmem:[%s616 + $0x2e0] sm:$0xff]
        %v796 = vld [vmem:[%s616 + $0x2e8] sm:$0xff]
        %v797 = vld [vmem:[%s616 + $0x2f0] sm:$0xff]
        %v798 = vld [vmem:[%s616 + $0x2f8] sm:$0xff]
        %v811 = vunpack.c.l.b16 %v691
        %v812 = vunpack.c.h.b16 %v691
        %v813 = vunpack.c.l.b16 %v692
        %v814 = vunpack.c.h.b16 %v692
        %v815 = vunpack.c.l.b16 %v693
        %v816 = vunpack.c.h.b16 %v693
        %v817 = vunpack.c.l.b16 %v694
        %v818 = vunpack.c.h.b16 %v694
        %v819 = vunpack.c.l.b16 %v695
        %v820 = vunpack.c.h.b16 %v695
        %v821 = vunpack.c.l.b16 %v696
        %v822 = vunpack.c.h.b16 %v696
        %v823 = vunpack.c.l.b16 %v697
        %v824 = vunpack.c.h.b16 %v697
        %v825 = vunpack.c.l.b16 %v698
        %v826 = vunpack.c.h.b16 %v698
        %v827 = vunpack.c.l.b16 %v699
        %v828 = vunpack.c.h.b16 %v699
        %v829 = vunpack.c.l.b16 %v700
        %v830 = vunpack.c.h.b16 %v700
        %v831 = vunpack.c.l.b16 %v701
        %v832 = vunpack.c.h.b16 %v701
        %v833 = vunpack.c.l.b16 %v702
        %v834 = vunpack.c.h.b16 %v702
        %v835 = vpack.c.b16 %v817, %v811
        %v836 = vpack.c.b16 %v818, %v812
        %v837 = vpack.c.b16 %v819, %v813
        %v838 = vpack.c.b16 %v820, %v814
        %v839 = vpack.c.b16 %v821, %v815
        %v840 = vpack.c.b16 %v822, %v816
        %v841 = vpack.c.b16 %v829, %v823
        %v842 = vpack.c.b16 %v830, %v824
        %v843 = vpack.c.b16 %v831, %v825
        %v844 = vpack.c.b16 %v832, %v826
        %v845 = vpack.c.b16 %v833, %v827
        %v846 = vpack.c.b16 %v834, %v828
        %v955 = vunpack.c.l.b16 %v703
        %v956 = vunpack.c.h.b16 %v703
        %v957 = vunpack.c.l.b16 %v704
        %v958 = vunpack.c.h.b16 %v704
        %v959 = vunpack.c.l.b16 %v705
        %v960 = vunpack.c.h.b16 %v705
        %v961 = vunpack.c.l.b16 %v706
        %v962 = vunpack.c.h.b16 %v706
        %v963 = vunpack.c.l.b16 %v707
        %v964 = vunpack.c.h.b16 %v707
        %v965 = vunpack.c.l.b16 %v708
        %v966 = vunpack.c.h.b16 %v708
        %v967 = vunpack.c.l.b16 %v709
        %v968 = vunpack.c.h.b16 %v709
        %v969 = vunpack.c.l.b16 %v710
        %v970 = vunpack.c.h.b16 %v710
        %v971 = vunpack.c.l.b16 %v711
        %v972 = vunpack.c.h.b16 %v711
        %v973 = vunpack.c.l.b16 %v712
        %v974 = vunpack.c.h.b16 %v712
        %v975 = vunpack.c.l.b16 %v713
        %v976 = vunpack.c.h.b16 %v713
        %v977 = vunpack.c.l.b16 %v714
        %v978 = vunpack.c.h.b16 %v714
        %v979 = vunpack.c.l.b16 %v715
        %v980 = vunpack.c.h.b16 %v715
        %v981 = vunpack.c.l.b16 %v716
        %v982 = vunpack.c.h.b16 %v716
        %v983 = vunpack.c.l.b16 %v717
        %v984 = vunpack.c.h.b16 %v717
        %v985 = vunpack.c.l.b16 %v718
        %v986 = vunpack.c.h.b16 %v718
        %v987 = vunpack.c.l.b16 %v719
        %v988 = vunpack.c.h.b16 %v719
        %v989 = vunpack.c.l.b16 %v720
        %v990 = vunpack.c.h.b16 %v720
        %v991 = vunpack.c.l.b16 %v721
        %v992 = vunpack.c.h.b16 %v721
        %v993 = vunpack.c.l.b16 %v722
        %v994 = vunpack.c.h.b16 %v722
        %v995 = vunpack.c.l.b16 %v723
        %v996 = vunpack.c.h.b16 %v723
        %v997 = vunpack.c.l.b16 %v724
        %v998 = vunpack.c.h.b16 %v724
        %v999 = vunpack.c.l.b16 %v725
        %v1000 = vunpack.c.h.b16 %v725
        %v1001 = vunpack.c.l.b16 %v726
        %v1002 = vunpack.c.h.b16 %v726
        %v1003 = vunpack.c.l.b16 %v727
        %v1004 = vunpack.c.h.b16 %v727
        %v1005 = vunpack.c.l.b16 %v728
        %v1006 = vunpack.c.h.b16 %v728
        %v1007 = vunpack.c.l.b16 %v729
        %v1008 = vunpack.c.h.b16 %v729
        %v1009 = vunpack.c.l.b16 %v730
        %v1010 = vunpack.c.h.b16 %v730
        %v1011 = vunpack.c.l.b16 %v731
        %v1012 = vunpack.c.h.b16 %v731
        %v1013 = vunpack.c.l.b16 %v732
        %v1014 = vunpack.c.h.b16 %v732
        %v1015 = vunpack.c.l.b16 %v733
        %v1016 = vunpack.c.h.b16 %v733
        %v1017 = vunpack.c.l.b16 %v734
        %v1018 = vunpack.c.h.b16 %v734
        %v1019 = vunpack.c.l.b16 %v735
        %v1020 = vunpack.c.h.b16 %v735
        %v1021 = vunpack.c.l.b16 %v736
        %v1022 = vunpack.c.h.b16 %v736
        %v1023 = vunpack.c.l.b16 %v737
        %v1024 = vunpack.c.h.b16 %v737
        %v1025 = vunpack.c.l.b16 %v738
        %v1026 = vunpack.c.h.b16 %v738
        %v1027 = vunpack.c.l.b16 %v739
        %v1028 = vunpack.c.h.b16 %v739
        %v1029 = vunpack.c.l.b16 %v740
        %v1030 = vunpack.c.h.b16 %v740
        %v1031 = vunpack.c.l.b16 %v741
        %v1032 = vunpack.c.h.b16 %v741
        %v1033 = vunpack.c.l.b16 %v742
        %v1034 = vunpack.c.h.b16 %v742
        %v1035 = vunpack.c.l.b16 %v743
        %v1036 = vunpack.c.h.b16 %v743
        %v1037 = vunpack.c.l.b16 %v744
        %v1038 = vunpack.c.h.b16 %v744
        %v1039 = vunpack.c.l.b16 %v745
        %v1040 = vunpack.c.h.b16 %v745
        %v1041 = vunpack.c.l.b16 %v746
        %v1042 = vunpack.c.h.b16 %v746
        %v1043 = vunpack.c.l.b16 %v747
        %v1044 = vunpack.c.h.b16 %v747
        %v1045 = vunpack.c.l.b16 %v748
        %v1046 = vunpack.c.h.b16 %v748
        %v1047 = vunpack.c.l.b16 %v749
        %v1048 = vunpack.c.h.b16 %v749
        %v1049 = vunpack.c.l.b16 %v750
        %v1050 = vunpack.c.h.b16 %v750
        %v1051 = vunpack.c.l.b16 %v751
        %v1052 = vunpack.c.h.b16 %v751
        %v1053 = vunpack.c.l.b16 %v752
        %v1054 = vunpack.c.h.b16 %v752
        %v1055 = vunpack.c.l.b16 %v753
        %v1056 = vunpack.c.h.b16 %v753
        %v1057 = vunpack.c.l.b16 %v754
        %v1058 = vunpack.c.h.b16 %v754
        %v1059 = vunpack.c.l.b16 %v755
        %v1060 = vunpack.c.h.b16 %v755
        %v1061 = vunpack.c.l.b16 %v756
        %v1062 = vunpack.c.h.b16 %v756
        %v1063 = vunpack.c.l.b16 %v757
        %v1064 = vunpack.c.h.b16 %v757
        %v1065 = vunpack.c.l.b16 %v758
        %v1066 = vunpack.c.h.b16 %v758
        %v1067 = vunpack.c.l.b16 %v759
        %v1068 = vunpack.c.h.b16 %v759
        %v1069 = vunpack.c.l.b16 %v760
        %v1070 = vunpack.c.h.b16 %v760
        %v1071 = vunpack.c.l.b16 %v761
        %v1072 = vunpack.c.h.b16 %v761
        %v1073 = vunpack.c.l.b16 %v762
        %v1074 = vunpack.c.h.b16 %v762
        %v1075 = vunpack.c.l.b16 %v763
        %v1076 = vunpack.c.h.b16 %v763
        %v1077 = vunpack.c.l.b16 %v764
        %v1078 = vunpack.c.h.b16 %v764
        %v1079 = vunpack.c.l.b16 %v765
        %v1080 = vunpack.c.h.b16 %v765
        %v1081 = vunpack.c.l.b16 %v766
        %v1082 = vunpack.c.h.b16 %v766
        %v1083 = vunpack.c.l.b16 %v767
        %v1084 = vunpack.c.h.b16 %v767
        %v1085 = vunpack.c.l.b16 %v768
        %v1086 = vunpack.c.h.b16 %v768
        %v1087 = vunpack.c.l.b16 %v769
        %v1088 = vunpack.c.h.b16 %v769
        %v1089 = vunpack.c.l.b16 %v770
        %v1090 = vunpack.c.h.b16 %v770
        %v1091 = vunpack.c.l.b16 %v771
        %v1092 = vunpack.c.h.b16 %v771
        %v1093 = vunpack.c.l.b16 %v772
        %v1094 = vunpack.c.h.b16 %v772
        %v1095 = vunpack.c.l.b16 %v773
        %v1096 = vunpack.c.h.b16 %v773
        %v1097 = vunpack.c.l.b16 %v774
        %v1098 = vunpack.c.h.b16 %v774
        %v1099 = vunpack.c.l.b16 %v775
        %v1100 = vunpack.c.h.b16 %v775
        %v1101 = vunpack.c.l.b16 %v776
        %v1102 = vunpack.c.h.b16 %v776
        %v1103 = vunpack.c.l.b16 %v777
        %v1104 = vunpack.c.h.b16 %v777
        %v1105 = vunpack.c.l.b16 %v778
        %v1106 = vunpack.c.h.b16 %v778
        %v1107 = vunpack.c.l.b16 %v779
        %v1108 = vunpack.c.h.b16 %v779
        %v1109 = vunpack.c.l.b16 %v780
        %v1110 = vunpack.c.h.b16 %v780
        %v1111 = vunpack.c.l.b16 %v781
        %v1112 = vunpack.c.h.b16 %v781
        %v1113 = vunpack.c.l.b16 %v782
        %v1114 = vunpack.c.h.b16 %v782
        %v1115 = vunpack.c.l.b16 %v783
        %v1116 = vunpack.c.h.b16 %v783
        %v1117 = vunpack.c.l.b16 %v784
        %v1118 = vunpack.c.h.b16 %v784
        %v1119 = vunpack.c.l.b16 %v785
        %v1120 = vunpack.c.h.b16 %v785
        %v1121 = vunpack.c.l.b16 %v786
        %v1122 = vunpack.c.h.b16 %v786
        %v1123 = vunpack.c.l.b16 %v787
        %v1124 = vunpack.c.h.b16 %v787
        %v1125 = vunpack.c.l.b16 %v788
        %v1126 = vunpack.c.h.b16 %v788
        %v1127 = vunpack.c.l.b16 %v789
        %v1128 = vunpack.c.h.b16 %v789
        %v1129 = vunpack.c.l.b16 %v790
        %v1130 = vunpack.c.h.b16 %v790
        %v1131 = vunpack.c.l.b16 %v791
        %v1132 = vunpack.c.h.b16 %v791
        %v1133 = vunpack.c.l.b16 %v792
        %v1134 = vunpack.c.h.b16 %v792
        %v1135 = vunpack.c.l.b16 %v793
        %v1136 = vunpack.c.h.b16 %v793
        %v1137 = vunpack.c.l.b16 %v794
        %v1138 = vunpack.c.h.b16 %v794
        %v1139 = vunpack.c.l.b16 %v795
        %v1140 = vunpack.c.h.b16 %v795
        %v1141 = vunpack.c.l.b16 %v796
        %v1142 = vunpack.c.h.b16 %v796
        %v1143 = vunpack.c.l.b16 %v797
        %v1144 = vunpack.c.h.b16 %v797
        %v1145 = vunpack.c.l.b16 %v798
        %v1146 = vunpack.c.h.b16 %v798
        %v1147 = vpack.c.b16 %v957, %v955
        %v1148 = vpack.c.b16 %v958, %v956
        %v1149 = vpack.c.b16 %v961, %v959
        %v1150 = vpack.c.b16 %v962, %v960
        %v1151 = vpack.c.b16 %v965, %v963
        %v1152 = vpack.c.b16 %v966, %v964
        %v1153 = vpack.c.b16 %v969, %v967
        %v1154 = vpack.c.b16 %v970, %v968
        %v1155 = vpack.c.b16 %v973, %v971
        %v1156 = vpack.c.b16 %v974, %v972
        %v1157 = vpack.c.b16 %v977, %v975
        %v1158 = vpack.c.b16 %v978, %v976
        %v1159 = vpack.c.b16 %v981, %v979
        %v1160 = vpack.c.b16 %v982, %v980
        %v1161 = vpack.c.b16 %v985, %v983
        %v1162 = vpack.c.b16 %v986, %v984
        %v1163 = vpack.c.b16 %v989, %v987
        %v1164 = vpack.c.b16 %v990, %v988
        %v1165 = vpack.c.b16 %v993, %v991
        %v1166 = vpack.c.b16 %v994, %v992
        %v1167 = vpack.c.b16 %v997, %v995
        %v1168 = vpack.c.b16 %v998, %v996
        %v1169 = vpack.c.b16 %v1001, %v999
        %v1170 = vpack.c.b16 %v1002, %v1000
        %v1171 = vpack.c.b16 %v1005, %v1003
        %v1172 = vpack.c.b16 %v1006, %v1004
        %v1173 = vpack.c.b16 %v1009, %v1007
        %v1174 = vpack.c.b16 %v1010, %v1008
        %v1175 = vpack.c.b16 %v1013, %v1011
        %v1176 = vpack.c.b16 %v1014, %v1012
        %v1177 = vpack.c.b16 %v1017, %v1015
        %v1178 = vpack.c.b16 %v1018, %v1016
        %v1179 = vpack.c.b16 %v1021, %v1019
        %v1180 = vpack.c.b16 %v1022, %v1020
        %v1181 = vpack.c.b16 %v1025, %v1023
        %v1182 = vpack.c.b16 %v1026, %v1024
        %v1183 = vpack.c.b16 %v1029, %v1027
        %v1184 = vpack.c.b16 %v1030, %v1028
        %v1185 = vpack.c.b16 %v1033, %v1031
        %v1186 = vpack.c.b16 %v1034, %v1032
        %v1187 = vpack.c.b16 %v1037, %v1035
        %v1188 = vpack.c.b16 %v1038, %v1036
        %v1189 = vpack.c.b16 %v1041, %v1039
        %v1190 = vpack.c.b16 %v1042, %v1040
        %v1191 = vpack.c.b16 %v1045, %v1043
        %v1192 = vpack.c.b16 %v1046, %v1044
        %v1193 = vpack.c.b16 %v1049, %v1047
        %v1194 = vpack.c.b16 %v1050, %v1048
        %v1195 = vpack.c.b16 %v1053, %v1051
        %v1196 = vpack.c.b16 %v1054, %v1052
        %v1197 = vpack.c.b16 %v1057, %v1055
        %v1198 = vpack.c.b16 %v1058, %v1056
        %v1199 = vpack.c.b16 %v1061, %v1059
        %v1200 = vpack.c.b16 %v1062, %v1060
        %v1201 = vpack.c.b16 %v1065, %v1063
        %v1202 = vpack.c.b16 %v1066, %v1064
        %v1203 = vpack.c.b16 %v1069, %v1067
        %v1204 = vpack.c.b16 %v1070, %v1068
        %v1205 = vpack.c.b16 %v1073, %v1071
        %v1206 = vpack.c.b16 %v1074, %v1072
        %v1207 = vpack.c.b16 %v1077, %v1075
        %v1208 = vpack.c.b16 %v1078, %v1076
        %v1209 = vpack.c.b16 %v1081, %v1079
        %v1210 = vpack.c.b16 %v1082, %v1080
        %v1211 = vpack.c.b16 %v1085, %v1083
        %v1212 = vpack.c.b16 %v1086, %v1084
        %v1213 = vpack.c.b16 %v1089, %v1087
        %v1214 = vpack.c.b16 %v1090, %v1088
        %v1215 = vpack.c.b16 %v1093, %v1091
        %v1216 = vpack.c.b16 %v1094, %v1092
        %v1217 = vpack.c.b16 %v1097, %v1095
        %v1218 = vpack.c.b16 %v1098, %v1096
        %v1219 = vpack.c.b16 %v1101, %v1099
        %v1220 = vpack.c.b16 %v1102, %v1100
        %v1221 = vpack.c.b16 %v1105, %v1103
        %v1222 = vpack.c.b16 %v1106, %v1104
        %v1223 = vpack.c.b16 %v1109, %v1107
        %v1224 = vpack.c.b16 %v1110, %v1108
        %v1225 = vpack.c.b16 %v1113, %v1111
        %v1226 = vpack.c.b16 %v1114, %v1112
        %v1227 = vpack.c.b16 %v1117, %v1115
        %v1228 = vpack.c.b16 %v1118, %v1116
        %v1229 = vpack.c.b16 %v1121, %v1119
        %v1230 = vpack.c.b16 %v1122, %v1120
        %v1231 = vpack.c.b16 %v1125, %v1123
        %v1232 = vpack.c.b16 %v1126, %v1124
        %v1233 = vpack.c.b16 %v1129, %v1127
        %v1234 = vpack.c.b16 %v1130, %v1128
        %v1235 = vpack.c.b16 %v1133, %v1131
        %v1236 = vpack.c.b16 %v1134, %v1132
        %v1237 = vpack.c.b16 %v1137, %v1135
        %v1238 = vpack.c.b16 %v1138, %v1136
        %v1239 = vpack.c.b16 %v1141, %v1139
        %v1240 = vpack.c.b16 %v1142, %v1140
        %v1241 = vpack.c.b16 %v1145, %v1143
        %v1242 = vpack.c.b16 %v1146, %v1144
        %1339 = vmatpush.bf16.msra.mxu0 %v1161
        %1340 = vmatpush.bf16.msra.mxu0 %v1159
        %1341 = vmatpush.bf16.msra.mxu0 %v1157
        %1342 = vmatpush.bf16.msra.mxu0 %v1155
        %1343 = vmatpush.bf16.msra.mxu0 %v1153
        %1344 = vmatpush.bf16.msra.mxu0 %v1151
        %1345 = vmatpush.bf16.msra.mxu0 %v1149
        %1346 = vmatpush.bf16.msra.mxu0 %v1147
        %1347 = vmatmul.bf16.gmra.mxu0 %v835
        %v1348 = vpop.f32.mrf.mxu0
        %v1349 = vadd.f32 0.0, %v1348
        %v1350 = vpop.f32.mrf.mxu0
        %v1351 = vadd.f32 0.0, %v1350
        %1352 = vmatmul.bf16.gmra.mxu0 %v841
        %v1353 = vpop.f32.mrf.mxu0
        %v1354 = vadd.f32 0.0, %v1353
        %v1355 = vpop.f32.mrf.mxu0
        %v1356 = vadd.f32 0.0, %v1355
        %1357 = vdwg.mxu0
        %1358 = vmatpush.bf16.msra.mxu0 %v1177
        %1359 = vmatpush.bf16.msra.mxu0 %v1175
        %1360 = vmatpush.bf16.msra.mxu0 %v1173
        %1361 = vmatpush.bf16.msra.mxu0 %v1171
        %1362 = vmatpush.bf16.msra.mxu0 %v1169
        %1363 = vmatpush.bf16.msra.mxu0 %v1167
        %1364 = vmatpush.bf16.msra.mxu0 %v1165
        %1365 = vmatpush.bf16.msra.mxu0 %v1163
        %1366 = vmatmul.bf16.gmra.mxu0 %v836
        %v1367 = vpop.f32.mrf.mxu0
        %v1368 = vadd.f32 %v1349, %v1367
        %v1369 = vpop.f32.mrf.mxu0
        %v1370 = vadd.f32 %v1351, %v1369
        %1371 = vmatmul.bf16.gmra.mxu0 %v842
        %v1372 = vpop.f32.mrf.mxu0
        %v1373 = vadd.f32 %v1354, %v1372
        %v1374 = vpop.f32.mrf.mxu0
        %v1375 = vadd.f32 %v1356, %v1374
        %1376 = vdwg.mxu0
        %1377 = vmatpush.bf16.msra.mxu0 %v1193
        %1378 = vmatpush.bf16.msra.mxu0 %v1191
        %1379 = vmatpush.bf16.msra.mxu0 %v1189
        %1380 = vmatpush.bf16.msra.mxu0 %v1187
        %1381 = vmatpush.bf16.msra.mxu0 %v1185
        %1382 = vmatpush.bf16.msra.mxu0 %v1183
        %1383 = vmatpush.bf16.msra.mxu0 %v1181
        %1384 = vmatpush.bf16.msra.mxu0 %v1179
        %1385 = vmatmul.bf16.gmra.mxu0 %v837
        %v1386 = vpop.f32.mrf.mxu0
        %v1387 = vadd.f32 %v1368, %v1386
        %v1388 = vpop.f32.mrf.mxu0
        %v1389 = vadd.f32 %v1370, %v1388
        %1390 = vmatmul.bf16.gmra.mxu0 %v843
        %v1391 = vpop.f32.mrf.mxu0
        %v1392 = vadd.f32 %v1373, %v1391
        %v1393 = vpop.f32.mrf.mxu0
        %v1394 = vadd.f32 %v1375, %v1393
        %1395 = vdwg.mxu0
        %1396 = vmatpush.bf16.msra.mxu0 %v1209
        %1397 = vmatpush.bf16.msra.mxu0 %v1207
        %1398 = vmatpush.bf16.msra.mxu0 %v1205
        %1399 = vmatpush.bf16.msra.mxu0 %v1203
        %1400 = vmatpush.bf16.msra.mxu0 %v1201
        %1401 = vmatpush.bf16.msra.mxu0 %v1199
        %1402 = vmatpush.bf16.msra.mxu0 %v1197
        %1403 = vmatpush.bf16.msra.mxu0 %v1195
        %1404 = vmatmul.bf16.gmra.mxu0 %v838
        %v1405 = vpop.f32.mrf.mxu0
        %v1406 = vadd.f32 %v1387, %v1405
        %v1407 = vpop.f32.mrf.mxu0
        %v1408 = vadd.f32 %v1389, %v1407
        %1409 = vmatmul.bf16.gmra.mxu0 %v844
        %v1410 = vpop.f32.mrf.mxu0
        %v1411 = vadd.f32 %v1392, %v1410
        %v1412 = vpop.f32.mrf.mxu0
        %v1413 = vadd.f32 %v1394, %v1412
        %1414 = vdwg.mxu0
        %1415 = vmatpush.bf16.msra.mxu0 %v1225
        %1416 = vmatpush.bf16.msra.mxu0 %v1223
        %1417 = vmatpush.bf16.msra.mxu0 %v1221
        %1418 = vmatpush.bf16.msra.mxu0 %v1219
        %1419 = vmatpush.bf16.msra.mxu0 %v1217
        %1420 = vmatpush.bf16.msra.mxu0 %v1215
        %1421 = vmatpush.bf16.msra.mxu0 %v1213
        %1422 = vmatpush.bf16.msra.mxu0 %v1211
        %1423 = vmatmul.bf16.gmra.mxu0 %v839
        %v1424 = vpop.f32.mrf.mxu0
        %v1425 = vadd.f32 %v1406, %v1424
        %v1426 = vpop.f32.mrf.mxu0
        %v1427 = vadd.f32 %v1408, %v1426
        %1428 = vmatmul.bf16.gmra.mxu0 %v845
        %v1429 = vpop.f32.mrf.mxu0
        %v1430 = vadd.f32 %v1411, %v1429
        %v1431 = vpop.f32.mrf.mxu0
        %v1432 = vadd.f32 %v1413, %v1431
        %1433 = vdwg.mxu0
        %1434 = vmatpush.bf16.msra.mxu0 %v1241
        %1435 = vmatpush.bf16.msra.mxu0 %v1239
        %1436 = vmatpush.bf16.msra.mxu0 %v1237
        %1437 = vmatpush.bf16.msra.mxu0 %v1235
        %1438 = vmatpush.bf16.msra.mxu0 %v1233
        %1439 = vmatpush.bf16.msra.mxu0 %v1231
        %1440 = vmatpush.bf16.msra.mxu0 %v1229
        %1441 = vmatpush.bf16.msra.mxu0 %v1227
        %1442 = vmatmul.bf16.gmra.mxu0 %v840
        %v1443 = vpop.f32.mrf.mxu0
        %v1444 = vadd.f32 %v1425, %v1443
        %v1445 = vpop.f32.mrf.mxu0
        %v1446 = vadd.f32 %v1427, %v1445
        %1447 = vmatmul.bf16.gmra.mxu0 %v846
        %v1448 = vpop.f32.mrf.mxu0
        %v1449 = vadd.f32 %v1430, %v1448
        %v1450 = vpop.f32.mrf.mxu0
        %v1451 = vadd.f32 %v1432, %v1450
        %1452 = vdwg.mxu0
        %1453 = vmatpush.bf16.msra.mxu0 %v1162
        %1454 = vmatpush.bf16.msra.mxu0 %v1160
        %1455 = vmatpush.bf16.msra.mxu0 %v1158
        %1456 = vmatpush.bf16.msra.mxu0 %v1156
        %1457 = vmatpush.bf16.msra.mxu0 %v1154
        %1458 = vmatpush.bf16.msra.mxu0 %v1152
        %1459 = vmatpush.bf16.msra.mxu0 %v1150
        %1460 = vmatpush.bf16.msra.mxu0 %v1148
        %1461 = vmatmul.bf16.gmra.mxu0 %v835
        %v1462 = vpop.f32.mrf.mxu0
        %v1463 = vadd.f32 0.0, %v1462
        %v1464 = vpop.f32.mrf.mxu0
        %v1465 = vadd.f32 0.0, %v1464
        %1466 = vmatmul.bf16.gmra.mxu0 %v841
        %v1467 = vpop.f32.mrf.mxu0
        %v1468 = vadd.f32 0.0, %v1467
        %v1469 = vpop.f32.mrf.mxu0
        %v1470 = vadd.f32 0.0, %v1469
        %1471 = vdwg.mxu0
        %1472 = vmatpush.bf16.msra.mxu0 %v1178
        %1473 = vmatpush.bf16.msra.mxu0 %v1176
        %1474 = vmatpush.bf16.msra.mxu0 %v1174
        %1475 = vmatpush.bf16.msra.mxu0 %v1172
        %1476 = vmatpush.bf16.msra.mxu0 %v1170
        %1477 = vmatpush.bf16.msra.mxu0 %v1168
        %1478 = vmatpush.bf16.msra.mxu0 %v1166
        %1479 = vmatpush.bf16.msra.mxu0 %v1164
        %1480 = vmatmul.bf16.gmra.mxu0 %v836
        %v1481 = vpop.f32.mrf.mxu0
        %v1482 = vadd.f32 %v1463, %v1481
        %v1483 = vpop.f32.mrf.mxu0
        %v1484 = vadd.f32 %v1465, %v1483
        %1485 = vmatmul.bf16.gmra.mxu0 %v842
        %v1486 = vpop.f32.mrf.mxu0
        %v1487 = vadd.f32 %v1468, %v1486
        %v1488 = vpop.f32.mrf.mxu0
        %v1489 = vadd.f32 %v1470, %v1488
        %1490 = vdwg.mxu0
        %1491 = vmatpush.bf16.msra.mxu0 %v1194
        %1492 = vmatpush.bf16.msra.mxu0 %v1192
        %1493 = vmatpush.bf16.msra.mxu0 %v1190
        %1494 = vmatpush.bf16.msra.mxu0 %v1188
        %1495 = vmatpush.bf16.msra.mxu0 %v1186
        %1496 = vmatpush.bf16.msra.mxu0 %v1184
        %1497 = vmatpush.bf16.msra.mxu0 %v1182
        %1498 = vmatpush.bf16.msra.mxu0 %v1180
        %1499 = vmatmul.bf16.gmra.mxu0 %v837
        %v1500 = vpop.f32.mrf.mxu0
        %v1501 = vadd.f32 %v1482, %v1500
        %v1502 = vpop.f32.mrf.mxu0
        %v1503 = vadd.f32 %v1484, %v1502
        %1504 = vmatmul.bf16.gmra.mxu0 %v843
        %v1505 = vpop.f32.mrf.mxu0
        %v1506 = vadd.f32 %v1487, %v1505
        %v1507 = vpop.f32.mrf.mxu0
        %v1508 = vadd.f32 %v1489, %v1507
        %1509 = vdwg.mxu0
        %1510 = vmatpush.bf16.msra.mxu0 %v1210
        %1511 = vmatpush.bf16.msra.mxu0 %v1208
        %1512 = vmatpush.bf16.msra.mxu0 %v1206
        %1513 = vmatpush.bf16.msra.mxu0 %v1204
        %1514 = vmatpush.bf16.msra.mxu0 %v1202
        %1515 = vmatpush.bf16.msra.mxu0 %v1200
        %1516 = vmatpush.bf16.msra.mxu0 %v1198
        %1517 = vmatpush.bf16.msra.mxu0 %v1196
        %1518 = vmatmul.bf16.gmra.mxu0 %v838
        %v1519 = vpop.f32.mrf.mxu0
        %v1520 = vadd.f32 %v1501, %v1519
        %v1521 = vpop.f32.mrf.mxu0
        %v1522 = vadd.f32 %v1503, %v1521
        %1523 = vmatmul.bf16.gmra.mxu0 %v844
        %v1524 = vpop.f32.mrf.mxu0
        %v1525 = vadd.f32 %v1506, %v1524
        %v1526 = vpop.f32.mrf.mxu0
        %v1527 = vadd.f32 %v1508, %v1526
        %1528 = vdwg.mxu0
        %1529 = vmatpush.bf16.msra.mxu0 %v1226
        %1530 = vmatpush.bf16.msra.mxu0 %v1224
        %1531 = vmatpush.bf16.msra.mxu0 %v1222
        %1532 = vmatpush.bf16.msra.mxu0 %v1220
        %1533 = vmatpush.bf16.msra.mxu0 %v1218
        %1534 = vmatpush.bf16.msra.mxu0 %v1216
        %1535 = vmatpush.bf16.msra.mxu0 %v1214
        %1536 = vmatpush.bf16.msra.mxu0 %v1212
        %1537 = vmatmul.bf16.gmra.mxu0 %v839
        %v1538 = vpop.f32.mrf.mxu0
        %v1539 = vadd.f32 %v1520, %v1538
        %v1540 = vpop.f32.mrf.mxu0
        %v1541 = vadd.f32 %v1522, %v1540
        %1542 = vmatmul.bf16.gmra.mxu0 %v845
        %v1543 = vpop.f32.mrf.mxu0
        %v1544 = vadd.f32 %v1525, %v1543
        %v1545 = vpop.f32.mrf.mxu0
        %v1546 = vadd.f32 %v1527, %v1545
        %1547 = vdwg.mxu0
        %1548 = vmatpush.bf16.msra.mxu0 %v1242
        %1549 = vmatpush.bf16.msra.mxu0 %v1240
        %1550 = vmatpush.bf16.msra.mxu0 %v1238
        %1551 = vmatpush.bf16.msra.mxu0 %v1236
        %1552 = vmatpush.bf16.msra.mxu0 %v1234
        %1553 = vmatpush.bf16.msra.mxu0 %v1232
        %1554 = vmatpush.bf16.msra.mxu0 %v1230
        %1555 = vmatpush.bf16.msra.mxu0 %v1228
        %1556 = vmatmul.bf16.gmra.mxu0 %v840
        %v1557 = vpop.f32.mrf.mxu0
        %v1558 = vadd.f32 %v1539, %v1557
        %v1559 = vpop.f32.mrf.mxu0
        %v1560 = vadd.f32 %v1541, %v1559
        %1561 = vmatmul.bf16.gmra.mxu0 %v846
        %v1562 = vpop.f32.mrf.mxu0
        %v1563 = vadd.f32 %v1544, %v1562
        %v1564 = vpop.f32.mrf.mxu0
        %v1565 = vadd.f32 %v1546, %v1564
        %1566 = vdwg.mxu0
        %v1567 = vadd.f32 %v683, %v1444
        %v1568 = vadd.f32 %v684, %v1558
        %v1569 = vadd.f32 %v685, %v1446
        %v1570 = vadd.f32 %v686, %v1560
        %v1571 = vadd.f32 %v687, %v1449
        %v1572 = vadd.f32 %v688, %v1563
        %v1573 = vadd.f32 %v689, %v1451
        %v1574 = vadd.f32 %v690, %v1565
        %1575 = vst [vmem:[#allocation2] sm:$0xff] %v1567
        %1576 = vst [vmem:[#allocation2 + $0x8] sm:$0xff] %v1568
        %1577 = vst [vmem:[#allocation2 + $0x10] sm:$0xff] %v1569
        %1578 = vst [vmem:[#allocation2 + $0x18] sm:$0xff] %v1570
        %1579 = vst [vmem:[#allocation2 + $0x20] sm:$0xff] %v1571
        %1580 = vst [vmem:[#allocation2 + $0x28] sm:$0xff] %v1572
        %1581 = vst [vmem:[#allocation2 + $0x30] sm:$0xff] %v1573
        %1582 = vst [vmem:[#allocation2 + $0x38] sm:$0xff] %v1574
        // Predicated region
        $region75: #{siim_forward.4} parent=65 // pred_check
          %p1583 = pneg %p671
        $region76: #{siim_forward.4} parent=65 // pred_check_branch
          %1585 = sbr.rel (%p1583) target = $region78
        $region77: #{siim_forward.4} parent=65 // pred_region
          %v1586 = vld [vmem:[#allocation2] sm:$0xff]
          %v1587 = vld [vmem:[#allocation2 + $0x8] sm:$0xff]
          %v1588 = vld [vmem:[#allocation2 + $0x10] sm:$0xff]
          %v1589 = vld [vmem:[#allocation2 + $0x18] sm:$0xff]
          %v1590 = vld [vmem:[#allocation2 + $0x20] sm:$0xff]
          %v1591 = vld [vmem:[#allocation2 + $0x28] sm:$0xff]
          %v1592 = vld [vmem:[#allocation2 + $0x30] sm:$0xff]
          %v1593 = vld [vmem:[#allocation2 + $0x38] sm:$0xff]
          %v1594 = vld [vmem:[%s667] sm:$0x3]
          %v1596 = vperm.slane %v1594, 0
          %v1597 = vperm.slane %v1594, 1
          %v1600 = vadd.f32 %v1586, %v1596
          %v1601 = vadd.f32 %v1587, %v1597
          %v1602 = vadd.f32 %v1588, %v1596
          %v1603 = vadd.f32 %v1589, %v1597
          %v1604 = vadd.f32 %v1590, %v1596
          %v1605 = vadd.f32 %v1591, %v1597
          %v1606 = vadd.f32 %v1592, %v1596
          %v1607 = vadd.f32 %v1593, %v1597
          %v1608 = vmax.f32 %v1600, 0.0
          %v1609 = vmax.f32 %v1601, 0.0
          %v1610 = vmax.f32 %v1602, 0.0
          %v1611 = vmax.f32 %v1603, 0.0
          %v1612 = vmax.f32 %v1604, 0.0
          %v1613 = vmax.f32 %v1605, 0.0
          %v1614 = vmax.f32 %v1606, 0.0
          %v1615 = vmax.f32 %v1607, 0.0
          %v1616 = vpack.c.bf16 %v1609, %v1608
          %v1617 = vpack.c.bf16 %v1611, %v1610
          %v1618 = vpack.c.bf16 %v1613, %v1612
          %v1619 = vpack.c.bf16 %v1615, %v1614
          %1620 = vst [vmem:[%s649] sm:$0xff] %v1616
          %1621 = vst [vmem:[%s649 + $0x8] sm:$0xff] %v1617
          %1622 = vst [vmem:[%s649 + $0x10] sm:$0xff] %v1618
          %1623 = vst [vmem:[%s649 + $0x18] sm:$0xff] %v1619
        $region78: #{siim_forward.4} parent=65 // pred_fallthru
          _
        %s1624 = sand.u32 %s125, 1
        %s1625 = sand.u32 %s125, 1
        %s1626 = smul.addr %s1625, 32
        %s1627 = scalar_lea.vmem [#allocation4], %s1626
        // Predicated region
        $region79: #{siim_forward.4} parent=65 // pred_check
          %p1628 = pneg %p135
        $region80: #{siim_forward.4} parent=65 // pred_check_branch
          %1630 = sbr.rel (%p1628) target = $region82
        $region81: #{siim_forward.4} parent=65 // pred_region
          %s1631 = smul.u32 4, %s19
          %s1632 = smul.u32 2, %s20
          %s1633 = smul.addr %s1631, 8
          %s1634 = sadd.s32 %s1632, %s1633
          %s1635 = smul.addr %s1634, 4
          %s1636 = scalar_lea.vmem %s3, %s1635
          // Predicated region
          $region83: #{siim_forward.4} parent=81 // pred_check
            _
          $region84: #{siim_forward.4} parent=81 // pred_check_branch
            %1638 = sbr.rel (0) target = $region86
          $region85: #{siim_forward.4} parent=81 // pred_region
            // Predicated region
            $region87: #{siim_forward.4} parent=85 // pred_check
              _
            $region88: #{siim_forward.4} parent=85 // pred_check_branch
              %1640 = sbr.rel (0) target = $region90
            $region89: #{siim_forward.4} parent=85 // pred_region
              // Predicated region
              $region102: #{siim_forward.4} parent=89 // pred_check
                _
              $region103: #{siim_forward.4} parent=89 // pred_check_branch
                %1662 = sbr.rel (0) target = $region105
              $region104: #{siim_forward.4} parent=89 // pred_region
                loop: start=0, step=1, limit=1
                $region106: #{siim_forward.4} parent=104 // loop_pre_header
                  _
                $region107: #{siim_forward.4} parent=104 // loop_header
                  %s1664 = sphi 0, %s1668
                  %p1665 = scmp.ge.s32.totalorder %s1664, 1
                  %s1669 = sphi %s1627, %s1627
                  %s1670 = sphi %s1636, %s1636
                $region108: #{siim_forward.4} parent=104 // loop_header_branch
                  %1667 = sbr.rel (%p1665) target = $region112
                $region109: #{siim_forward.4} parent=104 // loop_body
                  %v1671 = vld [vmem:[%s1669] sm:$0xff]
                  %1672 = vst [vmem:[%s1670] sm:$0xff] %v1671
                  %v1673 = vld [vmem:[%s1669 + $0x8] sm:$0xff]
                  %1674 = vst [vmem:[%s1670 + $0x20] sm:$0xff] %v1673
                  %v1675 = vld [vmem:[%s1669 + $0x10] sm:$0xff]
                  %1676 = vst [vmem:[%s1670 + $0x40] sm:$0xff] %v1675
                  %v1677 = vld [vmem:[%s1669 + $0x18] sm:$0xff]
                  %1678 = vst [vmem:[%s1670 + $0x60] sm:$0xff] %v1677
                $region110: #{siim_forward.4} parent=104 // loop_footer
                  %s1668 = sadd.s32 1, %s1664
                $region111: #{siim_forward.4} parent=104 // loop_footer_branch
                  %1663 = sbr.rel target = $region107
                $region112: #{siim_forward.4} parent=104 // loop_exit
                  _
              $region105: #{siim_forward.4} parent=89 // pred_fallthru
                _
              // Predicated region
              $region113: #{siim_forward.4} parent=89 // pred_check
                _
              $region114: #{siim_forward.4} parent=89 // pred_check_branch
                %1680 = sbr.rel target = $region116
              $region115: #{siim_forward.4} parent=89 // pred_region
                _
              $region116: #{siim_forward.4} parent=89 // pred_fallthru
                _
            $region90: #{siim_forward.4} parent=85 // pred_fallthru
              _
            // Predicated region
            $region91: #{siim_forward.4} parent=85 // pred_check
              _
            $region92: #{siim_forward.4} parent=85 // pred_check_branch
              %1642 = sbr.rel target = $region94
            $region93: #{siim_forward.4} parent=85 // pred_region
              %s1644 = ssub.s32 256, 1
              loop: start=0, step=1, limit=1
              $region95: #{siim_forward.4} parent=93 // loop_pre_header
                _
              $region96: #{siim_forward.4} parent=93 // loop_header
                %s1646 = sphi 0, %s1650
                %p1647 = scmp.ge.s32.totalorder %s1646, 1
                %s1651 = sphi %s1627, %s1627
                %s1652 = sphi %s1636, %s1636
              $region97: #{siim_forward.4} parent=93 // loop_header_branch
                %1649 = sbr.rel (%p1647) target = $region101
              $region98: #{siim_forward.4} parent=93 // loop_body
                %v1653 = vld [vmem:[%s1651] sm:%s1644]
                %1654 = vst [vmem:[%s1652] sm:%s1644] %v1653
                %v1655 = vld [vmem:[%s1651 + $0x8] sm:%s1644]
                %1656 = vst [vmem:[%s1652 + $0x20] sm:%s1644] %v1655
                %v1657 = vld [vmem:[%s1651 + $0x10] sm:%s1644]
                %1658 = vst [vmem:[%s1652 + $0x40] sm:%s1644] %v1657
                %v1659 = vld [vmem:[%s1651 + $0x18] sm:%s1644]
                %1660 = vst [vmem:[%s1652 + $0x60] sm:%s1644] %v1659
              $region99: #{siim_forward.4} parent=93 // loop_footer
                %s1650 = sadd.s32 1, %s1646
              $region100: #{siim_forward.4} parent=93 // loop_footer_branch
                %1645 = sbr.rel target = $region96
              $region101: #{siim_forward.4} parent=93 // loop_exit
                _
            $region94: #{siim_forward.4} parent=85 // pred_fallthru
              _
          $region86: #{siim_forward.4} parent=81 // pred_fallthru
            _
          %1681 = vnop
        $region82: #{siim_forward.4} parent=65 // pred_fallthru
          _
      $region66: #{siim_forward.4} parent=5 // pred_fallthru
        _
      %p1682 = scmp.le.s32.totalorder 2, %s9
      // Predicated region
      $region117: #{siim_forward.4} parent=5 // pred_check
        %p1683 = pneg %p1682
      $region118: #{siim_forward.4} parent=5 // pred_check_branch
        %1685 = sbr.rel (%p1683) target = $region120
      $region119: #{siim_forward.4} parent=5 // pred_region
        %s1686 = ssub.s32 %s9, 2
        // Predicated region
        $region121: #{siim_forward.4} parent=119 // pred_check
          %p1687 = pneg %p141
        $region122: #{siim_forward.4} parent=119 // pred_check_branch
          %1689 = sbr.rel (%p1687) target = $region124
        $region123: #{siim_forward.4} parent=119 // pred_region
          %s1690 = sand.u32 %s126, 1
          %s1691 = sand.u32 %s126, 1
          %s1692 = smul.addr %s1691, 32
          %s1693 = scalar_lea.vmem [#allocation4], %s1692
        $region124: #{siim_forward.4} parent=119 // pred_fallthru
          _
      $region120: #{siim_forward.4} parent=5 // pred_fallthru
        _
    $region6: #{siim_forward.4} parent=1 // loop_footer
      %s13 = sadd.s32 1, %s9
    $region7: #{siim_forward.4} parent=1 // loop_footer_branch
      %8 = sbr.rel target = $region3
    $region8: #{siim_forward.4} parent=1 // loop_exit
      _

// kernel: siim_forward.6
$region0: #{siim_forward.6}
  #allocation0 [shape = 'u32[]', space=smem, size = 0x4, offset = 0x4, fixed_abs, tag = 'smem constant byte address 0x4 - core index']
  #allocation1 [shape = 'u32[72,128]{1,0:T(1,128)}', space=vmem, size = 0x9000, scoped, tag = 'internal scratch']
  #allocation2 [shape = 'f32[2,1024]{1,0:T(2,128)}', space=vmem, size = 0x2000, scoped, tag = 'scratch operand']
  %s0 = inlined_call_operand.vmem [shape: bf16[2,16,1024], index: 0, kind: input, shape index: {}]
  %s1 = inlined_call_operand.vmem [shape: f32[1024,128], index: 1, kind: input, shape index: {}]
  %s2 = inlined_call_operand.vmem [shape: f32[1,128], index: 2, kind: input, shape index: {}]
  %s3 = inlined_call_operand.hbm [shape: f32[2,128], index: 3, kind: output, shape index: {}]
  %s4 = sld [smem:[#allocation0]]
  $region30: #{siim_forward.6} parent=0
    _
  %s6 = ssub.s32 1, %s4
  %s7 = scalar_select 0, %s6, %s4
  $region1: #{siim_forward.6} parent=0
    #allocation3 [shape = 'u8[1024]{0}', space=vmem, size = 0x400, scoped, tag = 'output window, operand 0, single buffered']
    #allocation4 [shape = 's32[1]{0}', space=sflag, size = 0x4, scoped, tag = 'scoped memory for siim_forward.6']
    %8 = vsyncpa [#allocation4], 0
    // Predicated region
    $region2: #{siim_forward.6} parent=1 // pred_check
      _
    $region3: #{siim_forward.6} parent=1 // pred_check_branch
      %10 = sbr.rel (0) target = $region5
    $region4: #{siim_forward.6} parent=1 // pred_region
      _
    $region5: #{siim_forward.6} parent=1 // pred_fallthru
      _
    // Predicated region
    $region6: #{siim_forward.6} parent=1 // pred_check
      _
    $region7: #{siim_forward.6} parent=1 // pred_check_branch
      %12 = sbr.rel (0) target = $region9
    $region8: #{siim_forward.6} parent=1 // pred_region
      _
    $region9: #{siim_forward.6} parent=1 // pred_fallthru
      _
    // Predicated region
    $region10: #{siim_forward.6} parent=1 // pred_check
      _
    $region11: #{siim_forward.6} parent=1 // pred_check_branch
      %14 = sbr.rel (0) target = $region13
    $region12: #{siim_forward.6} parent=1 // pred_region
      _
    $region13: #{siim_forward.6} parent=1 // pred_fallthru
      _
    %p15 = scmp.eq.s32.totalorder 0, 0
    // Predicated region
    $region14: #{siim_forward.6} parent=1 // pred_check
      %p16 = pneg %p15
    $region15: #{siim_forward.6} parent=1 // pred_check_branch
      %18 = sbr.rel (%p16) target = $region17
    $region16: #{siim_forward.6} parent=1 // pred_region
      %19 = vst [vmem:[#allocation2] sm:$0xff] 0.0
      %20 = vst [vmem:[#allocation2 + $0x8] sm:$0xff] 0.0
    $region17: #{siim_forward.6} parent=1 // pred_fallthru
      _
    %v21 = vld [vmem:[#allocation2] sm:$0xff]
    %v22 = vld [vmem:[#allocation2 + $0x8] sm:$0xff]
    %v23 = vld [vmem:[%s0] sm:$0xff]
    %v24 = vld [vmem:[%s0 + $0x8] sm:$0xff]
    %v25 = vld [vmem:[%s0 + $0x10] sm:$0xff]
    %v26 = vld [vmem:[%s0 + $0x18] sm:$0xff]
    %v27 = vld [vmem:[%s0 + $0x20] sm:$0xff]
    %v28 = vld [vmem:[%s0 + $0x28] sm:$0xff]
    %v29 = vld [vmem:[%s0 + $0x30] sm:$0xff]
    %v30 = vld [vmem:[%s0 + $0x38] sm:$0xff]
    %v31 = vld [vmem:[%s0 + $0x40] sm:$0xff]
    %v32 = vld [vmem:[%s0 + $0x48] sm:$0xff]
    %v33 = vld [vmem:[%s0 + $0x50] sm:$0xff]
    %v34 = vld [vmem:[%s0 + $0x58] sm:$0xff]
    %v35 = vld [vmem:[%s0 + $0x60] sm:$0xff]
    %v36 = vld [vmem:[%s0 + $0x68] sm:$0xff]
    %v37 = vld [vmem:[%s0 + $0x70] sm:$0xff]
    %v38 = vld [vmem:[%s0 + $0x78] sm:$0xff]
    %v39 = vunpack.c.l.bf16 %v23
    %v40 = vunpack.c.h.bf16 %v23
    %v41 = vunpack.c.l.bf16 %v24
    %v42 = vunpack.c.h.bf16 %v24
    %v43 = vunpack.c.l.bf16 %v25
    %v44 = vunpack.c.h.bf16 %v25
    %v45 = vunpack.c.l.bf16 %v26
    %v46 = vunpack.c.h.bf16 %v26
    %v47 = vunpack.c.l.bf16 %v27
    %v48 = vunpack.c.h.bf16 %v27
    %v49 = vunpack.c.l.bf16 %v28
    %v50 = vunpack.c.h.bf16 %v28
    %v51 = vunpack.c.l.bf16 %v29
    %v52 = vunpack.c.h.bf16 %v29
    %v53 = vunpack.c.l.bf16 %v30
    %v54 = vunpack.c.h.bf16 %v30
    %v55 = vunpack.c.l.bf16 %v31
    %v56 = vunpack.c.h.bf16 %v31
    %v57 = vunpack.c.l.bf16 %v32
    %v58 = vunpack.c.h.bf16 %v32
    %v59 = vunpack.c.l.bf16 %v33
    %v60 = vunpack.c.h.bf16 %v33
    %v61 = vunpack.c.l.bf16 %v34
    %v62 = vunpack.c.h.bf16 %v34
    %v63 = vunpack.c.l.bf16 %v35
    %v64 = vunpack.c.h.bf16 %v35
    %v65 = vunpack.c.l.bf16 %v36
    %v66 = vunpack.c.h.bf16 %v36
    %v67 = vunpack.c.l.bf16 %v37
    %v68 = vunpack.c.h.bf16 %v37
    %v69 = vunpack.c.l.bf16 %v38
    %v70 = vunpack.c.h.bf16 %v38
    %v71 = vadd.f32 %v39, %v47
    %v72 = vrot.slane %v71, 4
    %v73 = vadd.f32 %v71, %v72
    %v74 = vrot.slane %v73, 2
    %v75 = vadd.f32 %v73, %v74
    %v76 = vrot.slane %v75, 1
    %v77 = vadd.f32 %v75, %v76
    %v78 = vadd.f32 %v40, %v48
    %v79 = vrot.slane %v78, 4
    %v80 = vadd.f32 %v78, %v79
    %v81 = vrot.slane %v80, 2
    %v82 = vadd.f32 %v80, %v81
    %v83 = vrot.slane %v82, 1
    %v84 = vadd.f32 %v82, %v83
    %v85 = vadd.f32 %v41, %v49
    %v86 = vrot.slane %v85, 4
    %v87 = vadd.f32 %v85, %v86
    %v88 = vrot.slane %v87, 2
    %v89 = vadd.f32 %v87, %v88
    %v90 = vrot.slane %v89, 1
    %v91 = vadd.f32 %v89, %v90
    %v92 = vadd.f32 %v42, %v50
    %v93 = vrot.slane %v92, 4
    %v94 = vadd.f32 %v92, %v93
    %v95 = vrot.slane %v94, 2
    %v96 = vadd.f32 %v94, %v95
    %v97 = vrot.slane %v96, 1
    %v98 = vadd.f32 %v96, %v97
    %v99 = vadd.f32 %v43, %v51
    %v100 = vrot.slane %v99, 4
    %v101 = vadd.f32 %v99, %v100
    %v102 = vrot.slane %v101, 2
    %v103 = vadd.f32 %v101, %v102
    %v104 = vrot.slane %v103, 1
    %v105 = vadd.f32 %v103, %v104
    %v106 = vadd.f32 %v44, %v52
    %v107 = vrot.slane %v106, 4
    %v108 = vadd.f32 %v106, %v107
    %v109 = vrot.slane %v108, 2
    %v110 = vadd.f32 %v108, %v109
    %v111 = vrot.slane %v110, 1
    %v112 = vadd.f32 %v110, %v111
    %v113 = vadd.f32 %v45, %v53
    %v114 = vrot.slane %v113, 4
    %v115 = vadd.f32 %v113, %v114
    %v116 = vrot.slane %v115, 2
    %v117 = vadd.f32 %v115, %v116
    %v118 = vrot.slane %v117, 1
    %v119 = vadd.f32 %v117, %v118
    %v120 = vadd.f32 %v46, %v54
    %v121 = vrot.slane %v120, 4
    %v122 = vadd.f32 %v120, %v121
    %v123 = vrot.slane %v122, 2
    %v124 = vadd.f32 %v122, %v123
    %v125 = vrot.slane %v124, 1
    %v126 = vadd.f32 %v124, %v125
    %v127 = vadd.f32 %v55, %v63
    %v128 = vrot.slane %v127, 4
    %v129 = vadd.f32 %v127, %v128
    %v130 = vrot.slane %v129, 2
    %v131 = vadd.f32 %v129, %v130
    %v132 = vrot.slane %v131, 1
    %v133 = vadd.f32 %v131, %v132
    %v134 = vadd.f32 %v56, %v64
    %v135 = vrot.slane %v134, 4
    %v136 = vadd.f32 %v134, %v135
    %v137 = vrot.slane %v136, 2
    %v138 = vadd.f32 %v136, %v137
    %v139 = vrot.slane %v138, 1
    %v140 = vadd.f32 %v138, %v139
    %v141 = vadd.f32 %v57, %v65
    %v142 = vrot.slane %v141, 4
    %v143 = vadd.f32 %v141, %v142
    %v144 = vrot.slane %v143, 2
    %v145 = vadd.f32 %v143, %v144
    %v146 = vrot.slane %v145, 1
    %v147 = vadd.f32 %v145, %v146
    %v148 = vadd.f32 %v58, %v66
    %v149 = vrot.slane %v148, 4
    %v150 = vadd.f32 %v148, %v149
    %v151 = vrot.slane %v150, 2
    %v152 = vadd.f32 %v150, %v151
    %v153 = vrot.slane %v152, 1
    %v154 = vadd.f32 %v152, %v153
    %v155 = vadd.f32 %v59, %v67
    %v156 = vrot.slane %v155, 4
    %v157 = vadd.f32 %v155, %v156
    %v158 = vrot.slane %v157, 2
    %v159 = vadd.f32 %v157, %v158
    %v160 = vrot.slane %v159, 1
    %v161 = vadd.f32 %v159, %v160
    %v162 = vadd.f32 %v60, %v68
    %v163 = vrot.slane %v162, 4
    %v164 = vadd.f32 %v162, %v163
    %v165 = vrot.slane %v164, 2
    %v166 = vadd.f32 %v164, %v165
    %v167 = vrot.slane %v166, 1
    %v168 = vadd.f32 %v166, %v167
    %v169 = vadd.f32 %v61, %v69
    %v170 = vrot.slane %v169, 4
    %v171 = vadd.f32 %v169, %v170
    %v172 = vrot.slane %v171, 2
    %v173 = vadd.f32 %v171, %v172
    %v174 = vrot.slane %v173, 1
    %v175 = vadd.f32 %v173, %v174
    %v176 = vadd.f32 %v62, %v70
    %v177 = vrot.slane %v176, 4
    %v178 = vadd.f32 %v176, %v177
    %v179 = vrot.slane %v178, 2
    %v180 = vadd.f32 %v178, %v179
    %v181 = vrot.slane %v180, 1
    %v182 = vadd.f32 %v180, %v181
    %v199 = vrot.slane %v84, 6
    %v200 = vrot.slane %v91, 4
    %v201 = vrot.slane %v98, 2
    %v202 = vrot.slane %v112, 6
    %v203 = vrot.slane %v119, 4
    %v204 = vrot.slane %v126, 2
    %v205 = vrot.slane %v140, 6
    %v206 = vrot.slane %v147, 4
    %v207 = vrot.slane %v154, 2
    %v208 = vrot.slane %v168, 6
    %v209 = vrot.slane %v175, 4
    %v210 = vrot.slane %v182, 2
    %vm211 = vcmask 1041408
    %v212 = vsel %vm211, %v77, %v199
    %vm213 = vcmask 1045508
    %v214 = vsel %vm213, %v200, %v201
    %vm215 = vcmask 1043456
    %v216 = vsel %vm215, %v212, %v214
    %v217 = vsel %vm211, %v105, %v202
    %v218 = vsel %vm213, %v203, %v204
    %v219 = vsel %vm215, %v217, %v218
    %v220 = vsel %vm211, %v133, %v205
    %v221 = vsel %vm213, %v206, %v207
    %v222 = vsel %vm215, %v220, %v221
    %v223 = vsel %vm211, %v161, %v208
    %v224 = vsel %vm213, %v209, %v210
    %v225 = vsel %vm215, %v223, %v224
    %vm226 = vcmask 1044484
    %v227 = vsel %vm226, %v216, %v216
    %vm228 = vcmask 1046534
    %v229 = vsel %vm228, %v216, %v227
    %v230 = vrot.slane %v222, 7
    %vm231 = vcmask 1041409
    %v232 = vsel %vm231, %v230, %v229
    %vm233 = vcmask 1043459
    %v234 = vsel %vm233, %v230, %v232
    %vm235 = vcmask 1045509
    %v236 = vsel %vm235, %v230, %v234
    %vm237 = vcmask 1047559
    %v238 = vsel %vm237, %v230, %v236
    %v239 = vsel %vm226, %v219, %v219
    %v240 = vsel %vm228, %v219, %v239
    %v241 = vrot.slane %v225, 7
    %v242 = vsel %vm231, %v241, %v240
    %v243 = vsel %vm233, %v241, %v242
    %v244 = vsel %vm235, %v241, %v243
    %v245 = vsel %vm237, %v241, %v244
    %v248 = vadd.f32 %v21, %v238
    %v249 = vadd.f32 %v22, %v245
    %250 = vst [vmem:[#allocation2] sm:$0xff] %v248
    %251 = vst [vmem:[#allocation2 + $0x8] sm:$0xff] %v249
    // Predicated region
    $region18: #{siim_forward.6} parent=1 // pred_check
      %p252 = pneg %p15
    $region19: #{siim_forward.6} parent=1 // pred_check_branch
      %254 = sbr.rel (%p252) target = $region21
    $region20: #{siim_forward.6} parent=1 // pred_region
      %v255 = vld [vmem:[#allocation2] sm:$0xff]
      %v256 = vld [vmem:[#allocation2 + $0x8] sm:$0xff]
      %v257 = vmul.f32 %v255, 0.0625
      %v258 = vmul.f32 %v256, 0.0625
      %v259 = vld [vmem:[%s1] sm:$0xff]
      %v260 = vld [vmem:[%s1 + $0x8] sm:$0xff]
      %v261 = vld [vmem:[%s1 + $0x10] sm:$0xff]
      %v262 = vld [vmem:[%s1 + $0x18] sm:$0xff]
      %v263 = vld [vmem:[%s1 + $0x20] sm:$0xff]
      %v264 = vld [vmem:[%s1 + $0x28] sm:$0xff]
      %v265 = vld [vmem:[%s1 + $0x30] sm:$0xff]
      %v266 = vld [vmem:[%s1 + $0x38] sm:$0xff]
      %v267 = vld [vmem:[%s1 + $0x40] sm:$0xff]
      %v268 = vld [vmem:[%s1 + $0x48] sm:$0xff]
      %v269 = vld [vmem:[%s1 + $0x50] sm:$0xff]
      %v270 = vld [vmem:[%s1 + $0x58] sm:$0xff]
      %v271 = vld [vmem:[%s1 + $0x60] sm:$0xff]
      %v272 = vld [vmem:[%s1 + $0x68] sm:$0xff]
      %v273 = vld [vmem:[%s1 + $0x70] sm:$0xff]
      %v274 = vld [vmem:[%s1 + $0x78] sm:$0xff]
      %v275 = vld [vmem:[%s1 + $0x80] sm:$0xff]
      %v276 = vld [vmem:[%s1 + $0x88] sm:$0xff]
      %v277 = vld [vmem:[%s1 + $0x90] sm:$0xff]
      %v278 = vld [vmem:[%s1 + $0x98] sm:$0xff]
      %v279 = vld [vmem:[%s1 + $0xa0] sm:$0xff]
      %v280 = vld [vmem:[%s1 + $0xa8] sm:$0xff]
      %v281 = vld [vmem:[%s1 + $0xb0] sm:$0xff]
      %v282 = vld [vmem:[%s1 + $0xb8] sm:$0xff]
      %v283 = vld [vmem:[%s1 + $0xc0] sm:$0xff]
      %v284 = vld [vmem:[%s1 + $0xc8] sm:$0xff]
      %v285 = vld [vmem:[%s1 + $0xd0] sm:$0xff]
      %v286 = vld [vmem:[%s1 + $0xd8] sm:$0xff]
      %v287 = vld [vmem:[%s1 + $0xe0] sm:$0xff]
      %v288 = vld [vmem:[%s1 + $0xe8] sm:$0xff]
      %v289 = vld [vmem:[%s1 + $0xf0] sm:$0xff]
      %v290 = vld [vmem:[%s1 + $0xf8] sm:$0xff]
      %v291 = vld [vmem:[%s1 + $0x100] sm:$0xff]
      %v292 = vld [vmem:[%s1 + $0x108] sm:$0xff]
      %v293 = vld [vmem:[%s1 + $0x110] sm:$0xff]
      %v294 = vld [vmem:[%s1 + $0x118] sm:$0xff]
      %v295 = vld [vmem:[%s1 + $0x120] sm:$0xff]
      %v296 = vld [vmem:[%s1 + $0x128] sm:$0xff]
      %v297 = vld [vmem:[%s1 + $0x130] sm:$0xff]
      %v298 = vld [vmem:[%s1 + $0x138] sm:$0xff]
      %v299 = vld [vmem:[%s1 + $0x140] sm:$0xff]
      %v300 = vld [vmem:[%s1 + $0x148] sm:$0xff]
      %v301 = vld [vmem:[%s1 + $0x150] sm:$0xff]
      %v302 = vld [vmem:[%s1 + $0x158] sm:$0xff]
      %v303 = vld [vmem:[%s1 + $0x160] sm:$0xff]
      %v304 = vld [vmem:[%s1 + $0x168] sm:$0xff]
      %v305 = vld [vmem:[%s1 + $0x170] sm:$0xff]
      %v306 = vld [vmem:[%s1 + $0x178] sm:$0xff]
      %v307 = vld [vmem:[%s1 + $0x180] sm:$0xff]
      %v308 = vld [vmem:[%s1 + $0x188] sm:$0xff]
      %v309 = vld [vmem:[%s1 + $0x190] sm:$0xff]
      %v310 = vld [vmem:[%s1 + $0x198] sm:$0xff]
      %v311 = vld [vmem:[%s1 + $0x1a0] sm:$0xff]
      %v312 = vld [vmem:[%s1 + $0x1a8] sm:$0xff]
      %v313 = vld [vmem:[%s1 + $0x1b0] sm:$0xff]
      %v314 = vld [vmem:[%s1 + $0x1b8] sm:$0xff]
      %v315 = vld [vmem:[%s1 + $0x1c0] sm:$0xff]
      %v316 = vld [vmem:[%s1 + $0x1c8] sm:$0xff]
      %v317 = vld [vmem:[%s1 + $0x1d0] sm:$0xff]
      %v318 = vld [vmem:[%s1 + $0x1d8] sm:$0xff]
      %v319 = vld [vmem:[%s1 + $0x1e0] sm:$0xff]
      %v320 = vld [vmem:[%s1 + $0x1e8] sm:$0xff]
      %v321 = vld [vmem:[%s1 + $0x1f0] sm:$0xff]
      %v322 = vld [vmem:[%s1 + $0x1f8] sm:$0xff]
      %v323 = vld [vmem:[%s1 + $0x200] sm:$0xff]
      %v324 = vld [vmem:[%s1 + $0x208] sm:$0xff]
      %v325 = vld [vmem:[%s1 + $0x210] sm:$0xff]
      %v326 = vld [vmem:[%s1 + $0x218] sm:$0xff]
      %v327 = vld [vmem:[%s1 + $0x220] sm:$0xff]
      %v328 = vld [vmem:[%s1 + $0x228] sm:$0xff]
      %v329 = vld [vmem:[%s1 + $0x230] sm:$0xff]
      %v330 = vld [vmem:[%s1 + $0x238] sm:$0xff]
      %v331 = vld [vmem:[%s1 + $0x240] sm:$0xff]
      %v332 = vld [vmem:[%s1 + $0x248] sm:$0xff]
      %v333 = vld [vmem:[%s1 + $0x250] sm:$0xff]
      %v334 = vld [vmem:[%s1 + $0x258] sm:$0xff]
      %v335 = vld [vmem:[%s1 + $0x260] sm:$0xff]
      %v336 = vld [vmem:[%s1 + $0x268] sm:$0xff]
      %v337 = vld [vmem:[%s1 + $0x270] sm:$0xff]
      %v338 = vld [vmem:[%s1 + $0x278] sm:$0xff]
      %v339 = vld [vmem:[%s1 + $0x280] sm:$0xff]
      %v340 = vld [vmem:[%s1 + $0x288] sm:$0xff]
      %v341 = vld [vmem:[%s1 + $0x290] sm:$0xff]
      %v342 = vld [vmem:[%s1 + $0x298] sm:$0xff]
      %v343 = vld [vmem:[%s1 + $0x2a0] sm:$0xff]
      %v344 = vld [vmem:[%s1 + $0x2a8] sm:$0xff]
      %v345 = vld [vmem:[%s1 + $0x2b0] sm:$0xff]
      %v346 = vld [vmem:[%s1 + $0x2b8] sm:$0xff]
      %v347 = vld [vmem:[%s1 + $0x2c0] sm:$0xff]
      %v348 = vld [vmem:[%s1 + $0x2c8] sm:$0xff]
      %v349 = vld [vmem:[%s1 + $0x2d0] sm:$0xff]
      %v350 = vld [vmem:[%s1 + $0x2d8] sm:$0xff]
      %v351 = vld [vmem:[%s1 + $0x2e0] sm:$0xff]
      %v352 = vld [vmem:[%s1 + $0x2e8] sm:$0xff]
      %v353 = vld [vmem:[%s1 + $0x2f0] sm:$0xff]
      %v354 = vld [vmem:[%s1 + $0x2f8] sm:$0xff]
      %v355 = vld [vmem:[%s1 + $0x300] sm:$0xff]
      %v356 = vld [vmem:[%s1 + $0x308] sm:$0xff]
      %v357 = vld [vmem:[%s1 + $0x310] sm:$0xff]
      %v358 = vld [vmem:[%s1 + $0x318] sm:$0xff]
      %v359 = vld [vmem:[%s1 + $0x320] sm:$0xff]
      %v360 = vld [vmem:[%s1 + $0x328] sm:$0xff]
      %v361 = vld [vmem:[%s1 + $0x330] sm:$0xff]
      %v362 = vld [vmem:[%s1 + $0x338] sm:$0xff]
      %v363 = vld [vmem:[%s1 + $0x340] sm:$0xff]
      %v364 = vld [vmem:[%s1 + $0x348] sm:$0xff]
      %v365 = vld [vmem:[%s1 + $0x350] sm:$0xff]
      %v366 = vld [vmem:[%s1 + $0x358] sm:$0xff]
      %v367 = vld [vmem:[%s1 + $0x360] sm:$0xff]
      %v368 = vld [vmem:[%s1 + $0x368] sm:$0xff]
      %v369 = vld [vmem:[%s1 + $0x370] sm:$0xff]
      %v370 = vld [vmem:[%s1 + $0x378] sm:$0xff]
      %v371 = vld [vmem:[%s1 + $0x380] sm:$0xff]
      %v372 = vld [vmem:[%s1 + $0x388] sm:$0xff]
      %v373 = vld [vmem:[%s1 + $0x390] sm:$0xff]
      %v374 = vld [vmem:[%s1 + $0x398] sm:$0xff]
      %v375 = vld [vmem:[%s1 + $0x3a0] sm:$0xff]
      %v376 = vld [vmem:[%s1 + $0x3a8] sm:$0xff]
      %v377 = vld [vmem:[%s1 + $0x3b0] sm:$0xff]
      %v378 = vld [vmem:[%s1 + $0x3b8] sm:$0xff]
      %v379 = vld [vmem:[%s1 + $0x3c0] sm:$0xff]
      %v380 = vld [vmem:[%s1 + $0x3c8] sm:$0xff]
      %v381 = vld [vmem:[%s1 + $0x3d0] sm:$0xff]
      %v382 = vld [vmem:[%s1 + $0x3d8] sm:$0xff]
      %v383 = vld [vmem:[%s1 + $0x3e0] sm:$0xff]
      %v384 = vld [vmem:[%s1 + $0x3e8] sm:$0xff]
      %v385 = vld [vmem:[%s1 + $0x3f0] sm:$0xff]
      %v386 = vld [vmem:[%s1 + $0x3f8] sm:$0xff]
      %v387 = vld [vmem:[%s2] sm:$0x1]
      %v389 = vperm.slane %v387, 0
      %393 = vst [vmem:[#allocation1] ss:$4 sm:$0xff] %v257
      %s394 = scalar_lea.vmem [#allocation1], 32
      %395 = vst [vmem:[%s394] ss:$4 sm:$0xff] %v258
      %v396 = vld.sshfl [vmem:[#allocation1] sm:$0xff pattern:$0x73625140]
      %v397 = vld.sshfl [vmem:[#allocation1 + $0x8] sm:$0xff pattern:$0x73625140]
      %v398 = vld.sshfl [vmem:[#allocation1 + $0x10] sm:$0xff pattern:$0x73625140]
      %v399 = vld.sshfl [vmem:[#allocation1 + $0x18] sm:$0xff pattern:$0x73625140]
      %v400 = vld.sshfl [vmem:[#allocation1 + $0x20] sm:$0xff pattern:$0x73625140]
      %v401 = vld.sshfl [vmem:[#allocation1 + $0x28] sm:$0xff pattern:$0x73625140]
      %v402 = vld.sshfl [vmem:[#allocation1 + $0x30] sm:$0xff pattern:$0x73625140]
      %v403 = vld.sshfl [vmem:[#allocation1 + $0x38] sm:$0xff pattern:$0x73625140]
      %412 = vmatpush.msra.mxu0 %v274
      %413 = vmatpush.msra.mxu0 %v273
      %414 = vmatpush.msra.mxu0 %v272
      %415 = vmatpush.msra.mxu0 %v271
      %416 = vmatpush.msra.mxu0 %v270
      %417 = vmatpush.msra.mxu0 %v269
      %418 = vmatpush.msra.mxu0 %v268
      %419 = vmatpush.msra.mxu0 %v267
      %420 = vmatpush.msra.mxu0 %v266
      %421 = vmatpush.msra.mxu0 %v265
      %422 = vmatpush.msra.mxu0 %v264
      %423 = vmatpush.msra.mxu0 %v263
      %424 = vmatpush.msra.mxu0 %v262
      %425 = vmatpush.msra.mxu0 %v261
      %426 = vmatpush.msra.mxu0 %v260
      %427 = vmatpush.msra.mxu0 %v259
      %428 = vmatmul.f32.gmra.mxu0 %v396
      %v429 = vpop.f32.mrf.mxu0
      %v430 = vadd.f32 %v389, %v429
      %431 = vdwg.mxu0
      %432 = vmatpush.msra.mxu0 %v290
      %433 = vmatpush.msra.mxu0 %v289
      %434 = vmatpush.msra.mxu0 %v288
      %435 = vmatpush.msra.mxu0 %v287
      %436 = vmatpush.msra.mxu0 %v286
      %437 = vmatpush.msra.mxu0 %v285
      %438 = vmatpush.msra.mxu0 %v284
      %439 = vmatpush.msra.mxu0 %v283
      %440 = vmatpush.msra.mxu0 %v282
      %441 = vmatpush.msra.mxu0 %v281
      %442 = vmatpush.msra.mxu0 %v280
      %443 = vmatpush.msra.mxu0 %v279
      %444 = vmatpush.msra.mxu0 %v278
      %445 = vmatpush.msra.mxu0 %v277
      %446 = vmatpush.msra.mxu0 %v276
      %447 = vmatpush.msra.mxu0 %v275
      %448 = vmatmul.f32.gmra.mxu0 %v397
      %v449 = vpop.f32.mrf.mxu0
      %v450 = vadd.f32 %v430, %v449
      %451 = vdwg.mxu0
      %452 = vmatpush.msra.mxu0 %v306
      %453 = vmatpush.msra.mxu0 %v305
      %454 = vmatpush.msra.mxu0 %v304
      %455 = vmatpush.msra.mxu0 %v303
      %456 = vmatpush.msra.mxu0 %v302
      %457 = vmatpush.msra.mxu0 %v301
      %458 = vmatpush.msra.mxu0 %v300
      %459 = vmatpush.msra.mxu0 %v299
      %460 = vmatpush.msra.mxu0 %v298
      %461 = vmatpush.msra.mxu0 %v297
      %462 = vmatpush.msra.mxu0 %v296
      %463 = vmatpush.msra.mxu0 %v295
      %464 = vmatpush.msra.mxu0 %v294
      %465 = vmatpush.msra.mxu0 %v293
      %466 = vmatpush.msra.mxu0 %v292
      %467 = vmatpush.msra.mxu0 %v291
      %468 = vmatmul.f32.gmra.mxu0 %v398
      %v469 = vpop.f32.mrf.mxu0
      %v470 = vadd.f32 %v450, %v469
      %471 = vdwg.mxu0
      %472 = vmatpush.msra.mxu0 %v322
      %473 = vmatpush.msra.mxu0 %v321
      %474 = vmatpush.msra.mxu0 %v320
      %475 = vmatpush.msra.mxu0 %v319
      %476 = vmatpush.msra.mxu0 %v318
      %477 = vmatpush.msra.mxu0 %v317
      %478 = vmatpush.msra.mxu0 %v316
      %479 = vmatpush.msra.mxu0 %v315
      %480 = vmatpush.msra.mxu0 %v314
      %481 = vmatpush.msra.mxu0 %v313
      %482 = vmatpush.msra.mxu0 %v312
      %483 = vmatpush.msra.mxu0 %v311
      %484 = vmatpush.msra.mxu0 %v310
      %485 = vmatpush.msra.mxu0 %v309
      %486 = vmatpush.msra.mxu0 %v308
      %487 = vmatpush.msra.mxu0 %v307
      %488 = vmatmul.f32.gmra.mxu0 %v399
      %v489 = vpop.f32.mrf.mxu0
      %v490 = vadd.f32 %v470, %v489
      %491 = vdwg.mxu0
      %492 = vmatpush.msra.mxu0 %v338
      %493 = vmatpush.msra.mxu0 %v337
      %494 = vmatpush.msra.mxu0 %v336
      %495 = vmatpush.msra.mxu0 %v335
      %496 = vmatpush.msra.mxu0 %v334
      %497 = vmatpush.msra.mxu0 %v333
      %498 = vmatpush.msra.mxu0 %v332
      %499 = vmatpush.msra.mxu0 %v331
      %500 = vmatpush.msra.mxu0 %v330
      %501 = vmatpush.msra.mxu0 %v329
      %502 = vmatpush.msra.mxu0 %v328
      %503 = vmatpush.msra.mxu0 %v327
      %504 = vmatpush.msra.mxu0 %v326
      %505 = vmatpush.msra.mxu0 %v325
      %506 = vmatpush.msra.mxu0 %v324
      %507 = vmatpush.msra.mxu0 %v323
      %508 = vmatmul.f32.gmra.mxu0 %v400
      %v509 = vpop.f32.mrf.mxu0
      %v510 = vadd.f32 %v490, %v509
      %511 = vdwg.mxu0
      %512 = vmatpush.msra.mxu0 %v354
      %513 = vmatpush.msra.mxu0 %v353
      %514 = vmatpush.msra.mxu0 %v352
      %515 = vmatpush.msra.mxu0 %v351
      %516 = vmatpush.msra.mxu0 %v350
      %517 = vmatpush.msra.mxu0 %v349
      %518 = vmatpush.msra.mxu0 %v348
      %519 = vmatpush.msra.mxu0 %v347
      %520 = vmatpush.msra.mxu0 %v346
      %521 = vmatpush.msra.mxu0 %v345
      %522 = vmatpush.msra.mxu0 %v344
      %523 = vmatpush.msra.mxu0 %v343
      %524 = vmatpush.msra.mxu0 %v342
      %525 = vmatpush.msra.mxu0 %v341
      %526 = vmatpush.msra.mxu0 %v340
      %527 = vmatpush.msra.mxu0 %v339
      %528 = vmatmul.f32.gmra.mxu0 %v401
      %v529 = vpop.f32.mrf.mxu0
      %v530 = vadd.f32 %v510, %v529
      %531 = vdwg.mxu0
      %532 = vmatpush.msra.mxu0 %v370
      %533 = vmatpush.msra.mxu0 %v369
      %534 = vmatpush.msra.mxu0 %v368
      %535 = vmatpush.msra.mxu0 %v367
      %536 = vmatpush.msra.mxu0 %v366
      %537 = vmatpush.msra.mxu0 %v365
      %538 = vmatpush.msra.mxu0 %v364
      %539 = vmatpush.msra.mxu0 %v363
      %540 = vmatpush.msra.mxu0 %v362
      %541 = vmatpush.msra.mxu0 %v361
      %542 = vmatpush.msra.mxu0 %v360
      %543 = vmatpush.msra.mxu0 %v359
      %544 = vmatpush.msra.mxu0 %v358
      %545 = vmatpush.msra.mxu0 %v357
      %546 = vmatpush.msra.mxu0 %v356
      %547 = vmatpush.msra.mxu0 %v355
      %548 = vmatmul.f32.gmra.mxu0 %v402
      %v549 = vpop.f32.mrf.mxu0
      %v550 = vadd.f32 %v530, %v549
      %551 = vdwg.mxu0
      %552 = vmatpush.msra.mxu0 %v386
      %553 = vmatpush.msra.mxu0 %v385
      %554 = vmatpush.msra.mxu0 %v384
      %555 = vmatpush.msra.mxu0 %v383
      %556 = vmatpush.msra.mxu0 %v382
      %557 = vmatpush.msra.mxu0 %v381
      %558 = vmatpush.msra.mxu0 %v380
      %559 = vmatpush.msra.mxu0 %v379
      %560 = vmatpush.msra.mxu0 %v378
      %561 = vmatpush.msra.mxu0 %v377
      %562 = vmatpush.msra.mxu0 %v376
      %563 = vmatpush.msra.mxu0 %v375
      %564 = vmatpush.msra.mxu0 %v374
      %565 = vmatpush.msra.mxu0 %v373
      %566 = vmatpush.msra.mxu0 %v372
      %567 = vmatpush.msra.mxu0 %v371
      %568 = vmatmul.f32.gmra.mxu0 %v403
      %v569 = vpop.f32.mrf.mxu0
      %v570 = vadd.f32 %v550, %v569
      %571 = vdwg.mxu0
      %572 = vst [vmem:[#allocation3] sm:$0x3] %v570
    $region21: #{siim_forward.6} parent=1 // pred_fallthru
      _
    // Predicated region
    $region22: #{siim_forward.6} parent=1 // pred_check
      _
    $region23: #{siim_forward.6} parent=1 // pred_check_branch
      %574 = sbr.rel (0) target = $region25
    $region24: #{siim_forward.6} parent=1 // pred_region
      %576 = vsyncadd [#allocation4], 0
      %s578 = sshll.u32 [#allocation3], 4
      %s579 = int_to_ptr.vmem [resolvable:$true] %s578
      %s580 = sshll.u32 %s3, 4
      %s581 = int_to_ptr.hbm [resolvable:$true] %s580
      %583 = dma.vmem_to_hbm [thread:$0]  %s579, 32, %s581, [#allocation4]
    $region25: #{siim_forward.6} parent=1 // pred_fallthru
      _
    // Predicated region
    $region26: #{siim_forward.6} parent=1 // pred_check
      _
    $region27: #{siim_forward.6} parent=1 // pred_check_branch
      %585 = sbr.rel (0) target = $region29
    $region28: #{siim_forward.6} parent=1 // pred_region
      %587 = dma.done [#allocation4], 32
    $region29: #{siim_forward.6} parent=1 // pred_fallthru
      _
    %588 = vsyncpa [#allocation4], 1

// kernel: siim_forward.5
$region0: #{siim_forward.5}
  #allocation0 [shape = 'u32[]', space=smem, size = 0x4, offset = 0x4, fixed_abs, tag = 'smem constant byte address 0x4 - core index']
  #allocation1 [shape = 'u32[72,128]{1,0:T(1,128)}', space=vmem, size = 0x9000, scoped, tag = 'internal scratch']
  #allocation2 [shape = 'f32[8,256]{1,0:T(8,128)}', space=vmem, size = 0x2000, scoped, tag = 'scratch operand']
  %s0 = inlined_call_operand.vmem [shape: bf16[8,4096], index: 0, kind: input, shape index: {}]
  %s1 = inlined_call_operand.hbm [shape: bf16[4096,2048], index: 1, kind: input, shape index: {}]
  %s2 = inlined_call_operand.vmem [shape: f32[1,2048], index: 2, kind: input, shape index: {}]
  %s3 = inlined_call_operand.vmem [shape: bf16[8,2048], index: 3, kind: output, shape index: {}]
  %s4 = sld [smem:[#allocation0]]
  $region57: #{siim_forward.5} parent=0
    _
  %s6 = ssub.s32 1, %s4
  %s7 = scalar_select 0, %s6, %s4
  $region1: #{siim_forward.5} parent=0
    #allocation3 [shape = 'u8[1048576]{0}', space=vmem, size = 0x100000, scoped, tag = 'input window, operand 1']
    #allocation4 [shape = 's32[2]{0}', space=sflag, size = 0x8, scoped, tag = 'scoped memory for siim_forward.5']
    %8 = vsyncpa [#allocation4], 0
    %s9 = scalar_lea.sflag [#allocation4], 1
    %10 = vsyncpa %s9, 0
    loop: start=0, step=1, limit=34
    $region2: #{siim_forward.5} parent=1 // loop_pre_header
      _
    $region3: #{siim_forward.5} parent=1 // loop_header
      %s12 = sphi 0, %s16
      %p13 = scmp.ge.s32.totalorder %s12, 34
      %s19 = sphi 0, %s38
      %s20 = sphi 0, %s34
      %s21 = sphi 0, %s30
      %s22 = sphi 0, %s19
      %s23 = sphi 0, %s20
      %s24 = sphi 0, %s21
      %s25 = sphi 0, %s22
      %s26 = sphi 0, %s23
      %s27 = sphi 0, %s24
      %s43 = sphi 0, %s45
      %s46 = sphi 0, %s43
      %s47 = sphi 0, %s46
      %s63 = sphi 0, %s47
      %s71 = sphi 0, %s73
      %s74 = sphi 0, %s71
      %s75 = sphi 0, %s74
      %s91 = sphi 0, %s75
      %s97 = sphi 0, %s99
      %s100 = sphi 0, %s97
      %s101 = sphi 0, %s100
      %s117 = sphi 0, %s101
      %s125 = sphi 0, %s127
      %s128 = sphi 0, %s125
      %s129 = sphi 0, %s128
      %s145 = sphi 0, %s129
    $region4: #{siim_forward.5} parent=1 // loop_header_branch
      %15 = sbr.rel (%p13) target = $region8
    $region5: #{siim_forward.5} parent=1 // loop_body
      %s17 = ssub.s32 %s12, 1
      %s18 = ssub.s32 %s12, 2
      %s28 = sadd.s32 1, %s21
      %p29 = scmp.ge.s32.totalorder %s28, 4
      %s30 = scalar_select %p29, 0, %s28
      %s31 = sadd.s32 1, %s20
      %s32 = scalar_select %p29, %s31, %s20
      %p33 = scmp.ge.s32.totalorder %s32, 8
      %s34 = scalar_select %p33, 0, %s32
      %s35 = sadd.s32 1, %s19
      %s36 = scalar_select %p33, %s35, %s19
      %p37 = scmp.ge.s32.totalorder %s36, 1
      %s38 = scalar_select %p37, 0, %s36
      %s39 = ssub.s32 %s19, %s38
      %s40 = ssub.s32 %s21, %s30
      %s41 = sor.u32 %s39, %s40
      %p42 = scmp.eq.s32.totalorder %s41, 0
      %s44 = sadd.s32 %s43, 1
      %s45 = scalar_select %p42, %s43, %s44
      %p48 = pneg %p42
      %p49 = scmp.eq.s32.totalorder %s12, 31
      %p50 = por %p48, %p49
      %p51 = scmp.ne.s32.totalorder %s43, %s46
      %p52 = scmp.eq.s32.totalorder %s12, 0
      %p53 = por %p51, %p52
      %p54 = scmp.ne.s32.totalorder %s43, %s46
      %p55 = scmp.eq.s32.totalorder %s17, 31
      %p56 = por %p54, %p55
      %p57 = scmp.ne.s32.totalorder %s46, %s47
      %p58 = scmp.eq.s32.totalorder %s17, 0
      %p59 = por %p57, %p58
      %p60 = scmp.ne.s32.totalorder %s46, %s47
      %p61 = scmp.eq.s32.totalorder %s18, 31
      %p62 = por %p60, %p61
      %p64 = scmp.ne.s32.totalorder %s47, %s63
      %p65 = scmp.eq.s32.totalorder %s18, 0
      %p66 = por %p64, %p65
      %s67 = ssub.s32 %s21, %s30
      %s68 = ssub.s32 %s20, %s34
      %s69 = sor.u32 %s67, %s68
      %p70 = scmp.eq.s32.totalorder %s69, 0
      %s72 = sadd.s32 %s71, 1
      %s73 = scalar_select %p70, %s71, %s72
      %p76 = pneg %p70
      %p77 = scmp.eq.s32.totalorder %s12, 31
      %p78 = por %p76, %p77
      %p79 = scmp.ne.s32.totalorder %s71, %s74
      %p80 = scmp.eq.s32.totalorder %s12, 0
      %p81 = por %p79, %p80
      %p82 = scmp.ne.s32.totalorder %s71, %s74
      %p83 = scmp.eq.s32.totalorder %s17, 31
      %p84 = por %p82, %p83
      %p85 = scmp.ne.s32.totalorder %s74, %s75
      %p86 = scmp.eq.s32.totalorder %s17, 0
      %p87 = por %p85, %p86
      %p88 = scmp.ne.s32.totalorder %s74, %s75
      %p89 = scmp.eq.s32.totalorder %s18, 31
      %p90 = por %p88, %p89
      %p92 = scmp.ne.s32.totalorder %s75, %s91
      %p93 = scmp.eq.s32.totalorder %s18, 0
      %p94 = por %p92, %p93
      %s95 = ssub.s32 %s20, %s34
      %p96 = scmp.eq.s32.totalorder %s95, 0
      %s98 = sadd.s32 %s97, 1
      %s99 = scalar_select %p96, %s97, %s98
      %p102 = pneg %p96
      %p103 = scmp.eq.s32.totalorder %s12, 31
      %p104 = por %p102, %p103
      %p105 = scmp.ne.s32.totalorder %s97, %s100
      %p106 = scmp.eq.s32.totalorder %s12, 0
      %p107 = por %p105, %p106
      %p108 = scmp.ne.s32.totalorder %s97, %s100
      %p109 = scmp.eq.s32.totalorder %s17, 31
      %p110 = por %p108, %p109
      %p111 = scmp.ne.s32.totalorder %s100, %s101
      %p112 = scmp.eq.s32.totalorder %s17, 0
      %p113 = por %p111, %p112
      %p114 = scmp.ne.s32.totalorder %s100, %s101
      %p115 = scmp.eq.s32.totalorder %s18, 31
      %p116 = por %p114, %p115
      %p118 = scmp.ne.s32.totalorder %s101, %s117
      %p119 = scmp.eq.s32.totalorder %s18, 0
      %p120 = por %p118, %p119
      %s121 = ssub.s32 %s19, %s38
      %s122 = ssub.s32 %s20, %s34
      %s123 = sor.u32 %s121, %s122
      %p124 = scmp.eq.s32.totalorder %s123, 0
      %s126 = sadd.s32 %s125, 1
      %s127 = scalar_select %p124, %s125, %s126
      %p130 = pneg %p124
      %p131 = scmp.eq.s32.totalorder %s12, 31
      %p132 = por %p130, %p131
      %p133 = scmp.ne.s32.totalorder %s125, %s128
      %p134 = scmp.eq.s32.totalorder %s12, 0
      %p135 = por %p133, %p134
      %p136 = scmp.ne.s32.totalorder %s125, %s128
      %p137 = scmp.eq.s32.totalorder %s17, 31
      %p138 = por %p136, %p137
      %p139 = scmp.ne.s32.totalorder %s128, %s129
      %p140 = scmp.eq.s32.totalorder %s17, 0
      %p141 = por %p139, %p140
      %p142 = scmp.ne.s32.totalorder %s128, %s129
      %p143 = scmp.eq.s32.totalorder %s18, 31
      %p144 = por %p142, %p143
      %p146 = scmp.ne.s32.totalorder %s129, %s145
      %p147 = scmp.eq.s32.totalorder %s18, 0
      %p148 = por %p146, %p147
      %p149 = scmp.le.s32.totalorder 1, %s12
      %p150 = scmp.lt.s32.totalorder %s12, 33
      %p151 = pnand %p149, %p150
      %p152 = pneg %p151
      // Predicated region
      $region9: #{siim_forward.5} parent=5 // pred_check
        _
      $region10: #{siim_forward.5} parent=5 // pred_check_branch
        %154 = sbr.rel (%p151) target = $region12
      $region11: #{siim_forward.5} parent=5 // pred_region
        %s155 = ssub.s32 %s12, 1
      $region12: #{siim_forward.5} parent=5 // pred_fallthru
        _
      %p156 = scmp.lt.s32.totalorder %s12, 32
      // Predicated region
      $region13: #{siim_forward.5} parent=5 // pred_check
        %p157 = pneg %p156
      $region14: #{siim_forward.5} parent=5 // pred_check_branch
        %159 = sbr.rel (%p157) target = $region16
      $region15: #{siim_forward.5} parent=5 // pred_region
        // Predicated region
        $region17: #{siim_forward.5} parent=15 // pred_check
          %p160 = pneg %p53
        $region18: #{siim_forward.5} parent=15 // pred_check_branch
          %162 = sbr.rel (%p160) target = $region20
        $region19: #{siim_forward.5} parent=15 // pred_region
          %s163 = smul.u32 8, %s21
          %p164 = scmp.lt.s32.totalorder %s19, 0
          %s165 = scalar_select %p164, %s19, 0
          %p166 = scmp.lt.s32.totalorder %s163, 31
          %s167 = scalar_select %p166, %s163, 31
          %s168 = smul.addr %s165, 32
          %s169 = sadd.s32 %s167, %s168
          %s170 = smul.addr %s169, 4
          %s171 = scalar_lea.vmem %s0, %s170
          %s172 = smul.u32 8, %s21
        $region20: #{siim_forward.5} parent=15 // pred_fallthru
          _
        // Predicated region
        $region21: #{siim_forward.5} parent=15 // pred_check
          %p173 = pneg %p81
        $region22: #{siim_forward.5} parent=15 // pred_check_branch
          %175 = sbr.rel (%p173) target = $region24
        $region23: #{siim_forward.5} parent=15 // pred_region
          %s176 = sand.u32 %s71, 1
          %s177 = scalar_lea.sflag [#allocation4], %s176
          %s178 = sand.u32 %s71, 1
          %s179 = smul.addr %s178, 1024
          %s180 = scalar_lea.vmem [#allocation3], %s179
          %s181 = smul.u32 128, %s21
          %s182 = smul.u32 2, %s20
          %184 = vsyncadd %s177, 0
          %s185 = smul.addr %s181, 16
          %s186 = sadd.s32 %s182, %s185
          %s187 = smul.addr %s186, 4
          %s188 = scalar_lea.hbm %s1, %s187
          %s189 = sshll.u32 %s188, 4
          %s190 = int_to_ptr.hbm [resolvable:$true] %s189
          %s191 = sshll.u32 %s180, 4
          %s192 = int_to_ptr.vmem [resolvable:$true] %s191
          %197 = dma.hbm_to_vmem [thread:$0]  %s190, 16384, %s192, %s177, 1024, 128, 8
        $region24: #{siim_forward.5} parent=15 // pred_fallthru
          _
        // Predicated region
        $region25: #{siim_forward.5} parent=15 // pred_check
          %p198 = pneg %p107
        $region26: #{siim_forward.5} parent=15 // pred_check_branch
          %200 = sbr.rel (%p198) target = $region28
        $region27: #{siim_forward.5} parent=15 // pred_region
          %s201 = smul.u32 2, %s20
          %p202 = scmp.lt.s32.totalorder %s201, 15
          %s203 = scalar_select %p202, %s201, 15
          %s204 = scalar_lea.vmem %s2, %s203
          %s205 = smul.u32 2, %s20
        $region28: #{siim_forward.5} parent=15 // pred_fallthru
          _
      $region16: #{siim_forward.5} parent=5 // pred_fallthru
        _
      %p206 = scmp.le.s32.totalorder 1, %s12
      %p207 = scmp.lt.s32.totalorder %s12, 33
      %p208 = pnand %p206, %p207
      %p209 = pneg %p208
      // Predicated region
      $region29: #{siim_forward.5} parent=5 // pred_check
        _
      $region30: #{siim_forward.5} parent=5 // pred_check_branch
        %211 = sbr.rel (%p208) target = $region32
      $region31: #{siim_forward.5} parent=5 // pred_region
        %s212 = ssub.s32 %s12, 1
        %s213 = sand.u32 %s74, 1
        %s214 = scalar_lea.sflag [#allocation4], %s213
        %s215 = sand.u32 %s74, 1
        %s216 = smul.addr %s215, 1024
        %s217 = scalar_lea.vmem [#allocation3], %s216
        // Predicated region
        $region33: #{siim_forward.5} parent=31 // pred_check
          %p218 = pneg %p87
        $region34: #{siim_forward.5} parent=31 // pred_check_branch
          %220 = sbr.rel (%p218) target = $region36
        $region35: #{siim_forward.5} parent=31 // pred_region
          %222 = dma.done %s214, 16384
        $region36: #{siim_forward.5} parent=31 // pred_fallthru
          _
        %s223 = smul.u32 8, %s24
        %p224 = scmp.lt.s32.totalorder %s22, 0
        %s225 = scalar_select %p224, %s22, 0
        %p226 = scmp.lt.s32.totalorder %s223, 31
        %s227 = scalar_select %p226, %s223, 31
        %s228 = smul.addr %s225, 32
        %s229 = sadd.s32 %s227, %s228
        %s230 = smul.addr %s229, 4
        %s231 = scalar_lea.vmem %s0, %s230
        %p232 = pneg %p59
        %p233 = pneg %p56
        %s234 = sand.u32 %s74, 1
        %s235 = scalar_lea.sflag [#allocation4], %s234
        %s236 = sand.u32 %s74, 1
        %s237 = smul.addr %s236, 1024
        %s238 = scalar_lea.vmem [#allocation3], %s237
        %p239 = pneg %p87
        %p240 = pneg %p84
        %s241 = smul.u32 2, %s23
        %p242 = scmp.lt.s32.totalorder %s241, 15
        %s243 = scalar_select %p242, %s241, 15
        %s244 = scalar_lea.vmem %s2, %s243
        %p245 = pneg %p113
        %p246 = pneg %p110
        %p247 = pneg %p141
        %p248 = pneg %p138
        %s249 = smul.u32 2, %s23
        %p250 = scmp.lt.s32.totalorder %s22, 0
        %s251 = scalar_select %p250, %s22, 0
        %p252 = scmp.lt.s32.totalorder %s249, 15
        %s253 = scalar_select %p252, %s249, 15
        %s254 = smul.addr %s251, 16
        %s255 = sadd.s32 %s253, %s254
        %s256 = smul.addr %s255, 4
        %s257 = scalar_lea.vmem %s3, %s256
        %s258 = smul.u32 8, %s24
        %p259 = scmp.lt.s32.totalorder %s22, 0
        %s260 = scalar_select %p259, %s22, 0
        %p261 = scmp.lt.s32.totalorder %s258, 31
        %s262 = scalar_select %p261, %s258, 31
        %s263 = smul.addr %s260, 32
        %s264 = sadd.s32 %s262, %s263
        %s265 = smul.addr %s264, 4
        %s266 = scalar_lea.vmem %s0, %s265
        %s267 = smul.u32 8, %s24
        %s268 = smul.u32 128, %s24
        %s269 = smul.u32 2, %s23
        %s270 = smul.u32 2, %s23
        %p271 = scmp.lt.s32.totalorder %s270, 15
        %s272 = scalar_select %p271, %s270, 15
        %s273 = scalar_lea.vmem %s2, %s272
        %s274 = smul.u32 2, %s23
        %s275 = smul.u32 2, %s23
        %p276 = scmp.lt.s32.totalorder %s22, 0
        %s277 = scalar_select %p276, %s22, 0
        %p278 = scmp.lt.s32.totalorder %s275, 15
        %s279 = scalar_select %p278, %s275, 15
        %s280 = smul.addr %s277, 16
        %s281 = sadd.s32 %s279, %s280
        %s282 = smul.addr %s281, 4
        %s283 = scalar_lea.vmem %s3, %s282
        %s284 = smul.u32 2, %s23
        %p285 = scmp.eq.s32.totalorder %s24, 0
        // Predicated region
        $region37: #{siim_forward.5} parent=31 // pred_check
          %p286 = pneg %p285
        $region38: #{siim_forward.5} parent=31 // pred_check_branch
          %288 = sbr.rel (%p286) target = $region40
        $region39: #{siim_forward.5} parent=31 // pred_region
          %289 = vst [vmem:[#allocation2] sm:$0xff] 0.0
          %290 = vst [vmem:[#allocation2 + $0x8] sm:$0xff] 0.0
        $region40: #{siim_forward.5} parent=31 // pred_fallthru
          _
        %v291 = vld [vmem:[#allocation2] sm:$0xff]
        %v292 = vld [vmem:[#allocation2 + $0x8] sm:$0xff]
        %v293 = vld [vmem:[%s266] sm:$0xff]
        %v294 = vld [vmem:[%s266 + $0x8] sm:$0xff]
        %v295 = vld [vmem:[%s266 + $0x10] sm:$0xff]
        %v296 = vld [vmem:[%s266 + $0x18] sm:$0xff]
        %v297 = vld [vmem:[%s217] sm:$0xff]
        %v298 = vld [vmem:[%s217 + $0x8] sm:$0xff]
        %v299 = vld [vmem:[%s217 + $0x10] sm:$0xff]
        %v300 = vld [vmem:[%s217 + $0x18] sm:$0xff]
        %v301 = vld [vmem:[%s217 + $0x20] sm:$0xff]
        %v302 = vld [vmem:[%s217 + $0x28] sm:$0xff]
        %v303 = vld [vmem:[%s217 + $0x30] sm:$0xff]
        %v304 = vld [vmem:[%s217 + $0x38] sm:$0xff]
        %v305 = vld [vmem:[%s217 + $0x40] sm:$0xff]
        %v306 = vld [vmem:[%s217 + $0x48] sm:$0xff]
        %v307 = vld [vmem:[%s217 + $0x50] sm:$0xff]
        %v308 = vld [vmem:[%s217 + $0x58] sm:$0xff]
        %v309 = vld [vmem:[%s217 + $0x60] sm:$0xff]
        %v310 = vld [vmem:[%s217 + $0x68] sm:$0xff]
        %v311 = vld [vmem:[%s217 + $0x70] sm:$0xff]
        %v312 = vld [vmem:[%s217 + $0x78] sm:$0xff]
        %v313 = vld [vmem:[%s217 + $0x80] sm:$0xff]
        %v314 = vld [vmem:[%s217 + $0x88] sm:$0xff]
        %v315 = vld [vmem:[%s217 + $0x90] sm:$0xff]
        %v316 = vld [vmem:[%s217 + $0x98] sm:$0xff]
        %v317 = vld [vmem:[%s217 + $0xa0] sm:$0xff]
        %v318 = vld [vmem:[%s217 + $0xa8] sm:$0xff]
        %v319 = vld [vmem:[%s217 + $0xb0] sm:$0xff]
        %v320 = vld [vmem:[%s217 + $0xb8] sm:$0xff]
        %v321 = vld [vmem:[%s217 + $0xc0] sm:$0xff]
        %v322 = vld [vmem:[%s217 + $0xc8] sm:$0xff]
        %v323 = vld [vmem:[%s217 + $0xd0] sm:$0xff]
        %v324 = vld [vmem:[%s217 + $0xd8] sm:$0xff]
        %v325 = vld [vmem:[%s217 + $0xe0] sm:$0xff]
        %v326 = vld [vmem:[%s217 + $0xe8] sm:$0xff]
        %v327 = vld [vmem:[%s217 + $0xf0] sm:$0xff]
        %v328 = vld [vmem:[%s217 + $0xf8] sm:$0xff]
        %v329 = vld [vmem:[%s217 + $0x100] sm:$0xff]
        %v330 = vld [vmem:[%s217 + $0x108] sm:$0xff]
        %v331 = vld [vmem:[%s217 + $0x110] sm:$0xff]
        %v332 = vld [vmem:[%s217 + $0x118] sm:$0xff]
        %v333 = vld [vmem:[%s217 + $0x120] sm:$0xff]
        %v334 = vld [vmem:[%s217 + $0x128] sm:$0xff]
        %v335 = vld [vmem:[%s217 + $0x130] sm:$0xff]
        %v336 = vld [vmem:[%s217 + $0x138] sm:$0xff]
        %v337 = vld [vmem:[%s217 + $0x140] sm:$0xff]
        %v338 = vld [vmem:[%s217 + $0x148] sm:$0xff]
        %v339 = vld [vmem:[%s217 + $0x150] sm:$0xff]
        %v340 = vld [vmem:[%s217 + $0x158] sm:$0xff]
        %v341 = vld [vmem:[%s217 + $0x160] sm:$0xff]
        %v342 = vld [vmem:[%s217 + $0x168] sm:$0xff]
        %v343 = vld [vmem:[%s217 + $0x170] sm:$0xff]
        %v344 = vld [vmem:[%s217 + $0x178] sm:$0xff]
        %v345 = vld [vmem:[%s217 + $0x180] sm:$0xff]
        %v346 = vld [vmem:[%s217 + $0x188] sm:$0xff]
        %v347 = vld [vmem:[%s217 + $0x190] sm:$0xff]
        %v348 = vld [vmem:[%s217 + $0x198] sm:$0xff]
        %v349 = vld [vmem:[%s217 + $0x1a0] sm:$0xff]
        %v350 = vld [vmem:[%s217 + $0x1a8] sm:$0xff]
        %v351 = vld [vmem:[%s217 + $0x1b0] sm:$0xff]
        %v352 = vld [vmem:[%s217 + $0x1b8] sm:$0xff]
        %v353 = vld [vmem:[%s217 + $0x1c0] sm:$0xff]
        %v354 = vld [vmem:[%s217 + $0x1c8] sm:$0xff]
        %v355 = vld [vmem:[%s217 + $0x1d0] sm:$0xff]
        %v356 = vld [vmem:[%s217 + $0x1d8] sm:$0xff]
        %v357 = vld [vmem:[%s217 + $0x1e0] sm:$0xff]
        %v358 = vld [vmem:[%s217 + $0x1e8] sm:$0xff]
        %v359 = vld [vmem:[%s217 + $0x1f0] sm:$0xff]
        %v360 = vld [vmem:[%s217 + $0x1f8] sm:$0xff]
        %v361 = vld [vmem:[%s217 + $0x200] sm:$0xff]
        %v362 = vld [vmem:[%s217 + $0x208] sm:$0xff]
        %v363 = vld [vmem:[%s217 + $0x210] sm:$0xff]
        %v364 = vld [vmem:[%s217 + $0x218] sm:$0xff]
        %v365 = vld [vmem:[%s217 + $0x220] sm:$0xff]
        %v366 = vld [vmem:[%s217 + $0x228] sm:$0xff]
        %v367 = vld [vmem:[%s217 + $0x230] sm:$0xff]
        %v368 = vld [vmem:[%s217 + $0x238] sm:$0xff]
        %v369 = vld [vmem:[%s217 + $0x240] sm:$0xff]
        %v370 = vld [vmem:[%s217 + $0x248] sm:$0xff]
        %v371 = vld [vmem:[%s217 + $0x250] sm:$0xff]
        %v372 = vld [vmem:[%s217 + $0x258] sm:$0xff]
        %v373 = vld [vmem:[%s217 + $0x260] sm:$0xff]
        %v374 = vld [vmem:[%s217 + $0x268] sm:$0xff]
        %v375 = vld [vmem:[%s217 + $0x270] sm:$0xff]
        %v376 = vld [vmem:[%s217 + $0x278] sm:$0xff]
        %v377 = vld [vmem:[%s217 + $0x280] sm:$0xff]
        %v378 = vld [vmem:[%s217 + $0x288] sm:$0xff]
        %v379 = vld [vmem:[%s217 + $0x290] sm:$0xff]
        %v380 = vld [vmem:[%s217 + $0x298] sm:$0xff]
        %v381 = vld [vmem:[%s217 + $0x2a0] sm:$0xff]
        %v382 = vld [vmem:[%s217 + $0x2a8] sm:$0xff]
        %v383 = vld [vmem:[%s217 + $0x2b0] sm:$0xff]
        %v384 = vld [vmem:[%s217 + $0x2b8] sm:$0xff]
        %v385 = vld [vmem:[%s217 + $0x2c0] sm:$0xff]
        %v386 = vld [vmem:[%s217 + $0x2c8] sm:$0xff]
        %v387 = vld [vmem:[%s217 + $0x2d0] sm:$0xff]
        %v388 = vld [vmem:[%s217 + $0x2d8] sm:$0xff]
        %v389 = vld [vmem:[%s217 + $0x2e0] sm:$0xff]
        %v390 = vld [vmem:[%s217 + $0x2e8] sm:$0xff]
        %v391 = vld [vmem:[%s217 + $0x2f0] sm:$0xff]
        %v392 = vld [vmem:[%s217 + $0x2f8] sm:$0xff]
        %v393 = vld [vmem:[%s217 + $0x300] sm:$0xff]
        %v394 = vld [vmem:[%s217 + $0x308] sm:$0xff]
        %v395 = vld [vmem:[%s217 + $0x310] sm:$0xff]
        %v396 = vld [vmem:[%s217 + $0x318] sm:$0xff]
        %v397 = vld [vmem:[%s217 + $0x320] sm:$0xff]
        %v398 = vld [vmem:[%s217 + $0x328] sm:$0xff]
        %v399 = vld [vmem:[%s217 + $0x330] sm:$0xff]
        %v400 = vld [vmem:[%s217 + $0x338] sm:$0xff]
        %v401 = vld [vmem:[%s217 + $0x340] sm:$0xff]
        %v402 = vld [vmem:[%s217 + $0x348] sm:$0xff]
        %v403 = vld [vmem:[%s217 + $0x350] sm:$0xff]
        %v404 = vld [vmem:[%s217 + $0x358] sm:$0xff]
        %v405 = vld [vmem:[%s217 + $0x360] sm:$0xff]
        %v406 = vld [vmem:[%s217 + $0x368] sm:$0xff]
        %v407 = vld [vmem:[%s217 + $0x370] sm:$0xff]
        %v408 = vld [vmem:[%s217 + $0x378] sm:$0xff]
        %v409 = vld [vmem:[%s217 + $0x380] sm:$0xff]
        %v410 = vld [vmem:[%s217 + $0x388] sm:$0xff]
        %v411 = vld [vmem:[%s217 + $0x390] sm:$0xff]
        %v412 = vld [vmem:[%s217 + $0x398] sm:$0xff]
        %v413 = vld [vmem:[%s217 + $0x3a0] sm:$0xff]
        %v414 = vld [vmem:[%s217 + $0x3a8] sm:$0xff]
        %v415 = vld [vmem:[%s217 + $0x3b0] sm:$0xff]
        %v416 = vld [vmem:[%s217 + $0x3b8] sm:$0xff]
        %v417 = vld [vmem:[%s217 + $0x3c0] sm:$0xff]
        %v418 = vld [vmem:[%s217 + $0x3c8] sm:$0xff]
        %v419 = vld [vmem:[%s217 + $0x3d0] sm:$0xff]
        %v420 = vld [vmem:[%s217 + $0x3d8] sm:$0xff]
        %v421 = vld [vmem:[%s217 + $0x3e0] sm:$0xff]
        %v422 = vld [vmem:[%s217 + $0x3e8] sm:$0xff]
        %v423 = vld [vmem:[%s217 + $0x3f0] sm:$0xff]
        %v424 = vld [vmem:[%s217 + $0x3f8] sm:$0xff]
        %v429 = vunpack.c.l.b16 %v293
        %v430 = vunpack.c.h.b16 %v293
        %v431 = vunpack.c.l.b16 %v294
        %v432 = vunpack.c.h.b16 %v294
        %v433 = vunpack.c.l.b16 %v295
        %v434 = vunpack.c.h.b16 %v295
        %v435 = vunpack.c.l.b16 %v296
        %v436 = vunpack.c.h.b16 %v296
        %v437 = vpack.c.b16 %v429, %v429
        %v438 = vpack.c.b16 %v430, %v430
        %v439 = vpack.c.b16 %v431, %v431
        %v440 = vpack.c.b16 %v432, %v432
        %v441 = vpack.c.b16 %v433, %v433
        %v442 = vpack.c.b16 %v434, %v434
        %v443 = vpack.c.b16 %v435, %v435
        %v444 = vpack.c.b16 %v436, %v436
        %v581 = vunpack.c.l.b16 %v297
        %v582 = vunpack.c.h.b16 %v297
        %v583 = vunpack.c.l.b16 %v298
        %v584 = vunpack.c.h.b16 %v298
        %v585 = vunpack.c.l.b16 %v299
        %v586 = vunpack.c.h.b16 %v299
        %v587 = vunpack.c.l.b16 %v300
        %v588 = vunpack.c.h.b16 %v300
        %v589 = vunpack.c.l.b16 %v301
        %v590 = vunpack.c.h.b16 %v301
        %v591 = vunpack.c.l.b16 %v302
        %v592 = vunpack.c.h.b16 %v302
        %v593 = vunpack.c.l.b16 %v303
        %v594 = vunpack.c.h.b16 %v303
        %v595 = vunpack.c.l.b16 %v304
        %v596 = vunpack.c.h.b16 %v304
        %v597 = vunpack.c.l.b16 %v305
        %v598 = vunpack.c.h.b16 %v305
        %v599 = vunpack.c.l.b16 %v306
        %v600 = vunpack.c.h.b16 %v306
        %v601 = vunpack.c.l.b16 %v307
        %v602 = vunpack.c.h.b16 %v307
        %v603 = vunpack.c.l.b16 %v308
        %v604 = vunpack.c.h.b16 %v308
        %v605 = vunpack.c.l.b16 %v309
        %v606 = vunpack.c.h.b16 %v309
        %v607 = vunpack.c.l.b16 %v310
        %v608 = vunpack.c.h.b16 %v310
        %v609 = vunpack.c.l.b16 %v311
        %v610 = vunpack.c.h.b16 %v311
        %v611 = vunpack.c.l.b16 %v312
        %v612 = vunpack.c.h.b16 %v312
        %v613 = vunpack.c.l.b16 %v313
        %v614 = vunpack.c.h.b16 %v313
        %v615 = vunpack.c.l.b16 %v314
        %v616 = vunpack.c.h.b16 %v314
        %v617 = vunpack.c.l.b16 %v315
        %v618 = vunpack.c.h.b16 %v315
        %v619 = vunpack.c.l.b16 %v316
        %v620 = vunpack.c.h.b16 %v316
        %v621 = vunpack.c.l.b16 %v317
        %v622 = vunpack.c.h.b16 %v317
        %v623 = vunpack.c.l.b16 %v318
        %v624 = vunpack.c.h.b16 %v318
        %v625 = vunpack.c.l.b16 %v319
        %v626 = vunpack.c.h.b16 %v319
        %v627 = vunpack.c.l.b16 %v320
        %v628 = vunpack.c.h.b16 %v320
        %v629 = vunpack.c.l.b16 %v321
        %v630 = vunpack.c.h.b16 %v321
        %v631 = vunpack.c.l.b16 %v322
        %v632 = vunpack.c.h.b16 %v322
        %v633 = vunpack.c.l.b16 %v323
        %v634 = vunpack.c.h.b16 %v323
        %v635 = vunpack.c.l.b16 %v324
        %v636 = vunpack.c.h.b16 %v324
        %v637 = vunpack.c.l.b16 %v325
        %v638 = vunpack.c.h.b16 %v325
        %v639 = vunpack.c.l.b16 %v326
        %v640 = vunpack.c.h.b16 %v326
        %v641 = vunpack.c.l.b16 %v327
        %v642 = vunpack.c.h.b16 %v327
        %v643 = vunpack.c.l.b16 %v328
        %v644 = vunpack.c.h.b16 %v328
        %v645 = vunpack.c.l.b16 %v329
        %v646 = vunpack.c.h.b16 %v329
        %v647 = vunpack.c.l.b16 %v330
        %v648 = vunpack.c.h.b16 %v330
        %v649 = vunpack.c.l.b16 %v331
        %v650 = vunpack.c.h.b16 %v331
        %v651 = vunpack.c.l.b16 %v332
        %v652 = vunpack.c.h.b16 %v332
        %v653 = vunpack.c.l.b16 %v333
        %v654 = vunpack.c.h.b16 %v333
        %v655 = vunpack.c.l.b16 %v334
        %v656 = vunpack.c.h.b16 %v334
        %v657 = vunpack.c.l.b16 %v335
        %v658 = vunpack.c.h.b16 %v335
        %v659 = vunpack.c.l.b16 %v336
        %v660 = vunpack.c.h.b16 %v336
        %v661 = vunpack.c.l.b16 %v337
        %v662 = vunpack.c.h.b16 %v337
        %v663 = vunpack.c.l.b16 %v338
        %v664 = vunpack.c.h.b16 %v338
        %v665 = vunpack.c.l.b16 %v339
        %v666 = vunpack.c.h.b16 %v339
        %v667 = vunpack.c.l.b16 %v340
        %v668 = vunpack.c.h.b16 %v340
        %v669 = vunpack.c.l.b16 %v341
        %v670 = vunpack.c.h.b16 %v341
        %v671 = vunpack.c.l.b16 %v342
        %v672 = vunpack.c.h.b16 %v342
        %v673 = vunpack.c.l.b16 %v343
        %v674 = vunpack.c.h.b16 %v343
        %v675 = vunpack.c.l.b16 %v344
        %v676 = vunpack.c.h.b16 %v344
        %v677 = vunpack.c.l.b16 %v345
        %v678 = vunpack.c.h.b16 %v345
        %v679 = vunpack.c.l.b16 %v346
        %v680 = vunpack.c.h.b16 %v346
        %v681 = vunpack.c.l.b16 %v347
        %v682 = vunpack.c.h.b16 %v347
        %v683 = vunpack.c.l.b16 %v348
        %v684 = vunpack.c.h.b16 %v348
        %v685 = vunpack.c.l.b16 %v349
        %v686 = vunpack.c.h.b16 %v349
        %v687 = vunpack.c.l.b16 %v350
        %v688 = vunpack.c.h.b16 %v350
        %v689 = vunpack.c.l.b16 %v351
        %v690 = vunpack.c.h.b16 %v351
        %v691 = vunpack.c.l.b16 %v352
        %v692 = vunpack.c.h.b16 %v352
        %v693 = vunpack.c.l.b16 %v353
        %v694 = vunpack.c.h.b16 %v353
        %v695 = vunpack.c.l.b16 %v354
        %v696 = vunpack.c.h.b16 %v354
        %v697 = vunpack.c.l.b16 %v355
        %v698 = vunpack.c.h.b16 %v355
        %v699 = vunpack.c.l.b16 %v356
        %v700 = vunpack.c.h.b16 %v356
        %v701 = vunpack.c.l.b16 %v357
        %v702 = vunpack.c.h.b16 %v357
        %v703 = vunpack.c.l.b16 %v358
        %v704 = vunpack.c.h.b16 %v358
        %v705 = vunpack.c.l.b16 %v359
        %v706 = vunpack.c.h.b16 %v359
        %v707 = vunpack.c.l.b16 %v360
        %v708 = vunpack.c.h.b16 %v360
        %v709 = vunpack.c.l.b16 %v361
        %v710 = vunpack.c.h.b16 %v361
        %v711 = vunpack.c.l.b16 %v362
        %v712 = vunpack.c.h.b16 %v362
        %v713 = vunpack.c.l.b16 %v363
        %v714 = vunpack.c.h.b16 %v363
        %v715 = vunpack.c.l.b16 %v364
        %v716 = vunpack.c.h.b16 %v364
        %v717 = vunpack.c.l.b16 %v365
        %v718 = vunpack.c.h.b16 %v365
        %v719 = vunpack.c.l.b16 %v366
        %v720 = vunpack.c.h.b16 %v366
        %v721 = vunpack.c.l.b16 %v367
        %v722 = vunpack.c.h.b16 %v367
        %v723 = vunpack.c.l.b16 %v368
        %v724 = vunpack.c.h.b16 %v368
        %v725 = vunpack.c.l.b16 %v369
        %v726 = vunpack.c.h.b16 %v369
        %v727 = vunpack.c.l.b16 %v370
        %v728 = vunpack.c.h.b16 %v370
        %v729 = vunpack.c.l.b16 %v371
        %v730 = vunpack.c.h.b16 %v371
        %v731 = vunpack.c.l.b16 %v372
        %v732 = vunpack.c.h.b16 %v372
        %v733 = vunpack.c.l.b16 %v373
        %v734 = vunpack.c.h.b16 %v373
        %v735 = vunpack.c.l.b16 %v374
        %v736 = vunpack.c.h.b16 %v374
        %v737 = vunpack.c.l.b16 %v375
        %v738 = vunpack.c.h.b16 %v375
        %v739 = vunpack.c.l.b16 %v376
        %v740 = vunpack.c.h.b16 %v376
        %v741 = vunpack.c.l.b16 %v377
        %v742 = vunpack.c.h.b16 %v377
        %v743 = vunpack.c.l.b16 %v378
        %v744 = vunpack.c.h.b16 %v378
        %v745 = vunpack.c.l.b16 %v379
        %v746 = vunpack.c.h.b16 %v379
        %v747 = vunpack.c.l.b16 %v380
        %v748 = vunpack.c.h.b16 %v380
        %v749 = vunpack.c.l.b16 %v381
        %v750 = vunpack.c.h.b16 %v381
        %v751 = vunpack.c.l.b16 %v382
        %v752 = vunpack.c.h.b16 %v382
        %v753 = vunpack.c.l.b16 %v383
        %v754 = vunpack.c.h.b16 %v383
        %v755 = vunpack.c.l.b16 %v384
        %v756 = vunpack.c.h.b16 %v384
        %v757 = vunpack.c.l.b16 %v385
        %v758 = vunpack.c.h.b16 %v385
        %v759 = vunpack.c.l.b16 %v386
        %v760 = vunpack.c.h.b16 %v386
        %v761 = vunpack.c.l.b16 %v387
        %v762 = vunpack.c.h.b16 %v387
        %v763 = vunpack.c.l.b16 %v388
        %v764 = vunpack.c.h.b16 %v388
        %v765 = vunpack.c.l.b16 %v389
        %v766 = vunpack.c.h.b16 %v389
        %v767 = vunpack.c.l.b16 %v390
        %v768 = vunpack.c.h.b16 %v390
        %v769 = vunpack.c.l.b16 %v391
        %v770 = vunpack.c.h.b16 %v391
        %v771 = vunpack.c.l.b16 %v392
        %v772 = vunpack.c.h.b16 %v392
        %v773 = vunpack.c.l.b16 %v393
        %v774 = vunpack.c.h.b16 %v393
        %v775 = vunpack.c.l.b16 %v394
        %v776 = vunpack.c.h.b16 %v394
        %v777 = vunpack.c.l.b16 %v395
        %v778 = vunpack.c.h.b16 %v395
        %v779 = vunpack.c.l.b16 %v396
        %v780 = vunpack.c.h.b16 %v396
        %v781 = vunpack.c.l.b16 %v397
        %v782 = vunpack.c.h.b16 %v397
        %v783 = vunpack.c.l.b16 %v398
        %v784 = vunpack.c.h.b16 %v398
        %v785 = vunpack.c.l.b16 %v399
        %v786 = vunpack.c.h.b16 %v399
        %v787 = vunpack.c.l.b16 %v400
        %v788 = vunpack.c.h.b16 %v400
        %v789 = vunpack.c.l.b16 %v401
        %v790 = vunpack.c.h.b16 %v401
        %v791 = vunpack.c.l.b16 %v402
        %v792 = vunpack.c.h.b16 %v402
        %v793 = vunpack.c.l.b16 %v403
        %v794 = vunpack.c.h.b16 %v403
        %v795 = vunpack.c.l.b16 %v404
        %v796 = vunpack.c.h.b16 %v404
        %v797 = vunpack.c.l.b16 %v405
        %v798 = vunpack.c.h.b16 %v405
        %v799 = vunpack.c.l.b16 %v406
        %v800 = vunpack.c.h.b16 %v406
        %v801 = vunpack.c.l.b16 %v407
        %v802 = vunpack.c.h.b16 %v407
        %v803 = vunpack.c.l.b16 %v408
        %v804 = vunpack.c.h.b16 %v408
        %v805 = vunpack.c.l.b16 %v409
        %v806 = vunpack.c.h.b16 %v409
        %v807 = vunpack.c.l.b16 %v410
        %v808 = vunpack.c.h.b16 %v410
        %v809 = vunpack.c.l.b16 %v411
        %v810 = vunpack.c.h.b16 %v411
        %v811 = vunpack.c.l.b16 %v412
        %v812 = vunpack.c.h.b16 %v412
        %v813 = vunpack.c.l.b16 %v413
        %v814 = vunpack.c.h.b16 %v413
        %v815 = vunpack.c.l.b16 %v414
        %v816 = vunpack.c.h.b16 %v414
        %v817 = vunpack.c.l.b16 %v415
        %v818 = vunpack.c.h.b16 %v415
        %v819 = vunpack.c.l.b16 %v416
        %v820 = vunpack.c.h.b16 %v416
        %v821 = vunpack.c.l.b16 %v417
        %v822 = vunpack.c.h.b16 %v417
        %v823 = vunpack.c.l.b16 %v418
        %v824 = vunpack.c.h.b16 %v418
        %v825 = vunpack.c.l.b16 %v419
        %v826 = vunpack.c.h.b16 %v419
        %v827 = vunpack.c.l.b16 %v420
        %v828 = vunpack.c.h.b16 %v420
        %v829 = vunpack.c.l.b16 %v421
        %v830 = vunpack.c.h.b16 %v421
        %v831 = vunpack.c.l.b16 %v422
        %v832 = vunpack.c.h.b16 %v422
        %v833 = vunpack.c.l.b16 %v423
        %v834 = vunpack.c.h.b16 %v423
        %v835 = vunpack.c.l.b16 %v424
        %v836 = vunpack.c.h.b16 %v424
        %v837 = vpack.c.b16 %v583, %v581
        %v838 = vpack.c.b16 %v584, %v582
        %v839 = vpack.c.b16 %v587, %v585
        %v840 = vpack.c.b16 %v588, %v586
        %v841 = vpack.c.b16 %v591, %v589
        %v842 = vpack.c.b16 %v592, %v590
        %v843 = vpack.c.b16 %v595, %v593
        %v844 = vpack.c.b16 %v596, %v594
        %v845 = vpack.c.b16 %v599, %v597
        %v846 = vpack.c.b16 %v600, %v598
        %v847 = vpack.c.b16 %v603, %v601
        %v848 = vpack.c.b16 %v604, %v602
        %v849 = vpack.c.b16 %v607, %v605
        %v850 = vpack.c.b16 %v608, %v606
        %v851 = vpack.c.b16 %v611, %v609
        %v852 = vpack.c.b16 %v612, %v610
        %v853 = vpack.c.b16 %v615, %v613
        %v854 = vpack.c.b16 %v616, %v614
        %v855 = vpack.c.b16 %v619, %v617
        %v856 = vpack.c.b16 %v620, %v618
        %v857 = vpack.c.b16 %v623, %v621
        %v858 = vpack.c.b16 %v624, %v622
        %v859 = vpack.c.b16 %v627, %v625
        %v860 = vpack.c.b16 %v628, %v626
        %v861 = vpack.c.b16 %v631, %v629
        %v862 = vpack.c.b16 %v632, %v630
        %v863 = vpack.c.b16 %v635, %v633
        %v864 = vpack.c.b16 %v636, %v634
        %v865 = vpack.c.b16 %v639, %v637
        %v866 = vpack.c.b16 %v640, %v638
        %v867 = vpack.c.b16 %v643, %v641
        %v868 = vpack.c.b16 %v644, %v642
        %v869 = vpack.c.b16 %v647, %v645
        %v870 = vpack.c.b16 %v648, %v646
        %v871 = vpack.c.b16 %v651, %v649
        %v872 = vpack.c.b16 %v652, %v650
        %v873 = vpack.c.b16 %v655, %v653
        %v874 = vpack.c.b16 %v656, %v654
        %v875 = vpack.c.b16 %v659, %v657
        %v876 = vpack.c.b16 %v660, %v658
        %v877 = vpack.c.b16 %v663, %v661
        %v878 = vpack.c.b16 %v664, %v662
        %v879 = vpack.c.b16 %v667, %v665
        %v880 = vpack.c.b16 %v668, %v666
        %v881 = vpack.c.b16 %v671, %v669
        %v882 = vpack.c.b16 %v672, %v670
        %v883 = vpack.c.b16 %v675, %v673
        %v884 = vpack.c.b16 %v676, %v674
        %v885 = vpack.c.b16 %v679, %v677
        %v886 = vpack.c.b16 %v680, %v678
        %v887 = vpack.c.b16 %v683, %v681
        %v888 = vpack.c.b16 %v684, %v682
        %v889 = vpack.c.b16 %v687, %v685
        %v890 = vpack.c.b16 %v688, %v686
        %v891 = vpack.c.b16 %v691, %v689
        %v892 = vpack.c.b16 %v692, %v690
        %v893 = vpack.c.b16 %v695, %v693
        %v894 = vpack.c.b16 %v696, %v694
        %v895 = vpack.c.b16 %v699, %v697
        %v896 = vpack.c.b16 %v700, %v698
        %v897 = vpack.c.b16 %v703, %v701
        %v898 = vpack.c.b16 %v704, %v702
        %v899 = vpack.c.b16 %v707, %v705
        %v900 = vpack.c.b16 %v708, %v706
        %v901 = vpack.c.b16 %v711, %v709
        %v902 = vpack.c.b16 %v712, %v710
        %v903 = vpack.c.b16 %v715, %v713
        %v904 = vpack.c.b16 %v716, %v714
        %v905 = vpack.c.b16 %v719, %v717
        %v906 = vpack.c.b16 %v720, %v718
        %v907 = vpack.c.b16 %v723, %v721
        %v908 = vpack.c.b16 %v724, %v722
        %v909 = vpack.c.b16 %v727, %v725
        %v910 = vpack.c.b16 %v728, %v726
        %v911 = vpack.c.b16 %v731, %v729
        %v912 = vpack.c.b16 %v732, %v730
        %v913 = vpack.c.b16 %v735, %v733
        %v914 = vpack.c.b16 %v736, %v734
        %v915 = vpack.c.b16 %v739, %v737
        %v916 = vpack.c.b16 %v740, %v738
        %v917 = vpack.c.b16 %v743, %v741
        %v918 = vpack.c.b16 %v744, %v742
        %v919 = vpack.c.b16 %v747, %v745
        %v920 = vpack.c.b16 %v748, %v746
        %v921 = vpack.c.b16 %v751, %v749
        %v922 = vpack.c.b16 %v752, %v750
        %v923 = vpack.c.b16 %v755, %v753
        %v924 = vpack.c.b16 %v756, %v754
        %v925 = vpack.c.b16 %v759, %v757
        %v926 = vpack.c.b16 %v760, %v758
        %v927 = vpack.c.b16 %v763, %v761
        %v928 = vpack.c.b16 %v764, %v762
        %v929 = vpack.c.b16 %v767, %v765
        %v930 = vpack.c.b16 %v768, %v766
        %v931 = vpack.c.b16 %v771, %v769
        %v932 = vpack.c.b16 %v772, %v770
        %v933 = vpack.c.b16 %v775, %v773
        %v934 = vpack.c.b16 %v776, %v774
        %v935 = vpack.c.b16 %v779, %v777
        %v936 = vpack.c.b16 %v780, %v778
        %v937 = vpack.c.b16 %v783, %v781
        %v938 = vpack.c.b16 %v784, %v782
        %v939 = vpack.c.b16 %v787, %v785
        %v940 = vpack.c.b16 %v788, %v786
        %v941 = vpack.c.b16 %v791, %v789
        %v942 = vpack.c.b16 %v792, %v790
        %v943 = vpack.c.b16 %v795, %v793
        %v944 = vpack.c.b16 %v796, %v794
        %v945 = vpack.c.b16 %v799, %v797
        %v946 = vpack.c.b16 %v800, %v798
        %v947 = vpack.c.b16 %v803, %v801
        %v948 = vpack.c.b16 %v804, %v802
        %v949 = vpack.c.b16 %v807, %v805
        %v950 = vpack.c.b16 %v808, %v806
        %v951 = vpack.c.b16 %v811, %v809
        %v952 = vpack.c.b16 %v812, %v810
        %v953 = vpack.c.b16 %v815, %v813
        %v954 = vpack.c.b16 %v816, %v814
        %v955 = vpack.c.b16 %v819, %v817
        %v956 = vpack.c.b16 %v820, %v818
        %v957 = vpack.c.b16 %v823, %v821
        %v958 = vpack.c.b16 %v824, %v822
        %v959 = vpack.c.b16 %v827, %v825
        %v960 = vpack.c.b16 %v828, %v826
        %v961 = vpack.c.b16 %v831, %v829
        %v962 = vpack.c.b16 %v832, %v830
        %v963 = vpack.c.b16 %v835, %v833
        %v964 = vpack.c.b16 %v836, %v834
        %1093 = vmatpush.bf16.msra.mxu0 %v851
        %1094 = vmatpush.bf16.msra.mxu0 %v849
        %1095 = vmatpush.bf16.msra.mxu0 %v847
        %1096 = vmatpush.bf16.msra.mxu0 %v845
        %1097 = vmatpush.bf16.msra.mxu0 %v843
        %1098 = vmatpush.bf16.msra.mxu0 %v841
        %1099 = vmatpush.bf16.msra.mxu0 %v839
        %1100 = vmatpush.bf16.msra.mxu0 %v837
        %1101 = vmatmul.bf16.gmra.mxu0 %v437
        %v1102 = vpop.f32.mrf.mxu0
        %v1103 = vadd.f32 0.0, %v1102
        %v1104 = vpop.f32.mrf.mxu0
        %1105 = vdwg.mxu0
        %1106 = vmatpush.bf16.msra.mxu0 %v867
        %1107 = vmatpush.bf16.msra.mxu0 %v865
        %1108 = vmatpush.bf16.msra.mxu0 %v863
        %1109 = vmatpush.bf16.msra.mxu0 %v861
        %1110 = vmatpush.bf16.msra.mxu0 %v859
        %1111 = vmatpush.bf16.msra.mxu0 %v857
        %1112 = vmatpush.bf16.msra.mxu0 %v855
        %1113 = vmatpush.bf16.msra.mxu0 %v853
        %1114 = vmatmul.bf16.gmra.mxu0 %v438
        %v1115 = vpop.f32.mrf.mxu0
        %v1116 = vadd.f32 %v1103, %v1115
        %v1117 = vpop.f32.mrf.mxu0
        %1118 = vdwg.mxu0
        %1119 = vmatpush.bf16.msra.mxu0 %v883
        %1120 = vmatpush.bf16.msra.mxu0 %v881
        %1121 = vmatpush.bf16.msra.mxu0 %v879
        %1122 = vmatpush.bf16.msra.mxu0 %v877
        %1123 = vmatpush.bf16.msra.mxu0 %v875
        %1124 = vmatpush.bf16.msra.mxu0 %v873
        %1125 = vmatpush.bf16.msra.mxu0 %v871
        %1126 = vmatpush.bf16.msra.mxu0 %v869
        %1127 = vmatmul.bf16.gmra.mxu0 %v439
        %v1128 = vpop.f32.mrf.mxu0
        %v1129 = vadd.f32 %v1116, %v1128
        %v1130 = vpop.f32.mrf.mxu0
        %1131 = vdwg.mxu0
        %1132 = vmatpush.bf16.msra.mxu0 %v899
        %1133 = vmatpush.bf16.msra.mxu0 %v897
        %1134 = vmatpush.bf16.msra.mxu0 %v895
        %1135 = vmatpush.bf16.msra.mxu0 %v893
        %1136 = vmatpush.bf16.msra.mxu0 %v891
        %1137 = vmatpush.bf16.msra.mxu0 %v889
        %1138 = vmatpush.bf16.msra.mxu0 %v887
        %1139 = vmatpush.bf16.msra.mxu0 %v885
        %1140 = vmatmul.bf16.gmra.mxu0 %v440
        %v1141 = vpop.f32.mrf.mxu0
        %v1142 = vadd.f32 %v1129, %v1141
        %v1143 = vpop.f32.mrf.mxu0
        %1144 = vdwg.mxu0
        %1145 = vmatpush.bf16.msra.mxu0 %v915
        %1146 = vmatpush.bf16.msra.mxu0 %v913
        %1147 = vmatpush.bf16.msra.mxu0 %v911
        %1148 = vmatpush.bf16.msra.mxu0 %v909
        %1149 = vmatpush.bf16.msra.mxu0 %v907
        %1150 = vmatpush.bf16.msra.mxu0 %v905
        %1151 = vmatpush.bf16.msra.mxu0 %v903
        %1152 = vmatpush.bf16.msra.mxu0 %v901
        %1153 = vmatmul.bf16.gmra.mxu0 %v441
        %v1154 = vpop.f32.mrf.mxu0
        %v1155 = vadd.f32 %v1142, %v1154
        %v1156 = vpop.f32.mrf.mxu0
        %1157 = vdwg.mxu0
        %1158 = vmatpush.bf16.msra.mxu0 %v931
        %1159 = vmatpush.bf16.msra.mxu0 %v929
        %1160 = vmatpush.bf16.msra.mxu0 %v927
        %1161 = vmatpush.bf16.msra.mxu0 %v925
        %1162 = vmatpush.bf16.msra.mxu0 %v923
        %1163 = vmatpush.bf16.msra.mxu0 %v921
        %1164 = vmatpush.bf16.msra.mxu0 %v919
        %1165 = vmatpush.bf16.msra.mxu0 %v917
        %1166 = vmatmul.bf16.gmra.mxu0 %v442
        %v1167 = vpop.f32.mrf.mxu0
        %v1168 = vadd.f32 %v1155, %v1167
        %v1169 = vpop.f32.mrf.mxu0
        %1170 = vdwg.mxu0
        %1171 = vmatpush.bf16.msra.mxu0 %v947
        %1172 = vmatpush.bf16.msra.mxu0 %v945
        %1173 = vmatpush.bf16.msra.mxu0 %v943
        %1174 = vmatpush.bf16.msra.mxu0 %v941
        %1175 = vmatpush.bf16.msra.mxu0 %v939
        %1176 = vmatpush.bf16.msra.mxu0 %v937
        %1177 = vmatpush.bf16.msra.mxu0 %v935
        %1178 = vmatpush.bf16.msra.mxu0 %v933
        %1179 = vmatmul.bf16.gmra.mxu0 %v443
        %v1180 = vpop.f32.mrf.mxu0
        %v1181 = vadd.f32 %v1168, %v1180
        %v1182 = vpop.f32.mrf.mxu0
        %1183 = vdwg.mxu0
        %1184 = vmatpush.bf16.msra.mxu0 %v963
        %1185 = vmatpush.bf16.msra.mxu0 %v961
        %1186 = vmatpush.bf16.msra.mxu0 %v959
        %1187 = vmatpush.bf16.msra.mxu0 %v957
        %1188 = vmatpush.bf16.msra.mxu0 %v955
        %1189 = vmatpush.bf16.msra.mxu0 %v953
        %1190 = vmatpush.bf16.msra.mxu0 %v951
        %1191 = vmatpush.bf16.msra.mxu0 %v949
        %1192 = vmatmul.bf16.gmra.mxu0 %v444
        %v1193 = vpop.f32.mrf.mxu0
        %v1194 = vadd.f32 %v1181, %v1193
        %v1195 = vpop.f32.mrf.mxu0
        %1196 = vdwg.mxu0
        %1197 = vmatpush.bf16.msra.mxu0 %v852
        %1198 = vmatpush.bf16.msra.mxu0 %v850
        %1199 = vmatpush.bf16.msra.mxu0 %v848
        %1200 = vmatpush.bf16.msra.mxu0 %v846
        %1201 = vmatpush.bf16.msra.mxu0 %v844
        %1202 = vmatpush.bf16.msra.mxu0 %v842
        %1203 = vmatpush.bf16.msra.mxu0 %v840
        %1204 = vmatpush.bf16.msra.mxu0 %v838
        %1205 = vmatmul.bf16.gmra.mxu0 %v437
        %v1206 = vpop.f32.mrf.mxu0
        %v1207 = vadd.f32 0.0, %v1206
        %v1208 = vpop.f32.mrf.mxu0
        %1209 = vdwg.mxu0
        %1210 = vmatpush.bf16.msra.mxu0 %v868
        %1211 = vmatpush.bf16.msra.mxu0 %v866
        %1212 = vmatpush.bf16.msra.mxu0 %v864
        %1213 = vmatpush.bf16.msra.mxu0 %v862
        %1214 = vmatpush.bf16.msra.mxu0 %v860
        %1215 = vmatpush.bf16.msra.mxu0 %v858
        %1216 = vmatpush.bf16.msra.mxu0 %v856
        %1217 = vmatpush.bf16.msra.mxu0 %v854
        %1218 = vmatmul.bf16.gmra.mxu0 %v438
        %v1219 = vpop.f32.mrf.mxu0
        %v1220 = vadd.f32 %v1207, %v1219
        %v1221 = vpop.f32.mrf.mxu0
        %1222 = vdwg.mxu0
        %1223 = vmatpush.bf16.msra.mxu0 %v884
        %1224 = vmatpush.bf16.msra.mxu0 %v882
        %1225 = vmatpush.bf16.msra.mxu0 %v880
        %1226 = vmatpush.bf16.msra.mxu0 %v878
        %1227 = vmatpush.bf16.msra.mxu0 %v876
        %1228 = vmatpush.bf16.msra.mxu0 %v874
        %1229 = vmatpush.bf16.msra.mxu0 %v872
        %1230 = vmatpush.bf16.msra.mxu0 %v870
        %1231 = vmatmul.bf16.gmra.mxu0 %v439
        %v1232 = vpop.f32.mrf.mxu0
        %v1233 = vadd.f32 %v1220, %v1232
        %v1234 = vpop.f32.mrf.mxu0
        %1235 = vdwg.mxu0
        %1236 = vmatpush.bf16.msra.mxu0 %v900
        %1237 = vmatpush.bf16.msra.mxu0 %v898
        %1238 = vmatpush.bf16.msra.mxu0 %v896
        %1239 = vmatpush.bf16.msra.mxu0 %v894
        %1240 = vmatpush.bf16.msra.mxu0 %v892
        %1241 = vmatpush.bf16.msra.mxu0 %v890
        %1242 = vmatpush.bf16.msra.mxu0 %v888
        %1243 = vmatpush.bf16.msra.mxu0 %v886
        %1244 = vmatmul.bf16.gmra.mxu0 %v440
        %v1245 = vpop.f32.mrf.mxu0
        %v1246 = vadd.f32 %v1233, %v1245
        %v1247 = vpop.f32.mrf.mxu0
        %1248 = vdwg.mxu0
        %1249 = vmatpush.bf16.msra.mxu0 %v916
        %1250 = vmatpush.bf16.msra.mxu0 %v914
        %1251 = vmatpush.bf16.msra.mxu0 %v912
        %1252 = vmatpush.bf16.msra.mxu0 %v910
        %1253 = vmatpush.bf16.msra.mxu0 %v908
        %1254 = vmatpush.bf16.msra.mxu0 %v906
        %1255 = vmatpush.bf16.msra.mxu0 %v904
        %1256 = vmatpush.bf16.msra.mxu0 %v902
        %1257 = vmatmul.bf16.gmra.mxu0 %v441
        %v1258 = vpop.f32.mrf.mxu0
        %v1259 = vadd.f32 %v1246, %v1258
        %v1260 = vpop.f32.mrf.mxu0
        %1261 = vdwg.mxu0
        %1262 = vmatpush.bf16.msra.mxu0 %v932
        %1263 = vmatpush.bf16.msra.mxu0 %v930
        %1264 = vmatpush.bf16.msra.mxu0 %v928
        %1265 = vmatpush.bf16.msra.mxu0 %v926
        %1266 = vmatpush.bf16.msra.mxu0 %v924
        %1267 = vmatpush.bf16.msra.mxu0 %v922
        %1268 = vmatpush.bf16.msra.mxu0 %v920
        %1269 = vmatpush.bf16.msra.mxu0 %v918
        %1270 = vmatmul.bf16.gmra.mxu0 %v442
        %v1271 = vpop.f32.mrf.mxu0
        %v1272 = vadd.f32 %v1259, %v1271
        %v1273 = vpop.f32.mrf.mxu0
        %1274 = vdwg.mxu0
        %1275 = vmatpush.bf16.msra.mxu0 %v948
        %1276 = vmatpush.bf16.msra.mxu0 %v946
        %1277 = vmatpush.bf16.msra.mxu0 %v944
        %1278 = vmatpush.bf16.msra.mxu0 %v942
        %1279 = vmatpush.bf16.msra.mxu0 %v940
        %1280 = vmatpush.bf16.msra.mxu0 %v938
        %1281 = vmatpush.bf16.msra.mxu0 %v936
        %1282 = vmatpush.bf16.msra.mxu0 %v934
        %1283 = vmatmul.bf16.gmra.mxu0 %v443
        %v1284 = vpop.f32.mrf.mxu0
        %v1285 = vadd.f32 %v1272, %v1284
        %v1286 = vpop.f32.mrf.mxu0
        %1287 = vdwg.mxu0
        %1288 = vmatpush.bf16.msra.mxu0 %v964
        %1289 = vmatpush.bf16.msra.mxu0 %v962
        %1290 = vmatpush.bf16.msra.mxu0 %v960
        %1291 = vmatpush.bf16.msra.mxu0 %v958
        %1292 = vmatpush.bf16.msra.mxu0 %v956
        %1293 = vmatpush.bf16.msra.mxu0 %v954
        %1294 = vmatpush.bf16.msra.mxu0 %v952
        %1295 = vmatpush.bf16.msra.mxu0 %v950
        %1296 = vmatmul.bf16.gmra.mxu0 %v444
        %v1297 = vpop.f32.mrf.mxu0
        %v1298 = vadd.f32 %v1285, %v1297
        %v1299 = vpop.f32.mrf.mxu0
        %1300 = vdwg.mxu0
        %v1301 = vadd.f32 %v291, %v1194
        %v1302 = vadd.f32 %v292, %v1298
        %1303 = vst [vmem:[#allocation2] sm:$0xff] %v1301
        %1304 = vst [vmem:[#allocation2 + $0x8] sm:$0xff] %v1302
        %p1305 = scmp.eq.s32.totalorder %s24, 3
        // Predicated region
        $region41: #{siim_forward.5} parent=31 // pred_check
          %p1306 = pneg %p1305
        $region42: #{siim_forward.5} parent=31 // pred_check_branch
          %1308 = sbr.rel (%p1306) target = $region44
        $region43: #{siim_forward.5} parent=31 // pred_region
          %v1309 = vld [vmem:[#allocation2] sm:$0xff]
          %v1310 = vld [vmem:[#allocation2 + $0x8] sm:$0xff]
          %v1311 = vld [vmem:[%s273] sm:$0x3]
          %v1313 = vperm.slane %v1311, 0
          %v1314 = vperm.slane %v1311, 1
          %v1317 = vadd.f32 %v1309, %v1313
          %v1318 = vadd.f32 %v1310, %v1314
          %v1319 = vmax.f32 %v1317, 0.0
          %v1320 = vmax.f32 %v1318, 0.0
          %v1321 = vpack.c.bf16 %v1320, %v1319
          %1322 = vst [vmem:[%s283] sm:$0xff] %v1321
        $region44: #{siim_forward.5} parent=31 // pred_fallthru
          _
        %s1323 = smul.u32 2, %s23
        %p1324 = scmp.lt.s32.totalorder %s22, 0
        %s1325 = scalar_select %p1324, %s22, 0
        %p1326 = scmp.lt.s32.totalorder %s1323, 15
        %s1327 = scalar_select %p1326, %s1323, 15
        %s1328 = smul.addr %s1325, 16
        %s1329 = sadd.s32 %s1327, %s1328
        %s1330 = smul.addr %s1329, 4
        %s1331 = scalar_lea.vmem %s3, %s1330
        // Predicated region
        $region45: #{siim_forward.5} parent=31 // pred_check
          %p1332 = pneg %p138
        $region46: #{siim_forward.5} parent=31 // pred_check_branch
          %1334 = sbr.rel (%p1332) target = $region48
        $region47: #{siim_forward.5} parent=31 // pred_region
          %s1335 = smul.u32 2, %s23
        $region48: #{siim_forward.5} parent=31 // pred_fallthru
          _
      $region32: #{siim_forward.5} parent=5 // pred_fallthru
        _
      %p1336 = scmp.le.s32.totalorder 2, %s12
      // Predicated region
      $region49: #{siim_forward.5} parent=5 // pred_check
        %p1337 = pneg %p1336
      $region50: #{siim_forward.5} parent=5 // pred_check_branch
        %1339 = sbr.rel (%p1337) target = $region52
      $region51: #{siim_forward.5} parent=5 // pred_region
        %s1340 = ssub.s32 %s12, 2
        // Predicated region
        $region53: #{siim_forward.5} parent=51 // pred_check
          %p1341 = pneg %p144
        $region54: #{siim_forward.5} parent=51 // pred_check_branch
          %1343 = sbr.rel (%p1341) target = $region56
        $region55: #{siim_forward.5} parent=51 // pred_region
          %s1344 = smul.u32 2, %s26
          %p1345 = scmp.lt.s32.totalorder %s25, 0
          %s1346 = scalar_select %p1345, %s25, 0
          %p1347 = scmp.lt.s32.totalorder %s1344, 15
          %s1348 = scalar_select %p1347, %s1344, 15
          %s1349 = smul.addr %s1346, 16
          %s1350 = sadd.s32 %s1348, %s1349
          %s1351 = smul.addr %s1350, 4
          %s1352 = scalar_lea.vmem %s3, %s1351
        $region56: #{siim_forward.5} parent=51 // pred_fallthru
          _
      $region52: #{siim_forward.5} parent=5 // pred_fallthru
        _
    $region6: #{siim_forward.5} parent=1 // loop_footer
      %s16 = sadd.s32 1, %s12
    $region7: #{siim_forward.5} parent=1 // loop_footer_branch
      %11 = sbr.rel target = $region3
    $region8: #{siim_forward.5} parent=1 // loop_exit
      _
    %1353 = vsyncpa [#allocation4], 1
    %s1354 = scalar_lea.sflag [#allocation4], 1
    %1355 = vsyncpa %s1354, 1

// kernel: siim_forward.7
$region0: #{siim_forward.7}
  #allocation0 [shape = 'u32[]', space=smem, size = 0x4, offset = 0x4, fixed_abs, tag = 'smem constant byte address 0x4 - core index']
  #allocation1 [shape = 'u32[72,128]{1,0:T(1,128)}', space=vmem, size = 0x9000, scoped, tag = 'internal scratch']
  #allocation2 [shape = 'f32[2,2048]{1,0:T(2,128)}', space=vmem, size = 0x4000, scoped, tag = 'scratch operand']
  %s0 = inlined_call_operand.vmem [shape: bf16[2,4,2048], index: 0, kind: input, shape index: {}]
  %s1 = inlined_call_operand.vmem [shape: f32[2048,128], index: 1, kind: input, shape index: {}]
  %s2 = inlined_call_operand.vmem [shape: f32[1,128], index: 2, kind: input, shape index: {}]
  %s3 = inlined_call_operand.hbm [shape: f32[2,128], index: 3, kind: output, shape index: {}]
  %s4 = sld [smem:[#allocation0]]
  $region30: #{siim_forward.7} parent=0
    _
  %s6 = ssub.s32 1, %s4
  %s7 = scalar_select 0, %s6, %s4
  $region1: #{siim_forward.7} parent=0
    #allocation3 [shape = 'u8[1024]{0}', space=vmem, size = 0x400, scoped, tag = 'output window, operand 0, single buffered']
    #allocation4 [shape = 's32[1]{0}', space=sflag, size = 0x4, scoped, tag = 'scoped memory for siim_forward.7']
    %8 = vsyncpa [#allocation4], 0
    // Predicated region
    $region2: #{siim_forward.7} parent=1 // pred_check
      _
    $region3: #{siim_forward.7} parent=1 // pred_check_branch
      %10 = sbr.rel (0) target = $region5
    $region4: #{siim_forward.7} parent=1 // pred_region
      _
    $region5: #{siim_forward.7} parent=1 // pred_fallthru
      _
    // Predicated region
    $region6: #{siim_forward.7} parent=1 // pred_check
      _
    $region7: #{siim_forward.7} parent=1 // pred_check_branch
      %12 = sbr.rel (0) target = $region9
    $region8: #{siim_forward.7} parent=1 // pred_region
      _
    $region9: #{siim_forward.7} parent=1 // pred_fallthru
      _
    // Predicated region
    $region10: #{siim_forward.7} parent=1 // pred_check
      _
    $region11: #{siim_forward.7} parent=1 // pred_check_branch
      %14 = sbr.rel (0) target = $region13
    $region12: #{siim_forward.7} parent=1 // pred_region
      _
    $region13: #{siim_forward.7} parent=1 // pred_fallthru
      _
    %p15 = scmp.eq.s32.totalorder 0, 0
    // Predicated region
    $region14: #{siim_forward.7} parent=1 // pred_check
      %p16 = pneg %p15
    $region15: #{siim_forward.7} parent=1 // pred_check_branch
      %18 = sbr.rel (%p16) target = $region17
    $region16: #{siim_forward.7} parent=1 // pred_region
      %19 = vst [vmem:[#allocation2] sm:$0xff] 0.0
      %20 = vst [vmem:[#allocation2 + $0x8] sm:$0xff] 0.0
      %21 = vst [vmem:[#allocation2 + $0x10] sm:$0xff] 0.0
      %22 = vst [vmem:[#allocation2 + $0x18] sm:$0xff] 0.0
    $region17: #{siim_forward.7} parent=1 // pred_fallthru
      _
    %v23 = vld [vmem:[#allocation2] sm:$0xff]
    %v24 = vld [vmem:[#allocation2 + $0x8] sm:$0xff]
    %v25 = vld [vmem:[#allocation2 + $0x10] sm:$0xff]
    %v26 = vld [vmem:[#allocation2 + $0x18] sm:$0xff]
    %v27 = vld [vmem:[%s0] sm:$0xff]
    %v28 = vld [vmem:[%s0 + $0x8] sm:$0xff]
    %v29 = vld [vmem:[%s0 + $0x10] sm:$0xff]
    %v30 = vld [vmem:[%s0 + $0x18] sm:$0xff]
    %v31 = vld [vmem:[%s0 + $0x20] sm:$0xff]
    %v32 = vld [vmem:[%s0 + $0x28] sm:$0xff]
    %v33 = vld [vmem:[%s0 + $0x30] sm:$0xff]
    %v34 = vld [vmem:[%s0 + $0x38] sm:$0xff]
    %v35 = vunpack.c.l.bf16 %v27
    %v36 = vunpack.c.h.bf16 %v27
    %v37 = vunpack.c.l.bf16 %v28
    %v38 = vunpack.c.h.bf16 %v28
    %v39 = vunpack.c.l.bf16 %v29
    %v40 = vunpack.c.h.bf16 %v29
    %v41 = vunpack.c.l.bf16 %v30
    %v42 = vunpack.c.h.bf16 %v30
    %v43 = vunpack.c.l.bf16 %v31
    %v44 = vunpack.c.h.bf16 %v31
    %v45 = vunpack.c.l.bf16 %v32
    %v46 = vunpack.c.h.bf16 %v32
    %v47 = vunpack.c.l.bf16 %v33
    %v48 = vunpack.c.h.bf16 %v33
    %v49 = vunpack.c.l.bf16 %v34
    %v50 = vunpack.c.h.bf16 %v34
    %67 = vst [vmem:[#allocation1] ss:$2 sm:$0xff] %v35
    %s68 = scalar_lea.vmem [#allocation1], 16
    %69 = vst [vmem:[%s68] ss:$2 sm:$0xff] %v36
    %s70 = scalar_lea.vmem [#allocation1], 32
    %71 = vst [vmem:[%s70] ss:$2 sm:$0xff] %v37
    %s72 = scalar_lea.vmem [#allocation1], 48
    %73 = vst [vmem:[%s72] ss:$2 sm:$0xff] %v38
    %v74 = vld.sshfl [vmem:[#allocation1] sm:$0xff pattern:$0x75316420]
    %v75 = vld.sshfl [vmem:[#allocation1 + $0x8] sm:$0xff pattern:$0x75316420]
    %v76 = vld.sshfl [vmem:[#allocation1 + $0x10] sm:$0xff pattern:$0x75316420]
    %v77 = vld.sshfl [vmem:[#allocation1 + $0x18] sm:$0xff pattern:$0x75316420]
    %v78 = vld.sshfl [vmem:[#allocation1 + $0x20] sm:$0xff pattern:$0x75316420]
    %v79 = vld.sshfl [vmem:[#allocation1 + $0x28] sm:$0xff pattern:$0x75316420]
    %v80 = vld.sshfl [vmem:[#allocation1 + $0x30] sm:$0xff pattern:$0x75316420]
    %v81 = vld.sshfl [vmem:[#allocation1 + $0x38] sm:$0xff pattern:$0x75316420]
    %82 = vst [vmem:[#allocation1] ss:$2 sm:$0xff] %v39
    %83 = vst [vmem:[%s68] ss:$2 sm:$0xff] %v40
    %84 = vst [vmem:[%s70] ss:$2 sm:$0xff] %v41
    %85 = vst [vmem:[%s72] ss:$2 sm:$0xff] %v42
    %v86 = vld.sshfl [vmem:[#allocation1] sm:$0xff pattern:$0x75316420]
    %v87 = vld.sshfl [vmem:[#allocation1 + $0x8] sm:$0xff pattern:$0x75316420]
    %v88 = vld.sshfl [vmem:[#allocation1 + $0x10] sm:$0xff pattern:$0x75316420]
    %v89 = vld.sshfl [vmem:[#allocation1 + $0x18] sm:$0xff pattern:$0x75316420]
    %v90 = vld.sshfl [vmem:[#allocation1 + $0x20] sm:$0xff pattern:$0x75316420]
    %v91 = vld.sshfl [vmem:[#allocation1 + $0x28] sm:$0xff pattern:$0x75316420]
    %v92 = vld.sshfl [vmem:[#allocation1 + $0x30] sm:$0xff pattern:$0x75316420]
    %v93 = vld.sshfl [vmem:[#allocation1 + $0x38] sm:$0xff pattern:$0x75316420]
    %94 = vst [vmem:[#allocation1] ss:$2 sm:$0xff] %v43
    %95 = vst [vmem:[%s68] ss:$2 sm:$0xff] %v44
    %96 = vst [vmem:[%s70] ss:$2 sm:$0xff] %v45
    %97 = vst [vmem:[%s72] ss:$2 sm:$0xff] %v46
    %v98 = vld.sshfl [vmem:[#allocation1] sm:$0xff pattern:$0x75316420]
    %v99 = vld.sshfl [vmem:[#allocation1 + $0x8] sm:$0xff pattern:$0x75316420]
    %v100 = vld.sshfl [vmem:[#allocation1 + $0x10] sm:$0xff pattern:$0x75316420]
    %v101 = vld.sshfl [vmem:[#allocation1 + $0x18] sm:$0xff pattern:$0x75316420]
    %v102 = vld.sshfl [vmem:[#allocation1 + $0x20] sm:$0xff pattern:$0x75316420]
    %v103 = vld.sshfl [vmem:[#allocation1 + $0x28] sm:$0xff pattern:$0x75316420]
    %v104 = vld.sshfl [vmem:[#allocation1 + $0x30] sm:$0xff pattern:$0x75316420]
    %v105 = vld.sshfl [vmem:[#allocation1 + $0x38] sm:$0xff pattern:$0x75316420]
    %106 = vst [vmem:[#allocation1] ss:$2 sm:$0xff] %v47
    %107 = vst [vmem:[%s68] ss:$2 sm:$0xff] %v48
    %108 = vst [vmem:[%s70] ss:$2 sm:$0xff] %v49
    %109 = vst [vmem:[%s72] ss:$2 sm:$0xff] %v50
    %v110 = vld.sshfl [vmem:[#allocation1] sm:$0xff pattern:$0x75316420]
    %v111 = vld.sshfl [vmem:[#allocation1 + $0x8] sm:$0xff pattern:$0x75316420]
    %v112 = vld.sshfl [vmem:[#allocation1 + $0x10] sm:$0xff pattern:$0x75316420]
    %v113 = vld.sshfl [vmem:[#allocation1 + $0x18] sm:$0xff pattern:$0x75316420]
    %v114 = vld.sshfl [vmem:[#allocation1 + $0x20] sm:$0xff pattern:$0x75316420]
    %v115 = vld.sshfl [vmem:[#allocation1 + $0x28] sm:$0xff pattern:$0x75316420]
    %v116 = vld.sshfl [vmem:[#allocation1 + $0x30] sm:$0xff pattern:$0x75316420]
    %v117 = vld.sshfl [vmem:[#allocation1 + $0x38] sm:$0xff pattern:$0x75316420]
    %vm150 = vcmask 1043456
    %v151 = vsel %vm150, %v74, 0.0
    %v152 = vrot.slane %v151, 4
    %v153 = vadd.f32 %v151, %v152
    %v154 = vrot.slane %v153, 2
    %v155 = vadd.f32 %v153, %v154
    %v156 = vrot.slane %v155, 1
    %v157 = vadd.f32 %v155, %v156
    %v158 = vsel %vm150, %v75, 0.0
    %v159 = vrot.slane %v158, 4
    %v160 = vadd.f32 %v158, %v159
    %v161 = vrot.slane %v160, 2
    %v162 = vadd.f32 %v160, %v161
    %v163 = vrot.slane %v162, 1
    %v164 = vadd.f32 %v162, %v163
    %v165 = vsel %vm150, %v76, 0.0
    %v166 = vrot.slane %v165, 4
    %v167 = vadd.f32 %v165, %v166
    %v168 = vrot.slane %v167, 2
    %v169 = vadd.f32 %v167, %v168
    %v170 = vrot.slane %v169, 1
    %v171 = vadd.f32 %v169, %v170
    %v172 = vsel %vm150, %v77, 0.0
    %v173 = vrot.slane %v172, 4
    %v174 = vadd.f32 %v172, %v173
    %v175 = vrot.slane %v174, 2
    %v176 = vadd.f32 %v174, %v175
    %v177 = vrot.slane %v176, 1
    %v178 = vadd.f32 %v176, %v177
    %v179 = vsel %vm150, %v78, 0.0
    %v180 = vrot.slane %v179, 4
    %v181 = vadd.f32 %v179, %v180
    %v182 = vrot.slane %v181, 2
    %v183 = vadd.f32 %v181, %v182
    %v184 = vrot.slane %v183, 1
    %v185 = vadd.f32 %v183, %v184
    %v186 = vsel %vm150, %v79, 0.0
    %v187 = vrot.slane %v186, 4
    %v188 = vadd.f32 %v186, %v187
    %v189 = vrot.slane %v188, 2
    %v190 = vadd.f32 %v188, %v189
    %v191 = vrot.slane %v190, 1
    %v192 = vadd.f32 %v190, %v191
    %v193 = vsel %vm150, %v80, 0.0
    %v194 = vrot.slane %v193, 4
    %v195 = vadd.f32 %v193, %v194
    %v196 = vrot.slane %v195, 2
    %v197 = vadd.f32 %v195, %v196
    %v198 = vrot.slane %v197, 1
    %v199 = vadd.f32 %v197, %v198
    %v200 = vsel %vm150, %v81, 0.0
    %v201 = vrot.slane %v200, 4
    %v202 = vadd.f32 %v200, %v201
    %v203 = vrot.slane %v202, 2
    %v204 = vadd.f32 %v202, %v203
    %v205 = vrot.slane %v204, 1
    %v206 = vadd.f32 %v204, %v205
    %v207 = vsel %vm150, %v86, 0.0
    %v208 = vrot.slane %v207, 4
    %v209 = vadd.f32 %v207, %v208
    %v210 = vrot.slane %v209, 2
    %v211 = vadd.f32 %v209, %v210
    %v212 = vrot.slane %v211, 1
    %v213 = vadd.f32 %v211, %v212
    %v214 = vsel %vm150, %v87, 0.0
    %v215 = vrot.slane %v214, 4
    %v216 = vadd.f32 %v214, %v215
    %v217 = vrot.slane %v216, 2
    %v218 = vadd.f32 %v216, %v217
    %v219 = vrot.slane %v218, 1
    %v220 = vadd.f32 %v218, %v219
    %v221 = vsel %vm150, %v88, 0.0
    %v222 = vrot.slane %v221, 4
    %v223 = vadd.f32 %v221, %v222
    %v224 = vrot.slane %v223, 2
    %v225 = vadd.f32 %v223, %v224
    %v226 = vrot.slane %v225, 1
    %v227 = vadd.f32 %v225, %v226
    %v228 = vsel %vm150, %v89, 0.0
    %v229 = vrot.slane %v228, 4
    %v230 = vadd.f32 %v228, %v229
    %v231 = vrot.slane %v230, 2
    %v232 = vadd.f32 %v230, %v231
    %v233 = vrot.slane %v232, 1
    %v234 = vadd.f32 %v232, %v233
    %v235 = vsel %vm150, %v90, 0.0
    %v236 = vrot.slane %v235, 4
    %v237 = vadd.f32 %v235, %v236
    %v238 = vrot.slane %v237, 2
    %v239 = vadd.f32 %v237, %v238
    %v240 = vrot.slane %v239, 1
    %v241 = vadd.f32 %v239, %v240
    %v242 = vsel %vm150, %v91, 0.0
    %v243 = vrot.slane %v242, 4
    %v244 = vadd.f32 %v242, %v243
    %v245 = vrot.slane %v244, 2
    %v246 = vadd.f32 %v244, %v245
    %v247 = vrot.slane %v246, 1
    %v248 = vadd.f32 %v246, %v247
    %v249 = vsel %vm150, %v92, 0.0
    %v250 = vrot.slane %v249, 4
    %v251 = vadd.f32 %v249, %v250
    %v252 = vrot.slane %v251, 2
    %v253 = vadd.f32 %v251, %v252
    %v254 = vrot.slane %v253, 1
    %v255 = vadd.f32 %v253, %v254
    %v256 = vsel %vm150, %v93, 0.0
    %v257 = vrot.slane %v256, 4
    %v258 = vadd.f32 %v256, %v257
    %v259 = vrot.slane %v258, 2
    %v260 = vadd.f32 %v258, %v259
    %v261 = vrot.slane %v260, 1
    %v262 = vadd.f32 %v260, %v261
    %v263 = vsel %vm150, %v98, 0.0
    %v264 = vrot.slane %v263, 4
    %v265 = vadd.f32 %v263, %v264
    %v266 = vrot.slane %v265, 2
    %v267 = vadd.f32 %v265, %v266
    %v268 = vrot.slane %v267, 1
    %v269 = vadd.f32 %v267, %v268
    %v270 = vsel %vm150, %v99, 0.0
    %v271 = vrot.slane %v270, 4
    %v272 = vadd.f32 %v270, %v271
    %v273 = vrot.slane %v272, 2
    %v274 = vadd.f32 %v272, %v273
    %v275 = vrot.slane %v274, 1
    %v276 = vadd.f32 %v274, %v275
    %v277 = vsel %vm150, %v100, 0.0
    %v278 = vrot.slane %v277, 4
    %v279 = vadd.f32 %v277, %v278
    %v280 = vrot.slane %v279, 2
    %v281 = vadd.f32 %v279, %v280
    %v282 = vrot.slane %v281, 1
    %v283 = vadd.f32 %v281, %v282
    %v284 = vsel %vm150, %v101, 0.0
    %v285 = vrot.slane %v284, 4
    %v286 = vadd.f32 %v284, %v285
    %v287 = vrot.slane %v286, 2
    %v288 = vadd.f32 %v286, %v287
    %v289 = vrot.slane %v288, 1
    %v290 = vadd.f32 %v288, %v289
    %v291 = vsel %vm150, %v102, 0.0
    %v292 = vrot.slane %v291, 4
    %v293 = vadd.f32 %v291, %v292
    %v294 = vrot.slane %v293, 2
    %v295 = vadd.f32 %v293, %v294
    %v296 = vrot.slane %v295, 1
    %v297 = vadd.f32 %v295, %v296
    %v298 = vsel %vm150, %v103, 0.0
    %v299 = vrot.slane %v298, 4
    %v300 = vadd.f32 %v298, %v299
    %v301 = vrot.slane %v300, 2
    %v302 = vadd.f32 %v300, %v301
    %v303 = vrot.slane %v302, 1
    %v304 = vadd.f32 %v302, %v303
    %v305 = vsel %vm150, %v104, 0.0
    %v306 = vrot.slane %v305, 4
    %v307 = vadd.f32 %v305, %v306
    %v308 = vrot.slane %v307, 2
    %v309 = vadd.f32 %v307, %v308
    %v310 = vrot.slane %v309, 1
    %v311 = vadd.f32 %v309, %v310
    %v312 = vsel %vm150, %v105, 0.0
    %v313 = vrot.slane %v312, 4
    %v314 = vadd.f32 %v312, %v313
    %v315 = vrot.slane %v314, 2
    %v316 = vadd.f32 %v314, %v315
    %v317 = vrot.slane %v316, 1
    %v318 = vadd.f32 %v316, %v317
    %v319 = vsel %vm150, %v110, 0.0
    %v320 = vrot.slane %v319, 4
    %v321 = vadd.f32 %v319, %v320
    %v322 = vrot.slane %v321, 2
    %v323 = vadd.f32 %v321, %v322
    %v324 = vrot.slane %v323, 1
    %v325 = vadd.f32 %v323, %v324
    %v326 = vsel %vm150, %v111, 0.0
    %v327 = vrot.slane %v326, 4
    %v328 = vadd.f32 %v326, %v327
    %v329 = vrot.slane %v328, 2
    %v330 = vadd.f32 %v328, %v329
    %v331 = vrot.slane %v330, 1
    %v332 = vadd.f32 %v330, %v331
    %v333 = vsel %vm150, %v112, 0.0
    %v334 = vrot.slane %v333, 4
    %v335 = vadd.f32 %v333, %v334
    %v336 = vrot.slane %v335, 2
    %v337 = vadd.f32 %v335, %v336
    %v338 = vrot.slane %v337, 1
    %v339 = vadd.f32 %v337, %v338
    %v340 = vsel %vm150, %v113, 0.0
    %v341 = vrot.slane %v340, 4
    %v342 = vadd.f32 %v340, %v341
    %v343 = vrot.slane %v342, 2
    %v344 = vadd.f32 %v342, %v343
    %v345 = vrot.slane %v344, 1
    %v346 = vadd.f32 %v344, %v345
    %v347 = vsel %vm150, %v114, 0.0
    %v348 = vrot.slane %v347, 4
    %v349 = vadd.f32 %v347, %v348
    %v350 = vrot.slane %v349, 2
    %v351 = vadd.f32 %v349, %v350
    %v352 = vrot.slane %v351, 1
    %v353 = vadd.f32 %v351, %v352
    %v354 = vsel %vm150, %v115, 0.0
    %v355 = vrot.slane %v354, 4
    %v356 = vadd.f32 %v354, %v355
    %v357 = vrot.slane %v356, 2
    %v358 = vadd.f32 %v356, %v357
    %v359 = vrot.slane %v358, 1
    %v360 = vadd.f32 %v358, %v359
    %v361 = vsel %vm150, %v116, 0.0
    %v362 = vrot.slane %v361, 4
    %v363 = vadd.f32 %v361, %v362
    %v364 = vrot.slane %v363, 2
    %v365 = vadd.f32 %v363, %v364
    %v366 = vrot.slane %v365, 1
    %v367 = vadd.f32 %v365, %v366
    %v368 = vsel %vm150, %v117, 0.0
    %v369 = vrot.slane %v368, 4
    %v370 = vadd.f32 %v368, %v369
    %v371 = vrot.slane %v370, 2
    %v372 = vadd.f32 %v370, %v371
    %v373 = vrot.slane %v372, 1
    %v374 = vadd.f32 %v372, %v373
    %v407 = vrot.slane %v164, 6
    %v408 = vrot.slane %v171, 4
    %v409 = vrot.slane %v178, 2
    %v410 = vrot.slane %v192, 6
    %v411 = vrot.slane %v199, 4
    %v412 = vrot.slane %v206, 2
    %v413 = vrot.slane %v220, 6
    %v414 = vrot.slane %v227, 4
    %v415 = vrot.slane %v234, 2
    %v416 = vrot.slane %v248, 6
    %v417 = vrot.slane %v255, 4
    %v418 = vrot.slane %v262, 2
    %v419 = vrot.slane %v276, 6
    %v420 = vrot.slane %v283, 4
    %v421 = vrot.slane %v290, 2
    %v422 = vrot.slane %v304, 6
    %v423 = vrot.slane %v311, 4
    %v424 = vrot.slane %v318, 2
    %v425 = vrot.slane %v332, 6
    %v426 = vrot.slane %v339, 4
    %v427 = vrot.slane %v346, 2
    %v428 = vrot.slane %v360, 6
    %v429 = vrot.slane %v367, 4
    %v430 = vrot.slane %v374, 2
    %vm431 = vcmask 1041408
    %v432 = vsel %vm431, %v157, %v407
    %vm433 = vcmask 1045508
    %v434 = vsel %vm433, %v408, %v409
    %v435 = vsel %vm150, %v432, %v434
    %v436 = vsel %vm431, %v185, %v410
    %v437 = vsel %vm433, %v411, %v412
    %v438 = vsel %vm150, %v436, %v437
    %v439 = vsel %vm431, %v213, %v413
    %v440 = vsel %vm433, %v414, %v415
    %v441 = vsel %vm150, %v439, %v440
    %v442 = vsel %vm431, %v241, %v416
    %v443 = vsel %vm433, %v417, %v418
    %v444 = vsel %vm150, %v442, %v443
    %v445 = vsel %vm431, %v269, %v419
    %v446 = vsel %vm433, %v420, %v421
    %v447 = vsel %vm150, %v445, %v446
    %v448 = vsel %vm431, %v297, %v422
    %v449 = vsel %vm433, %v423, %v424
    %v450 = vsel %vm150, %v448, %v449
    %v451 = vsel %vm431, %v325, %v425
    %v452 = vsel %vm433, %v426, %v427
    %v453 = vsel %vm150, %v451, %v452
    %v454 = vsel %vm431, %v353, %v428
    %v455 = vsel %vm433, %v429, %v430
    %v456 = vsel %vm150, %v454, %v455
    %vm457 = vcmask 1044484
    %v458 = vsel %vm457, %v435, %v435
    %vm459 = vcmask 1046534
    %v460 = vsel %vm459, %v435, %v458
    %v461 = vrot.slane %v447, 7
    %vm462 = vcmask 1041409
    %v463 = vsel %vm462, %v461, %v460
    %vm464 = vcmask 1043459
    %v465 = vsel %vm464, %v461, %v463
    %vm466 = vcmask 1045509
    %v467 = vsel %vm466, %v461, %v465
    %vm468 = vcmask 1047559
    %v469 = vsel %vm468, %v461, %v467
    %v470 = vsel %vm457, %v438, %v438
    %v471 = vsel %vm459, %v438, %v470
    %v472 = vrot.slane %v450, 7
    %v473 = vsel %vm462, %v472, %v471
    %v474 = vsel %vm464, %v472, %v473
    %v475 = vsel %vm466, %v472, %v474
    %v476 = vsel %vm468, %v472, %v475
    %v477 = vsel %vm457, %v441, %v441
    %v478 = vsel %vm459, %v441, %v477
    %v479 = vrot.slane %v453, 7
    %v480 = vsel %vm462, %v479, %v478
    %v481 = vsel %vm464, %v479, %v480
    %v482 = vsel %vm466, %v479, %v481
    %v483 = vsel %vm468, %v479, %v482
    %v484 = vsel %vm457, %v444, %v444
    %v485 = vsel %vm459, %v444, %v484
    %v486 = vrot.slane %v456, 7
    %v487 = vsel %vm462, %v486, %v485
    %v488 = vsel %vm464, %v486, %v487
    %v489 = vsel %vm466, %v486, %v488
    %v490 = vsel %vm468, %v486, %v489
    %v495 = vadd.f32 %v23, %v469
    %v496 = vadd.f32 %v24, %v476
    %v497 = vadd.f32 %v25, %v483
    %v498 = vadd.f32 %v26, %v490
    %499 = vst [vmem:[#allocation2] sm:$0xff] %v495
    %500 = vst [vmem:[#allocation2 + $0x8] sm:$0xff] %v496
    %501 = vst [vmem:[#allocation2 + $0x10] sm:$0xff] %v497
    %502 = vst [vmem:[#allocation2 + $0x18] sm:$0xff] %v498
    // Predicated region
    $region18: #{siim_forward.7} parent=1 // pred_check
      %p503 = pneg %p15
    $region19: #{siim_forward.7} parent=1 // pred_check_branch
      %505 = sbr.rel (%p503) target = $region21
    $region20: #{siim_forward.7} parent=1 // pred_region
      %v506 = vld [vmem:[#allocation2] sm:$0xff]
      %v507 = vld [vmem:[#allocation2 + $0x8] sm:$0xff]
      %v508 = vld [vmem:[#allocation2 + $0x10] sm:$0xff]
      %v509 = vld [vmem:[#allocation2 + $0x18] sm:$0xff]
      %v510 = vmul.f32 %v506, 0.25
      %v511 = vmul.f32 %v507, 0.25
      %v512 = vmul.f32 %v508, 0.25
      %v513 = vmul.f32 %v509, 0.25
      %v514 = vld [vmem:[%s1] sm:$0xff]
      %v515 = vld [vmem:[%s1 + $0x8] sm:$0xff]
      %v516 = vld [vmem:[%s1 + $0x10] sm:$0xff]
      %v517 = vld [vmem:[%s1 + $0x18] sm:$0xff]
      %v518 = vld [vmem:[%s1 + $0x20] sm:$0xff]
      %v519 = vld [vmem:[%s1 + $0x28] sm:$0xff]
      %v520 = vld [vmem:[%s1 + $0x30] sm:$0xff]
      %v521 = vld [vmem:[%s1 + $0x38] sm:$0xff]
      %v522 = vld [vmem:[%s1 + $0x40] sm:$0xff]
      %v523 = vld [vmem:[%s1 + $0x48] sm:$0xff]
      %v524 = vld [vmem:[%s1 + $0x50] sm:$0xff]
      %v525 = vld [vmem:[%s1 + $0x58] sm:$0xff]
      %v526 = vld [vmem:[%s1 + $0x60] sm:$0xff]
      %v527 = vld [vmem:[%s1 + $0x68] sm:$0xff]
      %v528 = vld [vmem:[%s1 + $0x70] sm:$0xff]
      %v529 = vld [vmem:[%s1 + $0x78] sm:$0xff]
      %v530 = vld [vmem:[%s1 + $0x80] sm:$0xff]
      %v531 = vld [vmem:[%s1 + $0x88] sm:$0xff]
      %v532 = vld [vmem:[%s1 + $0x90] sm:$0xff]
      %v533 = vld [vmem:[%s1 + $0x98] sm:$0xff]
      %v534 = vld [vmem:[%s1 + $0xa0] sm:$0xff]
      %v535 = vld [vmem:[%s1 + $0xa8] sm:$0xff]
      %v536 = vld [vmem:[%s1 + $0xb0] sm:$0xff]
      %v537 = vld [vmem:[%s1 + $0xb8] sm:$0xff]
      %v538 = vld [vmem:[%s1 + $0xc0] sm:$0xff]
      %v539 = vld [vmem:[%s1 + $0xc8] sm:$0xff]
      %v540 = vld [vmem:[%s1 + $0xd0] sm:$0xff]
      %v541 = vld [vmem:[%s1 + $0xd8] sm:$0xff]
      %v542 = vld [vmem:[%s1 + $0xe0] sm:$0xff]
      %v543 = vld [vmem:[%s1 + $0xe8] sm:$0xff]
      %v544 = vld [vmem:[%s1 + $0xf0] sm:$0xff]
      %v545 = vld [vmem:[%s1 + $0xf8] sm:$0xff]
      %v546 = vld [vmem:[%s1 + $0x100] sm:$0xff]
      %v547 = vld [vmem:[%s1 + $0x108] sm:$0xff]
      %v548 = vld [vmem:[%s1 + $0x110] sm:$0xff]
      %v549 = vld [vmem:[%s1 + $0x118] sm:$0xff]
      %v550 = vld [vmem:[%s1 + $0x120] sm:$0xff]
      %v551 = vld [vmem:[%s1 + $0x128] sm:$0xff]
      %v552 = vld [vmem:[%s1 + $0x130] sm:$0xff]
      %v553 = vld [vmem:[%s1 + $0x138] sm:$0xff]
      %v554 = vld [vmem:[%s1 + $0x140] sm:$0xff]
      %v555 = vld [vmem:[%s1 + $0x148] sm:$0xff]
      %v556 = vld [vmem:[%s1 + $0x150] sm:$0xff]
      %v557 = vld [vmem:[%s1 + $0x158] sm:$0xff]
      %v558 = vld [vmem:[%s1 + $0x160] sm:$0xff]
      %v559 = vld [vmem:[%s1 + $0x168] sm:$0xff]
      %v560 = vld [vmem:[%s1 + $0x170] sm:$0xff]
      %v561 = vld [vmem:[%s1 + $0x178] sm:$0xff]
      %v562 = vld [vmem:[%s1 + $0x180] sm:$0xff]
      %v563 = vld [vmem:[%s1 + $0x188] sm:$0xff]
      %v564 = vld [vmem:[%s1 + $0x190] sm:$0xff]
      %v565 = vld [vmem:[%s1 + $0x198] sm:$0xff]
      %v566 = vld [vmem:[%s1 + $0x1a0] sm:$0xff]
      %v567 = vld [vmem:[%s1 + $0x1a8] sm:$0xff]
      %v568 = vld [vmem:[%s1 + $0x1b0] sm:$0xff]
      %v569 = vld [vmem:[%s1 + $0x1b8] sm:$0xff]
      %v570 = vld [vmem:[%s1 + $0x1c0] sm:$0xff]
      %v571 = vld [vmem:[%s1 + $0x1c8] sm:$0xff]
      %v572 = vld [vmem:[%s1 + $0x1d0] sm:$0xff]
      %v573 = vld [vmem:[%s1 + $0x1d8] sm:$0xff]
      %v574 = vld [vmem:[%s1 + $0x1e0] sm:$0xff]
      %v575 = vld [vmem:[%s1 + $0x1e8] sm:$0xff]
      %v576 = vld [vmem:[%s1 + $0x1f0] sm:$0xff]
      %v577 = vld [vmem:[%s1 + $0x1f8] sm:$0xff]
      %v578 = vld [vmem:[%s1 + $0x200] sm:$0xff]
      %v579 = vld [vmem:[%s1 + $0x208] sm:$0xff]
      %v580 = vld [vmem:[%s1 + $0x210] sm:$0xff]
      %v581 = vld [vmem:[%s1 + $0x218] sm:$0xff]
      %v582 = vld [vmem:[%s1 + $0x220] sm:$0xff]
      %v583 = vld [vmem:[%s1 + $0x228] sm:$0xff]
      %v584 = vld [vmem:[%s1 + $0x230] sm:$0xff]
      %v585 = vld [vmem:[%s1 + $0x238] sm:$0xff]
      %v586 = vld [vmem:[%s1 + $0x240] sm:$0xff]
      %v587 = vld [vmem:[%s1 + $0x248] sm:$0xff]
      %v588 = vld [vmem:[%s1 + $0x250] sm:$0xff]
      %v589 = vld [vmem:[%s1 + $0x258] sm:$0xff]
      %v590 = vld [vmem:[%s1 + $0x260] sm:$0xff]
      %v591 = vld [vmem:[%s1 + $0x268] sm:$0xff]
      %v592 = vld [vmem:[%s1 + $0x270] sm:$0xff]
      %v593 = vld [vmem:[%s1 + $0x278] sm:$0xff]
      %v594 = vld [vmem:[%s1 + $0x280] sm:$0xff]
      %v595 = vld [vmem:[%s1 + $0x288] sm:$0xff]
      %v596 = vld [vmem:[%s1 + $0x290] sm:$0xff]
      %v597 = vld [vmem:[%s1 + $0x298] sm:$0xff]
      %v598 = vld [vmem:[%s1 + $0x2a0] sm:$0xff]
      %v599 = vld [vmem:[%s1 + $0x2a8] sm:$0xff]
      %v600 = vld [vmem:[%s1 + $0x2b0] sm:$0xff]
      %v601 = vld [vmem:[%s1 + $0x2b8] sm:$0xff]
      %v602 = vld [vmem:[%s1 + $0x2c0] sm:$0xff]
      %v603 = vld [vmem:[%s1 + $0x2c8] sm:$0xff]
      %v604 = vld [vmem:[%s1 + $0x2d0] sm:$0xff]
      %v605 = vld [vmem:[%s1 + $0x2d8] sm:$0xff]
      %v606 = vld [vmem:[%s1 + $0x2e0] sm:$0xff]
      %v607 = vld [vmem:[%s1 + $0x2e8] sm:$0xff]
      %v608 = vld [vmem:[%s1 + $0x2f0] sm:$0xff]
      %v609 = vld [vmem:[%s1 + $0x2f8] sm:$0xff]
      %v610 = vld [vmem:[%s1 + $0x300] sm:$0xff]
      %v611 = vld [vmem:[%s1 + $0x308] sm:$0xff]
      %v612 = vld [vmem:[%s1 + $0x310] sm:$0xff]
      %v613 = vld [vmem:[%s1 + $0x318] sm:$0xff]
      %v614 = vld [vmem:[%s1 + $0x320] sm:$0xff]
      %v615 = vld [vmem:[%s1 + $0x328] sm:$0xff]
      %v616 = vld [vmem:[%s1 + $0x330] sm:$0xff]
      %v617 = vld [vmem:[%s1 + $0x338] sm:$0xff]
      %v618 = vld [vmem:[%s1 + $0x340] sm:$0xff]
      %v619 = vld [vmem:[%s1 + $0x348] sm:$0xff]
      %v620 = vld [vmem:[%s1 + $0x350] sm:$0xff]
      %v621 = vld [vmem:[%s1 + $0x358] sm:$0xff]
      %v622 = vld [vmem:[%s1 + $0x360] sm:$0xff]
      %v623 = vld [vmem:[%s1 + $0x368] sm:$0xff]
      %v624 = vld [vmem:[%s1 + $0x370] sm:$0xff]
      %v625 = vld [vmem:[%s1 + $0x378] sm:$0xff]
      %v626 = vld [vmem:[%s1 + $0x380] sm:$0xff]
      %v627 = vld [vmem:[%s1 + $0x388] sm:$0xff]
      %v628 = vld [vmem:[%s1 + $0x390] sm:$0xff]
      %v629 = vld [vmem:[%s1 + $0x398] sm:$0xff]
      %v630 = vld [vmem:[%s1 + $0x3a0] sm:$0xff]
      %v631 = vld [vmem:[%s1 + $0x3a8] sm:$0xff]
      %v632 = vld [vmem:[%s1 + $0x3b0] sm:$0xff]
      %v633 = vld [vmem:[%s1 + $0x3b8] sm:$0xff]
      %v634 = vld [vmem:[%s1 + $0x3c0] sm:$0xff]
      %v635 = vld [vmem:[%s1 + $0x3c8] sm:$0xff]
      %v636 = vld [vmem:[%s1 + $0x3d0] sm:$0xff]
      %v637 = vld [vmem:[%s1 + $0x3d8] sm:$0xff]
      %v638 = vld [vmem:[%s1 + $0x3e0] sm:$0xff]
      %v639 = vld [vmem:[%s1 + $0x3e8] sm:$0xff]
      %v640 = vld [vmem:[%s1 + $0x3f0] sm:$0xff]
      %v641 = vld [vmem:[%s1 + $0x3f8] sm:$0xff]
      %v642 = vld [vmem:[%s1 + $0x400] sm:$0xff]
      %v643 = vld [vmem:[%s1 + $0x408] sm:$0xff]
      %v644 = vld [vmem:[%s1 + $0x410] sm:$0xff]
      %v645 = vld [vmem:[%s1 + $0x418] sm:$0xff]
      %v646 = vld [vmem:[%s1 + $0x420] sm:$0xff]
      %v647 = vld [vmem:[%s1 + $0x428] sm:$0xff]
      %v648 = vld [vmem:[%s1 + $0x430] sm:$0xff]
      %v649 = vld [vmem:[%s1 + $0x438] sm:$0xff]
      %v650 = vld [vmem:[%s1 + $0x440] sm:$0xff]
      %v651 = vld [vmem:[%s1 + $0x448] sm:$0xff]
      %v652 = vld [vmem:[%s1 + $0x450] sm:$0xff]
      %v653 = vld [vmem:[%s1 + $0x458] sm:$0xff]
      %v654 = vld [vmem:[%s1 + $0x460] sm:$0xff]
      %v655 = vld [vmem:[%s1 + $0x468] sm:$0xff]
      %v656 = vld [vmem:[%s1 + $0x470] sm:$0xff]
      %v657 = vld [vmem:[%s1 + $0x478] sm:$0xff]
      %v658 = vld [vmem:[%s1 + $0x480] sm:$0xff]
      %v659 = vld [vmem:[%s1 + $0x488] sm:$0xff]
      %v660 = vld [vmem:[%s1 + $0x490] sm:$0xff]
      %v661 = vld [vmem:[%s1 + $0x498] sm:$0xff]
      %v662 = vld [vmem:[%s1 + $0x4a0] sm:$0xff]
      %v663 = vld [vmem:[%s1 + $0x4a8] sm:$0xff]
      %v664 = vld [vmem:[%s1 + $0x4b0] sm:$0xff]
      %v665 = vld [vmem:[%s1 + $0x4b8] sm:$0xff]
      %v666 = vld [vmem:[%s1 + $0x4c0] sm:$0xff]
      %v667 = vld [vmem:[%s1 + $0x4c8] sm:$0xff]
      %v668 = vld [vmem:[%s1 + $0x4d0] sm:$0xff]
      %v669 = vld [vmem:[%s1 + $0x4d8] sm:$0xff]
      %v670 = vld [vmem:[%s1 + $0x4e0] sm:$0xff]
      %v671 = vld [vmem:[%s1 + $0x4e8] sm:$0xff]
      %v672 = vld [vmem:[%s1 + $0x4f0] sm:$0xff]
      %v673 = vld [vmem:[%s1 + $0x4f8] sm:$0xff]
      %v674 = vld [vmem:[%s1 + $0x500] sm:$0xff]
      %v675 = vld [vmem:[%s1 + $0x508] sm:$0xff]
      %v676 = vld [vmem:[%s1 + $0x510] sm:$0xff]
      %v677 = vld [vmem:[%s1 + $0x518] sm:$0xff]
      %v678 = vld [vmem:[%s1 + $0x520] sm:$0xff]
      %v679 = vld [vmem:[%s1 + $0x528] sm:$0xff]
      %v680 = vld [vmem:[%s1 + $0x530] sm:$0xff]
      %v681 = vld [vmem:[%s1 + $0x538] sm:$0xff]
      %v682 = vld [vmem:[%s1 + $0x540] sm:$0xff]
      %v683 = vld [vmem:[%s1 + $0x548] sm:$0xff]
      %v684 = vld [vmem:[%s1 + $0x550] sm:$0xff]
      %v685 = vld [vmem:[%s1 + $0x558] sm:$0xff]
      %v686 = vld [vmem:[%s1 + $0x560] sm:$0xff]
      %v687 = vld [vmem:[%s1 + $0x568] sm:$0xff]
      %v688 = vld [vmem:[%s1 + $0x570] sm:$0xff]
      %v689 = vld [vmem:[%s1 + $0x578] sm:$0xff]
      %v690 = vld [vmem:[%s1 + $0x580] sm:$0xff]
      %v691 = vld [vmem:[%s1 + $0x588] sm:$0xff]
      %v692 = vld [vmem:[%s1 + $0x590] sm:$0xff]
      %v693 = vld [vmem:[%s1 + $0x598] sm:$0xff]
      %v694 = vld [vmem:[%s1 + $0x5a0] sm:$0xff]
      %v695 = vld [vmem:[%s1 + $0x5a8] sm:$0xff]
      %v696 = vld [vmem:[%s1 + $0x5b0] sm:$0xff]
      %v697 = vld [vmem:[%s1 + $0x5b8] sm:$0xff]
      %v698 = vld [vmem:[%s1 + $0x5c0] sm:$0xff]
      %v699 = vld [vmem:[%s1 + $0x5c8] sm:$0xff]
      %v700 = vld [vmem:[%s1 + $0x5d0] sm:$0xff]
      %v701 = vld [vmem:[%s1 + $0x5d8] sm:$0xff]
      %v702 = vld [vmem:[%s1 + $0x5e0] sm:$0xff]
      %v703 = vld [vmem:[%s1 + $0x5e8] sm:$0xff]
      %v704 = vld [vmem:[%s1 + $0x5f0] sm:$0xff]
      %v705 = vld [vmem:[%s1 + $0x5f8] sm:$0xff]
      %v706 = vld [vmem:[%s1 + $0x600] sm:$0xff]
      %v707 = vld [vmem:[%s1 + $0x608] sm:$0xff]
      %v708 = vld [vmem:[%s1 + $0x610] sm:$0xff]
      %v709 = vld [vmem:[%s1 + $0x618] sm:$0xff]
      %v710 = vld [vmem:[%s1 + $0x620] sm:$0xff]
      %v711 = vld [vmem:[%s1 + $0x628] sm:$0xff]
      %v712 = vld [vmem:[%s1 + $0x630] sm:$0xff]
      %v713 = vld [vmem:[%s1 + $0x638] sm:$0xff]
      %v714 = vld [vmem:[%s1 + $0x640] sm:$0xff]
      %v715 = vld [vmem:[%s1 + $0x648] sm:$0xff]
      %v716 = vld [vmem:[%s1 + $0x650] sm:$0xff]
      %v717 = vld [vmem:[%s1 + $0x658] sm:$0xff]
      %v718 = vld [vmem:[%s1 + $0x660] sm:$0xff]
      %v719 = vld [vmem:[%s1 + $0x668] sm:$0xff]
      %v720 = vld [vmem:[%s1 + $0x670] sm:$0xff]
      %v721 = vld [vmem:[%s1 + $0x678] sm:$0xff]
      %v722 = vld [vmem:[%s1 + $0x680] sm:$0xff]
      %v723 = vld [vmem:[%s1 + $0x688] sm:$0xff]
      %v724 = vld [vmem:[%s1 + $0x690] sm:$0xff]
      %v725 = vld [vmem:[%s1 + $0x698] sm:$0xff]
      %v726 = vld [vmem:[%s1 + $0x6a0] sm:$0xff]
      %v727 = vld [vmem:[%s1 + $0x6a8] sm:$0xff]
      %v728 = vld [vmem:[%s1 + $0x6b0] sm:$0xff]
      %v729 = vld [vmem:[%s1 + $0x6b8] sm:$0xff]
      %v730 = vld [vmem:[%s1 + $0x6c0] sm:$0xff]
      %v731 = vld [vmem:[%s1 + $0x6c8] sm:$0xff]
      %v732 = vld [vmem:[%s1 + $0x6d0] sm:$0xff]
      %v733 = vld [vmem:[%s1 + $0x6d8] sm:$0xff]
      %v734 = vld [vmem:[%s1 + $0x6e0] sm:$0xff]
      %v735 = vld [vmem:[%s1 + $0x6e8] sm:$0xff]
      %v736 = vld [vmem:[%s1 + $0x6f0] sm:$0xff]
      %v737 = vld [vmem:[%s1 + $0x6f8] sm:$0xff]
      %v738 = vld [vmem:[%s1 + $0x700] sm:$0xff]
      %v739 = vld [vmem:[%s1 + $0x708] sm:$0xff]
      %v740 = vld [vmem:[%s1 + $0x710] sm:$0xff]
      %v741 = vld [vmem:[%s1 + $0x718] sm:$0xff]
      %v742 = vld [vmem:[%s1 + $0x720] sm:$0xff]
      %v743 = vld [vmem:[%s1 + $0x728] sm:$0xff]
      %v744 = vld [vmem:[%s1 + $0x730] sm:$0xff]
      %v745 = vld [vmem:[%s1 + $0x738] sm:$0xff]
      %v746 = vld [vmem:[%s1 + $0x740] sm:$0xff]
      %v747 = vld [vmem:[%s1 + $0x748] sm:$0xff]
      %v748 = vld [vmem:[%s1 + $0x750] sm:$0xff]
      %v749 = vld [vmem:[%s1 + $0x758] sm:$0xff]
      %v750 = vld [vmem:[%s1 + $0x760] sm:$0xff]
      %v751 = vld [vmem:[%s1 + $0x768] sm:$0xff]
      %v752 = vld [vmem:[%s1 + $0x770] sm:$0xff]
      %v753 = vld [vmem:[%s1 + $0x778] sm:$0xff]
      %v754 = vld [vmem:[%s1 + $0x780] sm:$0xff]
      %v755 = vld [vmem:[%s1 + $0x788] sm:$0xff]
      %v756 = vld [vmem:[%s1 + $0x790] sm:$0xff]
      %v757 = vld [vmem:[%s1 + $0x798] sm:$0xff]
      %v758 = vld [vmem:[%s1 + $0x7a0] sm:$0xff]
      %v759 = vld [vmem:[%s1 + $0x7a8] sm:$0xff]
      %v760 = vld [vmem:[%s1 + $0x7b0] sm:$0xff]
      %v761 = vld [vmem:[%s1 + $0x7b8] sm:$0xff]
      %v762 = vld [vmem:[%s1 + $0x7c0] sm:$0xff]
      %v763 = vld [vmem:[%s1 + $0x7c8] sm:$0xff]
      %v764 = vld [vmem:[%s1 + $0x7d0] sm:$0xff]
      %v765 = vld [vmem:[%s1 + $0x7d8] sm:$0xff]
      %v766 = vld [vmem:[%s1 + $0x7e0] sm:$0xff]
      %v767 = vld [vmem:[%s1 + $0x7e8] sm:$0xff]
      %v768 = vld [vmem:[%s1 + $0x7f0] sm:$0xff]
      %v769 = vld [vmem:[%s1 + $0x7f8] sm:$0xff]
      %v770 = vld [vmem:[%s2] sm:$0x1]
      %v772 = vperm.slane %v770, 0
      %778 = vst [vmem:[#allocation1] ss:$4 sm:$0xff] %v510
      %s779 = scalar_lea.vmem [#allocation1], 32
      %780 = vst [vmem:[%s779] ss:$4 sm:$0xff] %v511
      %v781 = vld.sshfl [vmem:[#allocation1] sm:$0xff pattern:$0x73625140]
      %v782 = vld.sshfl [vmem:[#allocation1 + $0x8] sm:$0xff pattern:$0x73625140]
      %v783 = vld.sshfl [vmem:[#allocation1 + $0x10] sm:$0xff pattern:$0x73625140]
      %v784 = vld.sshfl [vmem:[#allocation1 + $0x18] sm:$0xff pattern:$0x73625140]
      %v785 = vld.sshfl [vmem:[#allocation1 + $0x20] sm:$0xff pattern:$0x73625140]
      %v786 = vld.sshfl [vmem:[#allocation1 + $0x28] sm:$0xff pattern:$0x73625140]
      %v787 = vld.sshfl [vmem:[#allocation1 + $0x30] sm:$0xff pattern:$0x73625140]
      %v788 = vld.sshfl [vmem:[#allocation1 + $0x38] sm:$0xff pattern:$0x73625140]
      %789 = vst [vmem:[#allocation1] ss:$4 sm:$0xff] %v512
      %790 = vst [vmem:[%s779] ss:$4 sm:$0xff] %v513
      %v791 = vld.sshfl [vmem:[#allocation1] sm:$0xff pattern:$0x73625140]
      %v792 = vld.sshfl [vmem:[#allocation1 + $0x8] sm:$0xff pattern:$0x73625140]
      %v793 = vld.sshfl [vmem:[#allocation1 + $0x10] sm:$0xff pattern:$0x73625140]
      %v794 = vld.sshfl [vmem:[#allocation1 + $0x18] sm:$0xff pattern:$0x73625140]
      %v795 = vld.sshfl [vmem:[#allocation1 + $0x20] sm:$0xff pattern:$0x73625140]
      %v796 = vld.sshfl [vmem:[#allocation1 + $0x28] sm:$0xff pattern:$0x73625140]
      %v797 = vld.sshfl [vmem:[#allocation1 + $0x30] sm:$0xff pattern:$0x73625140]
      %v798 = vld.sshfl [vmem:[#allocation1 + $0x38] sm:$0xff pattern:$0x73625140]
      %815 = vmatpush.msra.mxu0 %v529
      %816 = vmatpush.msra.mxu0 %v528
      %817 = vmatpush.msra.mxu0 %v527
      %818 = vmatpush.msra.mxu0 %v526
      %819 = vmatpush.msra.mxu0 %v525
      %820 = vmatpush.msra.mxu0 %v524
      %821 = vmatpush.msra.mxu0 %v523
      %822 = vmatpush.msra.mxu0 %v522
      %823 = vmatpush.msra.mxu0 %v521
      %824 = vmatpush.msra.mxu0 %v520
      %825 = vmatpush.msra.mxu0 %v519
      %826 = vmatpush.msra.mxu0 %v518
      %827 = vmatpush.msra.mxu0 %v517
      %828 = vmatpush.msra.mxu0 %v516
      %829 = vmatpush.msra.mxu0 %v515
      %830 = vmatpush.msra.mxu0 %v514
      %831 = vmatmul.f32.gmra.mxu0 %v781
      %v832 = vpop.f32.mrf.mxu0
      %v833 = vadd.f32 %v772, %v832
      %834 = vdwg.mxu0
      %835 = vmatpush.msra.mxu0 %v545
      %836 = vmatpush.msra.mxu0 %v544
      %837 = vmatpush.msra.mxu0 %v543
      %838 = vmatpush.msra.mxu0 %v542
      %839 = vmatpush.msra.mxu0 %v541
      %840 = vmatpush.msra.mxu0 %v540
      %841 = vmatpush.msra.mxu0 %v539
      %842 = vmatpush.msra.mxu0 %v538
      %843 = vmatpush.msra.mxu0 %v537
      %844 = vmatpush.msra.mxu0 %v536
      %845 = vmatpush.msra.mxu0 %v535
      %846 = vmatpush.msra.mxu0 %v534
      %847 = vmatpush.msra.mxu0 %v533
      %848 = vmatpush.msra.mxu0 %v532
      %849 = vmatpush.msra.mxu0 %v531
      %850 = vmatpush.msra.mxu0 %v530
      %851 = vmatmul.f32.gmra.mxu0 %v782
      %v852 = vpop.f32.mrf.mxu0
      %v853 = vadd.f32 %v833, %v852
      %854 = vdwg.mxu0
      %855 = vmatpush.msra.mxu0 %v561
      %856 = vmatpush.msra.mxu0 %v560
      %857 = vmatpush.msra.mxu0 %v559
      %858 = vmatpush.msra.mxu0 %v558
      %859 = vmatpush.msra.mxu0 %v557
      %860 = vmatpush.msra.mxu0 %v556
      %861 = vmatpush.msra.mxu0 %v555
      %862 = vmatpush.msra.mxu0 %v554
      %863 = vmatpush.msra.mxu0 %v553
      %864 = vmatpush.msra.mxu0 %v552
      %865 = vmatpush.msra.mxu0 %v551
      %866 = vmatpush.msra.mxu0 %v550
      %867 = vmatpush.msra.mxu0 %v549
      %868 = vmatpush.msra.mxu0 %v548
      %869 = vmatpush.msra.mxu0 %v547
      %870 = vmatpush.msra.mxu0 %v546
      %871 = vmatmul.f32.gmra.mxu0 %v783
      %v872 = vpop.f32.mrf.mxu0
      %v873 = vadd.f32 %v853, %v872
      %874 = vdwg.mxu0
      %875 = vmatpush.msra.mxu0 %v577
      %876 = vmatpush.msra.mxu0 %v576
      %877 = vmatpush.msra.mxu0 %v575
      %878 = vmatpush.msra.mxu0 %v574
      %879 = vmatpush.msra.mxu0 %v573
      %880 = vmatpush.msra.mxu0 %v572
      %881 = vmatpush.msra.mxu0 %v571
      %882 = vmatpush.msra.mxu0 %v570
      %883 = vmatpush.msra.mxu0 %v569
      %884 = vmatpush.msra.mxu0 %v568
      %885 = vmatpush.msra.mxu0 %v567
      %886 = vmatpush.msra.mxu0 %v566
      %887 = vmatpush.msra.mxu0 %v565
      %888 = vmatpush.msra.mxu0 %v564
      %889 = vmatpush.msra.mxu0 %v563
      %890 = vmatpush.msra.mxu0 %v562
      %891 = vmatmul.f32.gmra.mxu0 %v784
      %v892 = vpop.f32.mrf.mxu0
      %v893 = vadd.f32 %v873, %v892
      %894 = vdwg.mxu0
      %895 = vmatpush.msra.mxu0 %v593
      %896 = vmatpush.msra.mxu0 %v592
      %897 = vmatpush.msra.mxu0 %v591
      %898 = vmatpush.msra.mxu0 %v590
      %899 = vmatpush.msra.mxu0 %v589
      %900 = vmatpush.msra.mxu0 %v588
      %901 = vmatpush.msra.mxu0 %v587
      %902 = vmatpush.msra.mxu0 %v586
      %903 = vmatpush.msra.mxu0 %v585
      %904 = vmatpush.msra.mxu0 %v584
      %905 = vmatpush.msra.mxu0 %v583
      %906 = vmatpush.msra.mxu0 %v582
      %907 = vmatpush.msra.mxu0 %v581
      %908 = vmatpush.msra.mxu0 %v580
      %909 = vmatpush.msra.mxu0 %v579
      %910 = vmatpush.msra.mxu0 %v578
      %911 = vmatmul.f32.gmra.mxu0 %v785
      %v912 = vpop.f32.mrf.mxu0
      %v913 = vadd.f32 %v893, %v912
      %914 = vdwg.mxu0
      %915 = vmatpush.msra.mxu0 %v609
      %916 = vmatpush.msra.mxu0 %v608
      %917 = vmatpush.msra.mxu0 %v607
      %918 = vmatpush.msra.mxu0 %v606
      %919 = vmatpush.msra.mxu0 %v605
      %920 = vmatpush.msra.mxu0 %v604
      %921 = vmatpush.msra.mxu0 %v603
      %922 = vmatpush.msra.mxu0 %v602
      %923 = vmatpush.msra.mxu0 %v601
      %924 = vmatpush.msra.mxu0 %v600
      %925 = vmatpush.msra.mxu0 %v599
      %926 = vmatpush.msra.mxu0 %v598
      %927 = vmatpush.msra.mxu0 %v597
      %928 = vmatpush.msra.mxu0 %v596
      %929 = vmatpush.msra.mxu0 %v595
      %930 = vmatpush.msra.mxu0 %v594
      %931 = vmatmul.f32.gmra.mxu0 %v786
      %v932 = vpop.f32.mrf.mxu0
      %v933 = vadd.f32 %v913, %v932
      %934 = vdwg.mxu0
      %935 = vmatpush.msra.mxu0 %v625
      %936 = vmatpush.msra.mxu0 %v624
      %937 = vmatpush.msra.mxu0 %v623
      %938 = vmatpush.msra.mxu0 %v622
      %939 = vmatpush.msra.mxu0 %v621
      %940 = vmatpush.msra.mxu0 %v620
      %941 = vmatpush.msra.mxu0 %v619
      %942 = vmatpush.msra.mxu0 %v618
      %943 = vmatpush.msra.mxu0 %v617
      %944 = vmatpush.msra.mxu0 %v616
      %945 = vmatpush.msra.mxu0 %v615
      %946 = vmatpush.msra.mxu0 %v614
      %947 = vmatpush.msra.mxu0 %v613
      %948 = vmatpush.msra.mxu0 %v612
      %949 = vmatpush.msra.mxu0 %v611
      %950 = vmatpush.msra.mxu0 %v610
      %951 = vmatmul.f32.gmra.mxu0 %v787
      %v952 = vpop.f32.mrf.mxu0
      %v953 = vadd.f32 %v933, %v952
      %954 = vdwg.mxu0
      %955 = vmatpush.msra.mxu0 %v641
      %956 = vmatpush.msra.mxu0 %v640
      %957 = vmatpush.msra.mxu0 %v639
      %958 = vmatpush.msra.mxu0 %v638
      %959 = vmatpush.msra.mxu0 %v637
      %960 = vmatpush.msra.mxu0 %v636
      %961 = vmatpush.msra.mxu0 %v635
      %962 = vmatpush.msra.mxu0 %v634
      %963 = vmatpush.msra.mxu0 %v633
      %964 = vmatpush.msra.mxu0 %v632
      %965 = vmatpush.msra.mxu0 %v631
      %966 = vmatpush.msra.mxu0 %v630
      %967 = vmatpush.msra.mxu0 %v629
      %968 = vmatpush.msra.mxu0 %v628
      %969 = vmatpush.msra.mxu0 %v627
      %970 = vmatpush.msra.mxu0 %v626
      %971 = vmatmul.f32.gmra.mxu0 %v788
      %v972 = vpop.f32.mrf.mxu0
      %v973 = vadd.f32 %v953, %v972
      %974 = vdwg.mxu0
      %975 = vmatpush.msra.mxu0 %v657
      %976 = vmatpush.msra.mxu0 %v656
      %977 = vmatpush.msra.mxu0 %v655
      %978 = vmatpush.msra.mxu0 %v654
      %979 = vmatpush.msra.mxu0 %v653
      %980 = vmatpush.msra.mxu0 %v652
      %981 = vmatpush.msra.mxu0 %v651
      %982 = vmatpush.msra.mxu0 %v650
      %983 = vmatpush.msra.mxu0 %v649
      %984 = vmatpush.msra.mxu0 %v648
      %985 = vmatpush.msra.mxu0 %v647
      %986 = vmatpush.msra.mxu0 %v646
      %987 = vmatpush.msra.mxu0 %v645
      %988 = vmatpush.msra.mxu0 %v644
      %989 = vmatpush.msra.mxu0 %v643
      %990 = vmatpush.msra.mxu0 %v642
      %991 = vmatmul.f32.gmra.mxu0 %v791
      %v992 = vpop.f32.mrf.mxu0
      %v993 = vadd.f32 %v973, %v992
      %994 = vdwg.mxu0
      %995 = vmatpush.msra.mxu0 %v673
      %996 = vmatpush.msra.mxu0 %v672
      %997 = vmatpush.msra.mxu0 %v671
      %998 = vmatpush.msra.mxu0 %v670
      %999 = vmatpush.msra.mxu0 %v669
      %1000 = vmatpush.msra.mxu0 %v668
      %1001 = vmatpush.msra.mxu0 %v667
      %1002 = vmatpush.msra.mxu0 %v666
      %1003 = vmatpush.msra.mxu0 %v665
      %1004 = vmatpush.msra.mxu0 %v664
      %1005 = vmatpush.msra.mxu0 %v663
      %1006 = vmatpush.msra.mxu0 %v662
      %1007 = vmatpush.msra.mxu0 %v661
      %1008 = vmatpush.msra.mxu0 %v660
      %1009 = vmatpush.msra.mxu0 %v659
      %1010 = vmatpush.msra.mxu0 %v658
      %1011 = vmatmul.f32.gmra.mxu0 %v792
      %v1012 = vpop.f32.mrf.mxu0
      %v1013 = vadd.f32 %v993, %v1012
      %1014 = vdwg.mxu0
      %1015 = vmatpush.msra.mxu0 %v689
      %1016 = vmatpush.msra.mxu0 %v688
      %1017 = vmatpush.msra.mxu0 %v687
      %1018 = vmatpush.msra.mxu0 %v686
      %1019 = vmatpush.msra.mxu0 %v685
      %1020 = vmatpush.msra.mxu0 %v684
      %1021 = vmatpush.msra.mxu0 %v683
      %1022 = vmatpush.msra.mxu0 %v682
      %1023 = vmatpush.msra.mxu0 %v681
      %1024 = vmatpush.msra.mxu0 %v680
      %1025 = vmatpush.msra.mxu0 %v679
      %1026 = vmatpush.msra.mxu0 %v678
      %1027 = vmatpush.msra.mxu0 %v677
      %1028 = vmatpush.msra.mxu0 %v676
      %1029 = vmatpush.msra.mxu0 %v675
      %1030 = vmatpush.msra.mxu0 %v674
      %1031 = vmatmul.f32.gmra.mxu0 %v793
      %v1032 = vpop.f32.mrf.mxu0
      %v1033 = vadd.f32 %v1013, %v1032
      %1034 = vdwg.mxu0
      %1035 = vmatpush.msra.mxu0 %v705
      %1036 = vmatpush.msra.mxu0 %v704
      %1037 = vmatpush.msra.mxu0 %v703
      %1038 = vmatpush.msra.mxu0 %v702
      %1039 = vmatpush.msra.mxu0 %v701
      %1040 = vmatpush.msra.mxu0 %v700
      %1041 = vmatpush.msra.mxu0 %v699
      %1042 = vmatpush.msra.mxu0 %v698
      %1043 = vmatpush.msra.mxu0 %v697
      %1044 = vmatpush.msra.mxu0 %v696
      %1045 = vmatpush.msra.mxu0 %v695
      %1046 = vmatpush.msra.mxu0 %v694
      %1047 = vmatpush.msra.mxu0 %v693
      %1048 = vmatpush.msra.mxu0 %v692
      %1049 = vmatpush.msra.mxu0 %v691
      %1050 = vmatpush.msra.mxu0 %v690
      %1051 = vmatmul.f32.gmra.mxu0 %v794
      %v1052 = vpop.f32.mrf.mxu0
      %v1053 = vadd.f32 %v1033, %v1052
      %1054 = vdwg.mxu0
      %1055 = vmatpush.msra.mxu0 %v721
      %1056 = vmatpush.msra.mxu0 %v720
      %1057 = vmatpush.msra.mxu0 %v719
      %1058 = vmatpush.msra.mxu0 %v718
      %1059 = vmatpush.msra.mxu0 %v717
      %1060 = vmatpush.msra.mxu0 %v716
      %1061 = vmatpush.msra.mxu0 %v715
      %1062 = vmatpush.msra.mxu0 %v714
      %1063 = vmatpush.msra.mxu0 %v713
      %1064 = vmatpush.msra.mxu0 %v712
      %1065 = vmatpush.msra.mxu0 %v711
      %1066 = vmatpush.msra.mxu0 %v710
      %1067 = vmatpush.msra.mxu0 %v709
      %1068 = vmatpush.msra.mxu0 %v708
      %1069 = vmatpush.msra.mxu0 %v707
      %1070 = vmatpush.msra.mxu0 %v706
      %1071 = vmatmul.f32.gmra.mxu0 %v795
      %v1072 = vpop.f32.mrf.mxu0
      %v1073 = vadd.f32 %v1053, %v1072
      %1074 = vdwg.mxu0
      %1075 = vmatpush.msra.mxu0 %v737
      %1076 = vmatpush.msra.mxu0 %v736
      %1077 = vmatpush.msra.mxu0 %v735
      %1078 = vmatpush.msra.mxu0 %v734
      %1079 = vmatpush.msra.mxu0 %v733
      %1080 = vmatpush.msra.mxu0 %v732
      %1081 = vmatpush.msra.mxu0 %v731
      %1082 = vmatpush.msra.mxu0 %v730
      %1083 = vmatpush.msra.mxu0 %v729
      %1084 = vmatpush.msra.mxu0 %v728
      %1085 = vmatpush.msra.mxu0 %v727
      %1086 = vmatpush.msra.mxu0 %v726
      %1087 = vmatpush.msra.mxu0 %v725
      %1088 = vmatpush.msra.mxu0 %v724
      %1089 = vmatpush.msra.mxu0 %v723
      %1090 = vmatpush.msra.mxu0 %v722
      %1091 = vmatmul.f32.gmra.mxu0 %v796
      %v1092 = vpop.f32.mrf.mxu0
      %v1093 = vadd.f32 %v1073, %v1092
      %1094 = vdwg.mxu0
      %1095 = vmatpush.msra.mxu0 %v753
      %1096 = vmatpush.msra.mxu0 %v752
      %1097 = vmatpush.msra.mxu0 %v751
      %1098 = vmatpush.msra.mxu0 %v750
      %1099 = vmatpush.msra.mxu0 %v749
      %1100 = vmatpush.msra.mxu0 %v748
      %1101 = vmatpush.msra.mxu0 %v747
      %1102 = vmatpush.msra.mxu0 %v746
      %1103 = vmatpush.msra.mxu0 %v745
      %1104 = vmatpush.msra.mxu0 %v744
      %1105 = vmatpush.msra.mxu0 %v743
      %1106 = vmatpush.msra.mxu0 %v742
      %1107 = vmatpush.msra.mxu0 %v741
      %1108 = vmatpush.msra.mxu0 %v740
      %1109 = vmatpush.msra.mxu0 %v739
      %1110 = vmatpush.msra.mxu0 %v738
      %1111 = vmatmul.f32.gmra.mxu0 %v797
      %v1112 = vpop.f32.mrf.mxu0
      %v1113 = vadd.f32 %v1093, %v1112
      %1114 = vdwg.mxu0
      %1115 = vmatpush.msra.mxu0 %v769
      %1116 = vmatpush.msra.mxu0 %v768
      %1117 = vmatpush.msra.mxu0 %v767
      %1118 = vmatpush.msra.mxu0 %v766
      %1119 = vmatpush.msra.mxu0 %v765
      %1120 = vmatpush.msra.mxu0 %v764
      %1121 = vmatpush.msra.mxu0 %v763
      %1122 = vmatpush.msra.mxu0 %v762
      %1123 = vmatpush.msra.mxu0 %v761
      %1124 = vmatpush.msra.mxu0 %v760
      %1125 = vmatpush.msra.mxu0 %v759
      %1126 = vmatpush.msra.mxu0 %v758
      %1127 = vmatpush.msra.mxu0 %v757
      %1128 = vmatpush.msra.mxu0 %v756
      %1129 = vmatpush.msra.mxu0 %v755
      %1130 = vmatpush.msra.mxu0 %v754
      %1131 = vmatmul.f32.gmra.mxu0 %v798
      %v1132 = vpop.f32.mrf.mxu0
      %v1133 = vadd.f32 %v1113, %v1132
      %1134 = vdwg.mxu0
      %1135 = vst [vmem:[#allocation3] sm:$0x3] %v1133
    $region21: #{siim_forward.7} parent=1 // pred_fallthru
      _
    // Predicated region
    $region22: #{siim_forward.7} parent=1 // pred_check
      _
    $region23: #{siim_forward.7} parent=1 // pred_check_branch
      %1137 = sbr.rel (0) target = $region25
    $region24: #{siim_forward.7} parent=1 // pred_region
      %1139 = vsyncadd [#allocation4], 0
      %s1141 = sshll.u32 [#allocation3], 4
      %s1142 = int_to_ptr.vmem [resolvable:$true] %s1141
      %s1143 = sshll.u32 %s3, 4
      %s1144 = int_to_ptr.hbm [resolvable:$true] %s1143
      %1146 = dma.vmem_to_hbm [thread:$0]  %s1142, 32, %s1144, [#allocation4]
    $region25: #{siim_forward.7} parent=1 // pred_fallthru
      _
    // Predicated region
    $region26: #{siim_forward.7} parent=1 // pred_check
      _
    $region27: #{siim_forward.7} parent=1 // pred_check_branch
      %1148 = sbr.rel (0) target = $region29
    $region28: #{siim_forward.7} parent=1 // pred_region
      %1150 = dma.done [#allocation4], 32
    $region29: #{siim_forward.7} parent=1 // pred_fallthru
      _
    %1151 = vsyncpa [#allocation4], 1

</llo_original>
